<compile_context>
chip_gen: v7x
topology: tpu7x:2x2x1
jax: 0.10.0
libtpu: 0.0.40
codegen_flags: <defaults>
</compile_context>

<pallas_src>
import functools

import jax
import jax.numpy as jnp
from jax import lax
from jax.experimental import pallas as pl
from jax.experimental.pallas import tpu as pltpu

# ---------------- configuration (small, consistent with the module) ----------
BATCH = 2
IMG_C, IMG_H, IMG_W = 4, 16, 16
CONTEXT_LEN = 8           # context_length
VOCAB = 64                # vocab_size
WIDTH = 32                # transformer_width
HEADS = 4                 # transformer_heads
LAYERS = 2                # transformer_layers
EMBED_DIM = 32            # embed_dim
VISION_WIDTH = 32         # vision_width
LN_EPS = 1e-5
NEG_INF = -1e30           # finite "minus infinity" for the additive attn mask

ROWS_PER_LAYER = 8        # bias-slab rows per transformer layer


# ---------------- fused Pallas kernel -----------------------------------------
def _layernorm(x, g, b):
    mu = jnp.mean(x, axis=-1, keepdims=True)
    var = jnp.mean(jnp.square(x - mu), axis=-1, keepdims=True)
    return (x - mu) * lax.rsqrt(var + LN_EPS) * g + b


def slip_fused_kernel(img_ref, ids_ref, tokpos_ref,
                      wqkv_ref, wout_ref, wfc_ref, wproj_ref,
                      wimg_ref, tproj_ref, bias_ref, ls_ref,
                      li_ref,
                      *, n_batch, seq_len, n_heads, vocab):
    """Entire SLIP/CLIP forward on a VMEM-resident (N*L, E) activation slab."""
    nl = n_batch * seq_len
    e = tokpos_ref.shape[-1]               # transformer width
    ed = wimg_ref.shape[-1]                # embed dim
    dh = e // n_heads
    n_layers = wqkv_ref.shape[0]
    gbase = ROWS_PER_LAYER * n_layers      # first global row of the bias slab

    B = bias_ref[...]                      # (rows, 4E) packed biases / LN params

    # ---- encode_image: flattened NCHW rows -> (Linear @ image_projection) folded ----
    b_img = B[gbase + 0:gbase + 1, :ed]
    img_embed = jnp.dot(img_ref[...], wimg_ref[...],
                        preferred_element_type=jnp.float32) + b_img        # (N, ED)

    # ---- token embedding (one-hot matmul) + pre-tiled positional embedding ----
    ids = ids_ref[0:nl, :]                                                  # (NL, 1) int32
    onehot = (ids == lax.broadcasted_iota(jnp.int32, (nl, vocab), 1)
              ).astype(jnp.float32)                                         # (NL, V)
    x = jnp.dot(onehot, tokpos_ref[0:vocab, :],
                preferred_element_type=jnp.float32)                         # (NL, E)
    x = x + tokpos_ref[vocab:vocab + nl, :]                                 # + pos (pre-tiled)

    # ---- block-diagonal causal mask generated in-kernel (iota + compare) ----
    rows_i = lax.broadcasted_iota(jnp.int32, (nl, nl), 0)
    cols_i = lax.broadcasted_iota(jnp.int32, (nl, nl), 1)
    if (seq_len & (seq_len - 1)) == 0:                                      # power of two
        shift = seq_len.bit_length() - 1
        rblk = lax.shift_right_logical(rows_i, shift)
        cblk = lax.shift_right_logical(cols_i, shift)
    else:
        rblk = rows_i // seq_len
        cblk = cols_i // seq_len
    allowed = (rblk == cblk) & (cols_i <= rows_i)
    mask = jnp.where(allowed, jnp.float32(0.0), jnp.float32(NEG_INF))       # (NL, NL)

    # ---- transformer: layers unrolled, attention over the full batch slab ----
    for l in range(n_layers):
        base = ROWS_PER_LAYER * l
        ln1_g = B[base + 0:base + 1, :e]
        ln1_b = B[base + 1:base + 2, :e]
        bqkv = B[base + 2:base + 3, :3 * e]
        bout = B[base + 3:base + 4, :e]
        ln2_g = B[base + 4:base + 5, :e]
        ln2_b = B[base + 5:base + 6, :e]
        bfc = B[base + 6:base + 7, :]
        bproj = B[base + 7:base + 8, :e]

        # attention branch (pre-LN); 1/sqrt(head_dim) already folded into W_q
        h1 = _layernorm(x, ln1_g, ln1_b)
        qkv = jnp.dot(h1, wqkv_ref[l],
                      preferred_element_type=jnp.float32) + bqkv            # (NL, 3E)
        head_outs = []
        for h in range(n_heads):
            c0 = h * dh
            qh = qkv[:, c0:c0 + dh]
            kh = qkv[:, e + c0:e + c0 + dh]
            vh = qkv[:, 2 * e + c0:2 * e + c0 + dh]
            s = lax.dot_general(qh, kh, (((1,), (1,)), ((), ())),
                                preferred_element_type=jnp.float32) + mask  # (NL, NL)
            s = s - jnp.max(s, axis=-1, keepdims=True)
            p = jnp.exp(s)
            p = p * pl.reciprocal(jnp.sum(p, axis=-1, keepdims=True), approx=True)
            head_outs.append(jnp.dot(p, vh, preferred_element_type=jnp.float32))
        attn = jnp.dot(jnp.concatenate(head_outs, axis=-1), wout_ref[l],
                       preferred_element_type=jnp.float32) + bout
        x = x + attn

        # MLP branch (pre-LN, QuickGELU)
        h2 = _layernorm(x, ln2_g, ln2_b)
        fc = jnp.dot(h2, wfc_ref[l], preferred_element_type=jnp.float32) + bfc
        fc = fc * jax.nn.sigmoid(1.702 * fc)
        mlp = jnp.dot(fc, wproj_ref[l], preferred_element_type=jnp.float32) + bproj
        x = x + mlp

    # ---- EOT gather (one-hot select), mean/var LN (affine folded), text proj ----
    eot = ids_ref[nl:nl + n_batch, :]                                       # (N, 1) flattened rows
    sel = (eot == lax.broadcasted_iota(jnp.int32, (n_batch, nl), 1)
           ).astype(jnp.float32)                                            # (N, NL)
    x_eot = jnp.dot(sel, x, preferred_element_type=jnp.float32)             # (N, E)
    mu = jnp.mean(x_eot, axis=-1, keepdims=True)
    var = jnp.mean(jnp.square(x_eot - mu), axis=-1, keepdims=True)
    x_eot = (x_eot - mu) * lax.rsqrt(var + LN_EPS)
    tproj_b = B[gbase + 1:gbase + 2, :ed]
    txt_embed = jnp.dot(x_eot, tproj_ref[...],
                        preferred_element_type=jnp.float32) + tproj_b       # (N, ED)

    # ---- L2-normalize + scaled cosine logits (logits_per_text = transpose, done outside) ----
    ie = img_embed * lax.rsqrt(jnp.sum(img_embed * img_embed, axis=-1, keepdims=True))
    te = txt_embed * lax.rsqrt(jnp.sum(txt_embed * txt_embed, axis=-1, keepdims=True))
    scale = ls_ref[0, 0]                                                    # exp(logit_scale), SMEM scalar
    li_ref[...] = scale * lax.dot_general(ie, te, (((1,), (1,)), ((), ())),
                                          preferred_element_type=jnp.float32)


# ---------------- parameter init (deterministic, mirrors initialize_parameters)
def init_params(key):
    def nrm(k, shape, std):
        return std * jax.random.normal(k, shape, jnp.float32)

    def row(vec, width=4 * WIDTH):
        v = jnp.asarray(vec, jnp.float32).reshape(-1)
        return jnp.pad(v, (0, width - v.shape[0]))[None, :]

    keys = iter(jax.random.split(key, 64))
    p = {}

    # token embedding + positional embedding (pre-tiled over the batch), packed.
    tok = nrm(next(keys), (VOCAB, WIDTH), 0.02)
    pos = nrm(next(keys), (CONTEXT_LEN, WIDTH), 0.01)
    p["tok_pos"] = jnp.concatenate([tok, jnp.tile(pos, (BATCH, 1))], axis=0)  # (V+NL, E)

    # synthetic vision backbone (flatten + Linear), image_projection folded in.
    in_dim = IMG_C * IMG_H * IMG_W
    w_vis = nrm(next(keys), (VISION_WIDTH, in_dim), in_dim ** -0.5)            # Linear weight
    b_vis = jnp.zeros((VISION_WIDTH,), jnp.float32)
    img_proj = nrm(next(keys), (VISION_WIDTH, EMBED_DIM), VISION_WIDTH ** -0.5)
    p["w_img"] = (w_vis.T @ img_proj).astype(jnp.bfloat16)                     # (C*H*W, ED) bf16
    b_img = b_vis @ img_proj                                                   # (ED,)

    # ln_final affine folded into text_projection.
    txt_proj = nrm(next(keys), (WIDTH, EMBED_DIM), WIDTH ** -0.5)
    lnf_g = jnp.ones((WIDTH,), jnp.float32)
    lnf_b = jnp.zeros((WIDTH,), jnp.float32)
    p["tproj"] = lnf_g[:, None] * txt_proj                                     # diag(g) @ tproj
    tproj_bias = lnf_b @ txt_proj                                              # (ED,)

    # exp(log(1/0.07)) folded at init; consumed as an SMEM scalar in the kernel.
    p["logit_scale_exp"] = jnp.full((1, 1), 1.0 / 0.07, jnp.float32)

    attn_std = WIDTH ** -0.5
    proj_std = (WIDTH ** -0.5) * ((2 * LAYERS) ** -0.5)
    fc_std = (2 * WIDTH) ** -0.5
    qk_scale = (WIDTH // HEADS) ** -0.5

    wqkv, wout, wfc, wproj, bias_rows = [], [], [], [], []
    for _ in range(LAYERS):
        in_proj_w = nrm(next(keys), (3 * WIDTH, WIDTH), attn_std)              # (3E, E)
        out_proj_w = nrm(next(keys), (WIDTH, WIDTH), proj_std)                 # (E, E)
        wfc_l = nrm(next(keys), (4 * WIDTH, WIDTH), fc_std)                    # (4E, E)
        wproj_l = nrm(next(keys), (WIDTH, 4 * WIDTH), proj_std)                # (E, 4E)

        wqkv_t = in_proj_w.T                                                   # (E, 3E)
        wqkv_t = wqkv_t.at[:, :WIDTH].multiply(qk_scale)   # fold 1/sqrt(head_dim) into W_q
        wqkv.append(wqkv_t)
        wout.append(out_proj_w.T)
        wfc.append(wfc_l.T)
        wproj.append(wproj_l.T)

        # per-layer bias/LN rows (ROWS_PER_LAYER rows, width 4E)
        bias_rows.append(row(jnp.ones(WIDTH)))          # ln1 gamma
        bias_rows.append(row(jnp.zeros(WIDTH)))         # ln1 beta
        bias_rows.append(row(jnp.zeros(3 * WIDTH)))     # [b_q*scale | b_k | b_v] (zeros)
        bias_rows.append(row(jnp.zeros(WIDTH)))         # out_proj bias
        bias_rows.append(row(jnp.ones(WIDTH)))          # ln2 gamma
        bias_rows.append(row(jnp.zeros(WIDTH)))         # ln2 beta
        bias_rows.append(row(jnp.zeros(4 * WIDTH)))     # c_fc bias
        bias_rows.append(row(jnp.zeros(WIDTH)))         # c_proj bias

    # global rows: folded vision bias, folded text-projection bias
    bias_rows.append(row(b_img))
    bias_rows.append(row(tproj_bias))

    p["wqkv"] = jnp.stack(wqkv)          # (LAYERS, E, 3E)
    p["wout"] = jnp.stack(wout)          # (LAYERS, E, E)
    p["wfc"] = jnp.stack(wfc)            # (LAYERS, E, 4E)
    p["wproj"] = jnp.stack(wproj)        # (LAYERS, 4E, E)
    p["bias_slab"] = jnp.concatenate(bias_rows, axis=0)  # (8*LAYERS + 2, 4E)
    return p


# ---------------- forward pass (single pallas_call) ----------------------------
def slip_forward(params, image, text):
    n = image.shape[0]
    nl = n * CONTEXT_LEN

    img_flat = image.reshape(n, -1).astype(jnp.bfloat16)             # (N, C*H*W) bf16 inputs, f32 acc
    eot = jnp.argmax(text, axis=-1).astype(jnp.int32)                # text.argmax(-1)
    eot_row = jnp.arange(n, dtype=jnp.int32) * CONTEXT_LEN + eot     # flattened EOT rows
    ids_eot = jnp.concatenate([text.reshape(nl).astype(jnp.int32), eot_row]
                              ).reshape(nl + n, 1)                   # (NL+N, 1) int32

    kernel = functools.partial(slip_fused_kernel, n_batch=n, seq_len=CONTEXT_LEN,
                               n_heads=HEADS, vocab=VOCAB)
    vmem = pl.BlockSpec(memory_space=pltpu.MemorySpace.VMEM)
    smem = pl.BlockSpec(memory_space=pltpu.MemorySpace.SMEM)

    args = (img_flat, ids_eot, params["tok_pos"],
            params["wqkv"], params["wout"], params["wfc"], params["wproj"],
            params["w_img"], params["tproj"], params["bias_slab"],
            params["logit_scale_exp"])

    logits_per_image = pl.pallas_call(
        kernel,
        out_shape=jax.ShapeDtypeStruct((n, n), jnp.float32),
        in_specs=[vmem] * (len(args) - 1) + [smem],
        out_specs=vmem,
    )(*args)
    # logits_per_text is exactly the transpose (done outside the kernel, free at this size).
    return logits_per_image, logits_per_image.T


# ---------------- main --------------------------------------------------------
if __name__ == "__main__":
    key = jax.random.PRNGKey(0)
    k_img, k_txt, k_par = jax.random.split(key, 3)
    image = jax.random.normal(k_img, (BATCH, IMG_C, IMG_H, IMG_W), jnp.float32)
    text = jax.random.randint(k_txt, (BATCH, CONTEXT_LEN), 0, VOCAB, dtype=jnp.int32)
    params = init_params(k_par)

    fwd = jax.jit(slip_forward)
    logits_per_image, logits_per_text = fwd(params, image, text)
    jax.block_until_ready((logits_per_image, logits_per_text))

    assert logits_per_image.shape == (BATCH, BATCH)
    assert logits_per_text.shape == (BATCH, BATCH)
    assert bool(jnp.all(jnp.isfinite(logits_per_image)))
    assert bool(jnp.all(jnp.isfinite(logits_per_text)))
    assert bool(jnp.allclose(logits_per_text, logits_per_image.T))
    print("KERNEL_OK")
</pallas_src>

<mosaic_0001>
module attributes {stable_mosaic.version = 11 : i64} {
  func.func @slip_fused_kernel(%arg0: memref<2x1024xbf16, #tpu.memory_space<vmem>>, %arg1: memref<18x1xi32, #tpu.memory_space<vmem>>, %arg2: memref<80x32xf32, #tpu.memory_space<vmem>>, %arg3: memref<2x32x96xf32, #tpu.memory_space<vmem>>, %arg4: memref<2x32x32xf32, #tpu.memory_space<vmem>>, %arg5: memref<2x32x128xf32, #tpu.memory_space<vmem>>, %arg6: memref<2x128x32xf32, #tpu.memory_space<vmem>>, %arg7: memref<1024x32xbf16, #tpu.memory_space<vmem>>, %arg8: memref<32x32xf32, #tpu.memory_space<vmem>>, %arg9: memref<18x128xf32, #tpu.memory_space<vmem>>, %arg10: memref<1x1xf32, #tpu.memory_space<smem>>, %arg11: memref<2x2xf32, #tpu.memory_space<vmem>>) attributes {dimension_semantics = [], scalar_prefetch = 0 : i64, scratch_operands = 0 : i64, tpu.core_type = #tpu.core_type<tc>} {
    %c0 = arith.constant 0 : index
    %c0_0 = arith.constant 0 : index
    %0 = vector.load %arg9[%c0, %c0_0] : memref<18x128xf32, #tpu.memory_space<vmem>>, vector<18x128xf32>
    %1 = vector.extract_strided_slice %0 {offsets = [16, 0], sizes = [1, 32], strides = [1, 1]} : vector<18x128xf32> to vector<1x32xf32>
    %c0_1 = arith.constant 0 : index
    %c0_2 = arith.constant 0 : index
    %2 = vector.load %arg0[%c0_1, %c0_2] : memref<2x1024xbf16, #tpu.memory_space<vmem>>, vector<2x1024xbf16>
    %c0_3 = arith.constant 0 : index
    %c0_4 = arith.constant 0 : index
    %3 = vector.load %arg7[%c0_3, %c0_4] : memref<1024x32xbf16, #tpu.memory_space<vmem>>, vector<1024x32xbf16>
    %cst = arith.constant dense<0.000000e+00> : vector<2x32xf32>
    %4 = tpu.matmul %2, %3, %cst {dimension_numbers = #tpu.dot_dimension_numbers<[1], [0], [0], [1], [0, 0, 1, 1], [], []>} : vector<2x1024xbf16>, vector<1024x32xbf16>, vector<2x32xf32> -> vector<2x32xf32>
    %5 = vector.broadcast %1 : vector<1x32xf32> to vector<2x32xf32>
    %6 = arith.addf %4, %5 : vector<2x32xf32>
    %c0_5 = arith.constant 0 : index
    %c0_6 = arith.constant 0 : index
    %7 = vector.load %arg1[%c0_5, %c0_6] : memref<18x1xi32, #tpu.memory_space<vmem>>, vector<16x1xi32>
    %8 = tpu.iota {dimensions = array<i32: 1>} : vector<16x64xi32>
    %9 = vector.broadcast %7 : vector<16x1xi32> to vector<16x64xi32>
    %10 = arith.cmpi eq, %9, %8 : vector<16x64xi32>
    %11 = arith.extui %10 : vector<16x64xi1> to vector<16x64xi32>
    %12 = arith.sitofp %11 : vector<16x64xi32> to vector<16x64xf32>
    %c0_7 = arith.constant 0 : index
    %c0_8 = arith.constant 0 : index
    %13 = vector.load %arg2[%c0_7, %c0_8] : memref<80x32xf32, #tpu.memory_space<vmem>>, vector<64x32xf32>
    %cst_9 = arith.constant dense<0.000000e+00> : vector<16x32xf32>
    %14 = tpu.matmul %12, %13, %cst_9 {dimension_numbers = #tpu.dot_dimension_numbers<[1], [0], [0], [1], [0, 0, 1, 1], [], []>} : vector<16x64xf32>, vector<64x32xf32>, vector<16x32xf32> -> vector<16x32xf32>
    %c64 = arith.constant 64 : index
    %c0_10 = arith.constant 0 : index
    %15 = vector.load %arg2[%c64, %c0_10] : memref<80x32xf32, #tpu.memory_space<vmem>>, vector<16x32xf32>
    %16 = arith.addf %14, %15 : vector<16x32xf32>
    %17 = tpu.iota {dimensions = array<i32: 0>} : vector<16x16xi32>
    %18 = tpu.iota {dimensions = array<i32: 1>} : vector<16x16xi32>
    %c3_i32 = arith.constant 3 : i32
    %19 = vector.broadcast %c3_i32 : i32 to vector<16x16xi32>
    %20 = arith.shrui %17, %19 : vector<16x16xi32>
    %c3_i32_11 = arith.constant 3 : i32
    %21 = vector.broadcast %c3_i32_11 : i32 to vector<16x16xi32>
    %22 = arith.shrui %18, %21 : vector<16x16xi32>
    %23 = arith.cmpi eq, %20, %22 : vector<16x16xi32>
    %24 = arith.cmpi sle, %18, %17 : vector<16x16xi32>
    %25 = arith.andi %23, %24 : vector<16x16xi1>
    %cst_12 = arith.constant 0.000000e+00 : f32
    %cst_13 = arith.constant -1.000000e+30 : f32
    %26 = vector.broadcast %cst_12 : f32 to vector<16x16xf32>
    %27 = vector.broadcast %cst_13 : f32 to vector<16x16xf32>
    %28 = arith.select %25, %26, %27 : vector<16x16xi1>, vector<16x16xf32>
    %29 = vector.extract_strided_slice %0 {offsets = [0, 0], sizes = [1, 32], strides = [1, 1]} : vector<18x128xf32> to vector<1x32xf32>
    %30 = vector.extract_strided_slice %0 {offsets = [1, 0], sizes = [1, 32], strides = [1, 1]} : vector<18x128xf32> to vector<1x32xf32>
    %31 = vector.extract_strided_slice %0 {offsets = [2, 0], sizes = [1, 96], strides = [1, 1]} : vector<18x128xf32> to vector<1x96xf32>
    %32 = vector.extract_strided_slice %0 {offsets = [3, 0], sizes = [1, 32], strides = [1, 1]} : vector<18x128xf32> to vector<1x32xf32>
    %33 = vector.extract_strided_slice %0 {offsets = [4, 0], sizes = [1, 32], strides = [1, 1]} : vector<18x128xf32> to vector<1x32xf32>
    %34 = vector.extract_strided_slice %0 {offsets = [5, 0], sizes = [1, 32], strides = [1, 1]} : vector<18x128xf32> to vector<1x32xf32>
    %35 = vector.extract_strided_slice %0 {offsets = [6, 0], sizes = [1, 128], strides = [1, 1]} : vector<18x128xf32> to vector<1x128xf32>
    %36 = vector.extract_strided_slice %0 {offsets = [7, 0], sizes = [1, 32], strides = [1, 1]} : vector<18x128xf32> to vector<1x32xf32>
    %cst_14 = arith.constant dense<0.000000e+00> : vector<16xf32>
    %37 = vector.multi_reduction <add>, %16, %cst_14 [1] : vector<16x32xf32> to vector<16xf32>
    %38 = vector.shape_cast %37 : vector<16xf32> to vector<16x1xf32>
    %cst_15 = arith.constant 3.200000e+01 : f32
    %39 = vector.broadcast %cst_15 : f32 to vector<16x1xf32>
    %40 = arith.divf %38, %39 : vector<16x1xf32>
    %41 = vector.broadcast %40 : vector<16x1xf32> to vector<16x32xf32>
    %42 = arith.subf %16, %41 : vector<16x32xf32>
    %43 = arith.mulf %42, %42 : vector<16x32xf32>
    %cst_16 = arith.constant dense<0.000000e+00> : vector<16xf32>
    %44 = vector.multi_reduction <add>, %43, %cst_16 [1] : vector<16x32xf32> to vector<16xf32>
    %45 = vector.shape_cast %44 : vector<16xf32> to vector<16x1xf32>
    %cst_17 = arith.constant 3.200000e+01 : f32
    %46 = vector.broadcast %cst_17 : f32 to vector<16x1xf32>
    %47 = arith.divf %45, %46 : vector<16x1xf32>
    %48 = vector.broadcast %40 : vector<16x1xf32> to vector<16x32xf32>
    %49 = arith.subf %16, %48 : vector<16x32xf32>
    %cst_18 = arith.constant 9.99999974E-6 : f32
    %50 = vector.broadcast %cst_18 : f32 to vector<16x1xf32>
    %51 = arith.addf %47, %50 : vector<16x1xf32>
    %52 = math.rsqrt %51 : vector<16x1xf32>
    %53 = vector.broadcast %52 : vector<16x1xf32> to vector<16x32xf32>
    %54 = arith.mulf %49, %53 : vector<16x32xf32>
    %55 = vector.broadcast %29 : vector<1x32xf32> to vector<16x32xf32>
    %56 = arith.mulf %54, %55 : vector<16x32xf32>
    %57 = vector.broadcast %30 : vector<1x32xf32> to vector<16x32xf32>
    %58 = arith.addf %56, %57 : vector<16x32xf32>
    %c0_19 = arith.constant 0 : index
    %c0_20 = arith.constant 0 : index
    %c0_21 = arith.constant 0 : index
    %59 = vector.load %arg3[%c0_19, %c0_20, %c0_21] : memref<2x32x96xf32, #tpu.memory_space<vmem>>, vector<1x32x96xf32>
    %60 = vector.shape_cast %59 : vector<1x32x96xf32> to vector<32x96xf32>
    %cst_22 = arith.constant dense<0.000000e+00> : vector<16x96xf32>
    %61 = tpu.matmul %58, %60, %cst_22 {dimension_numbers = #tpu.dot_dimension_numbers<[1], [0], [0], [1], [0, 0, 1, 1], [], []>} : vector<16x32xf32>, vector<32x96xf32>, vector<16x96xf32> -> vector<16x96xf32>
    %62 = vector.broadcast %31 : vector<1x96xf32> to vector<16x96xf32>
    %63 = arith.addf %61, %62 : vector<16x96xf32>
    %64 = vector.extract_strided_slice %63 {offsets = [0, 0], sizes = [16, 8], strides = [1, 1]} : vector<16x96xf32> to vector<16x8xf32>
    %65 = vector.extract_strided_slice %63 {offsets = [0, 32], sizes = [16, 8], strides = [1, 1]} : vector<16x96xf32> to vector<16x8xf32>
    %66 = vector.extract_strided_slice %63 {offsets = [0, 64], sizes = [16, 8], strides = [1, 1]} : vector<16x96xf32> to vector<16x8xf32>
    %cst_23 = arith.constant dense<0.000000e+00> : vector<16x16xf32>
    %67 = tpu.matmul %64, %65, %cst_23 {dimension_numbers = #tpu.dot_dimension_numbers<[1], [1], [0], [0], [0, 0, 1, 0], [], []>} : vector<16x8xf32>, vector<16x8xf32>, vector<16x16xf32> -> vector<16x16xf32>
    %68 = arith.addf %67, %28 : vector<16x16xf32>
    %cst_24 = arith.constant dense<0xFF800000> : vector<16xf32>
    %69 = vector.multi_reduction <maximumf>, %68, %cst_24 [1] : vector<16x16xf32> to vector<16xf32>
    %70 = vector.shape_cast %69 : vector<16xf32> to vector<16x1xf32>
    %71 = vector.broadcast %70 : vector<16x1xf32> to vector<16x16xf32>
    %72 = arith.subf %68, %71 : vector<16x16xf32>
    %73 = math.exp %72 : vector<16x16xf32>
    %cst_25 = arith.constant dense<0.000000e+00> : vector<16xf32>
    %74 = vector.multi_reduction <add>, %73, %cst_25 [1] : vector<16x16xf32> to vector<16xf32>
    %75 = vector.shape_cast %74 : vector<16xf32> to vector<16x1xf32>
    %76 = tpu.reciprocal %75 {approx = true} : vector<16x1xf32> -> vector<16x1xf32>
    %77 = vector.broadcast %76 : vector<16x1xf32> to vector<16x16xf32>
    %78 = arith.mulf %73, %77 : vector<16x16xf32>
    %cst_26 = arith.constant dense<0.000000e+00> : vector<16x8xf32>
    %79 = tpu.matmul %78, %66, %cst_26 {dimension_numbers = #tpu.dot_dimension_numbers<[1], [0], [0], [1], [0, 0, 1, 1], [], []>} : vector<16x16xf32>, vector<16x8xf32>, vector<16x8xf32> -> vector<16x8xf32>
    %80 = vector.extract_strided_slice %63 {offsets = [0, 8], sizes = [16, 8], strides = [1, 1]} : vector<16x96xf32> to vector<16x8xf32>
    %81 = vector.extract_strided_slice %63 {offsets = [0, 40], sizes = [16, 8], strides = [1, 1]} : vector<16x96xf32> to vector<16x8xf32>
    %82 = vector.extract_strided_slice %63 {offsets = [0, 72], sizes = [16, 8], strides = [1, 1]} : vector<16x96xf32> to vector<16x8xf32>
    %cst_27 = arith.constant dense<0.000000e+00> : vector<16x16xf32>
    %83 = tpu.matmul %80, %81, %cst_27 {dimension_numbers = #tpu.dot_dimension_numbers<[1], [1], [0], [0], [0, 0, 1, 0], [], []>} : vector<16x8xf32>, vector<16x8xf32>, vector<16x16xf32> -> vector<16x16xf32>
    %84 = arith.addf %83, %28 : vector<16x16xf32>
    %cst_28 = arith.constant dense<0xFF800000> : vector<16xf32>
    %85 = vector.multi_reduction <maximumf>, %84, %cst_28 [1] : vector<16x16xf32> to vector<16xf32>
    %86 = vector.shape_cast %85 : vector<16xf32> to vector<16x1xf32>
    %87 = vector.broadcast %86 : vector<16x1xf32> to vector<16x16xf32>
    %88 = arith.subf %84, %87 : vector<16x16xf32>
    %89 = math.exp %88 : vector<16x16xf32>
    %cst_29 = arith.constant dense<0.000000e+00> : vector<16xf32>
    %90 = vector.multi_reduction <add>, %89, %cst_29 [1] : vector<16x16xf32> to vector<16xf32>
    %91 = vector.shape_cast %90 : vector<16xf32> to vector<16x1xf32>
    %92 = tpu.reciprocal %91 {approx = true} : vector<16x1xf32> -> vector<16x1xf32>
    %93 = vector.broadcast %92 : vector<16x1xf32> to vector<16x16xf32>
    %94 = arith.mulf %89, %93 : vector<16x16xf32>
    %cst_30 = arith.constant dense<0.000000e+00> : vector<16x8xf32>
    %95 = tpu.matmul %94, %82, %cst_30 {dimension_numbers = #tpu.dot_dimension_numbers<[1], [0], [0], [1], [0, 0, 1, 1], [], []>} : vector<16x16xf32>, vector<16x8xf32>, vector<16x8xf32> -> vector<16x8xf32>
    %96 = vector.extract_strided_slice %63 {offsets = [0, 16], sizes = [16, 8], strides = [1, 1]} : vector<16x96xf32> to vector<16x8xf32>
    %97 = vector.extract_strided_slice %63 {offsets = [0, 48], sizes = [16, 8], strides = [1, 1]} : vector<16x96xf32> to vector<16x8xf32>
    %98 = vector.extract_strided_slice %63 {offsets = [0, 80], sizes = [16, 8], strides = [1, 1]} : vector<16x96xf32> to vector<16x8xf32>
    %cst_31 = arith.constant dense<0.000000e+00> : vector<16x16xf32>
    %99 = tpu.matmul %96, %97, %cst_31 {dimension_numbers = #tpu.dot_dimension_numbers<[1], [1], [0], [0], [0, 0, 1, 0], [], []>} : vector<16x8xf32>, vector<16x8xf32>, vector<16x16xf32> -> vector<16x16xf32>
    %100 = arith.addf %99, %28 : vector<16x16xf32>
    %cst_32 = arith.constant dense<0xFF800000> : vector<16xf32>
    %101 = vector.multi_reduction <maximumf>, %100, %cst_32 [1] : vector<16x16xf32> to vector<16xf32>
    %102 = vector.shape_cast %101 : vector<16xf32> to vector<16x1xf32>
    %103 = vector.broadcast %102 : vector<16x1xf32> to vector<16x16xf32>
    %104 = arith.subf %100, %103 : vector<16x16xf32>
    %105 = math.exp %104 : vector<16x16xf32>
    %cst_33 = arith.constant dense<0.000000e+00> : vector<16xf32>
    %106 = vector.multi_reduction <add>, %105, %cst_33 [1] : vector<16x16xf32> to vector<16xf32>
    %107 = vector.shape_cast %106 : vector<16xf32> to vector<16x1xf32>
    %108 = tpu.reciprocal %107 {approx = true} : vector<16x1xf32> -> vector<16x1xf32>
    %109 = vector.broadcast %108 : vector<16x1xf32> to vector<16x16xf32>
    %110 = arith.mulf %105, %109 : vector<16x16xf32>
    %cst_34 = arith.constant dense<0.000000e+00> : vector<16x8xf32>
    %111 = tpu.matmul %110, %98, %cst_34 {dimension_numbers = #tpu.dot_dimension_numbers<[1], [0], [0], [1], [0, 0, 1, 1], [], []>} : vector<16x16xf32>, vector<16x8xf32>, vector<16x8xf32> -> vector<16x8xf32>
    %112 = vector.extract_strided_slice %63 {offsets = [0, 24], sizes = [16, 8], strides = [1, 1]} : vector<16x96xf32> to vector<16x8xf32>
    %113 = vector.extract_strided_slice %63 {offsets = [0, 56], sizes = [16, 8], strides = [1, 1]} : vector<16x96xf32> to vector<16x8xf32>
    %114 = vector.extract_strided_slice %63 {offsets = [0, 88], sizes = [16, 8], strides = [1, 1]} : vector<16x96xf32> to vector<16x8xf32>
    %cst_35 = arith.constant dense<0.000000e+00> : vector<16x16xf32>
    %115 = tpu.matmul %112, %113, %cst_35 {dimension_numbers = #tpu.dot_dimension_numbers<[1], [1], [0], [0], [0, 0, 1, 0], [], []>} : vector<16x8xf32>, vector<16x8xf32>, vector<16x16xf32> -> vector<16x16xf32>
    %116 = arith.addf %115, %28 : vector<16x16xf32>
    %cst_36 = arith.constant dense<0xFF800000> : vector<16xf32>
    %117 = vector.multi_reduction <maximumf>, %116, %cst_36 [1] : vector<16x16xf32> to vector<16xf32>
    %118 = vector.shape_cast %117 : vector<16xf32> to vector<16x1xf32>
    %119 = vector.broadcast %118 : vector<16x1xf32> to vector<16x16xf32>
    %120 = arith.subf %116, %119 : vector<16x16xf32>
    %121 = math.exp %120 : vector<16x16xf32>
    %cst_37 = arith.constant dense<0.000000e+00> : vector<16xf32>
    %122 = vector.multi_reduction <add>, %121, %cst_37 [1] : vector<16x16xf32> to vector<16xf32>
    %123 = vector.shape_cast %122 : vector<16xf32> to vector<16x1xf32>
    %124 = tpu.reciprocal %123 {approx = true} : vector<16x1xf32> -> vector<16x1xf32>
    %125 = vector.broadcast %124 : vector<16x1xf32> to vector<16x16xf32>
    %126 = arith.mulf %121, %125 : vector<16x16xf32>
    %cst_38 = arith.constant dense<0.000000e+00> : vector<16x8xf32>
    %127 = tpu.matmul %126, %114, %cst_38 {dimension_numbers = #tpu.dot_dimension_numbers<[1], [0], [0], [1], [0, 0, 1, 1], [], []>} : vector<16x16xf32>, vector<16x8xf32>, vector<16x8xf32> -> vector<16x8xf32>
    %128 = tpu.concatenate %79, %95, %111, %127 in 1 : vector<16x8xf32>, vector<16x8xf32>, vector<16x8xf32>, vector<16x8xf32> -> vector<16x32xf32>
    %c0_39 = arith.constant 0 : index
    %c0_40 = arith.constant 0 : index
    %c0_41 = arith.constant 0 : index
    %129 = vector.load %arg4[%c0_39, %c0_40, %c0_41] : memref<2x32x32xf32, #tpu.memory_space<vmem>>, vector<1x32x32xf32>
    %130 = vector.shape_cast %129 : vector<1x32x32xf32> to vector<32x32xf32>
    %cst_42 = arith.constant dense<0.000000e+00> : vector<16x32xf32>
    %131 = tpu.matmul %128, %130, %cst_42 {dimension_numbers = #tpu.dot_dimension_numbers<[1], [0], [0], [1], [0, 0, 1, 1], [], []>} : vector<16x32xf32>, vector<32x32xf32>, vector<16x32xf32> -> vector<16x32xf32>
    %132 = vector.broadcast %32 : vector<1x32xf32> to vector<16x32xf32>
    %133 = arith.addf %131, %132 : vector<16x32xf32>
    %134 = arith.addf %16, %133 : vector<16x32xf32>
    %cst_43 = arith.constant dense<0.000000e+00> : vector<16xf32>
    %135 = vector.multi_reduction <add>, %134, %cst_43 [1] : vector<16x32xf32> to vector<16xf32>
    %136 = vector.shape_cast %135 : vector<16xf32> to vector<16x1xf32>
    %cst_44 = arith.constant 3.200000e+01 : f32
    %137 = vector.broadcast %cst_44 : f32 to vector<16x1xf32>
    %138 = arith.divf %136, %137 : vector<16x1xf32>
    %139 = vector.broadcast %138 : vector<16x1xf32> to vector<16x32xf32>
    %140 = arith.subf %134, %139 : vector<16x32xf32>
    %141 = arith.mulf %140, %140 : vector<16x32xf32>
    %cst_45 = arith.constant dense<0.000000e+00> : vector<16xf32>
    %142 = vector.multi_reduction <add>, %141, %cst_45 [1] : vector<16x32xf32> to vector<16xf32>
    %143 = vector.shape_cast %142 : vector<16xf32> to vector<16x1xf32>
    %cst_46 = arith.constant 3.200000e+01 : f32
    %144 = vector.broadcast %cst_46 : f32 to vector<16x1xf32>
    %145 = arith.divf %143, %144 : vector<16x1xf32>
    %146 = vector.broadcast %138 : vector<16x1xf32> to vector<16x32xf32>
    %147 = arith.subf %134, %146 : vector<16x32xf32>
    %cst_47 = arith.constant 9.99999974E-6 : f32
    %148 = vector.broadcast %cst_47 : f32 to vector<16x1xf32>
    %149 = arith.addf %145, %148 : vector<16x1xf32>
    %150 = math.rsqrt %149 : vector<16x1xf32>
    %151 = vector.broadcast %150 : vector<16x1xf32> to vector<16x32xf32>
    %152 = arith.mulf %147, %151 : vector<16x32xf32>
    %153 = vector.broadcast %33 : vector<1x32xf32> to vector<16x32xf32>
    %154 = arith.mulf %152, %153 : vector<16x32xf32>
    %155 = vector.broadcast %34 : vector<1x32xf32> to vector<16x32xf32>
    %156 = arith.addf %154, %155 : vector<16x32xf32>
    %c0_48 = arith.constant 0 : index
    %c0_49 = arith.constant 0 : index
    %c0_50 = arith.constant 0 : index
    %157 = vector.load %arg5[%c0_48, %c0_49, %c0_50] : memref<2x32x128xf32, #tpu.memory_space<vmem>>, vector<1x32x128xf32>
    %158 = vector.shape_cast %157 : vector<1x32x128xf32> to vector<32x128xf32>
    %cst_51 = arith.constant dense<0.000000e+00> : vector<16x128xf32>
    %159 = tpu.matmul %156, %158, %cst_51 {dimension_numbers = #tpu.dot_dimension_numbers<[1], [0], [0], [1], [0, 0, 1, 1], [], []>} : vector<16x32xf32>, vector<32x128xf32>, vector<16x128xf32> -> vector<16x128xf32>
    %160 = vector.broadcast %35 : vector<1x128xf32> to vector<16x128xf32>
    %161 = arith.addf %159, %160 : vector<16x128xf32>
    %cst_52 = arith.constant 1.702000e+00 : f32
    %162 = vector.broadcast %cst_52 : f32 to vector<16x128xf32>
    %163 = arith.mulf %162, %161 : vector<16x128xf32>
    %164 = arith.negf %163 : vector<16x128xf32>
    %165 = math.exp %164 : vector<16x128xf32>
    %cst_53 = arith.constant 1.000000e+00 : f32
    %166 = vector.broadcast %cst_53 : f32 to vector<16x128xf32>
    %167 = arith.addf %166, %165 : vector<16x128xf32>
    %168 = arith.divf %166, %167 : vector<16x128xf32>
    %169 = arith.mulf %161, %168 : vector<16x128xf32>
    %c0_54 = arith.constant 0 : index
    %c0_55 = arith.constant 0 : index
    %c0_56 = arith.constant 0 : index
    %170 = vector.load %arg6[%c0_54, %c0_55, %c0_56] : memref<2x128x32xf32, #tpu.memory_space<vmem>>, vector<1x128x32xf32>
    %171 = vector.shape_cast %170 : vector<1x128x32xf32> to vector<128x32xf32>
    %cst_57 = arith.constant dense<0.000000e+00> : vector<16x32xf32>
    %172 = tpu.matmul %169, %171, %cst_57 {dimension_numbers = #tpu.dot_dimension_numbers<[1], [0], [0], [1], [0, 0, 1, 1], [], []>} : vector<16x128xf32>, vector<128x32xf32>, vector<16x32xf32> -> vector<16x32xf32>
    %173 = vector.broadcast %36 : vector<1x32xf32> to vector<16x32xf32>
    %174 = arith.addf %172, %173 : vector<16x32xf32>
    %175 = arith.addf %134, %174 : vector<16x32xf32>
    %176 = vector.extract_strided_slice %0 {offsets = [8, 0], sizes = [1, 32], strides = [1, 1]} : vector<18x128xf32> to vector<1x32xf32>
    %177 = vector.extract_strided_slice %0 {offsets = [9, 0], sizes = [1, 32], strides = [1, 1]} : vector<18x128xf32> to vector<1x32xf32>
    %178 = vector.extract_strided_slice %0 {offsets = [10, 0], sizes = [1, 96], strides = [1, 1]} : vector<18x128xf32> to vector<1x96xf32>
    %179 = vector.extract_strided_slice %0 {offsets = [11, 0], sizes = [1, 32], strides = [1, 1]} : vector<18x128xf32> to vector<1x32xf32>
    %180 = vector.extract_strided_slice %0 {offsets = [12, 0], sizes = [1, 32], strides = [1, 1]} : vector<18x128xf32> to vector<1x32xf32>
    %181 = vector.extract_strided_slice %0 {offsets = [13, 0], sizes = [1, 32], strides = [1, 1]} : vector<18x128xf32> to vector<1x32xf32>
    %182 = vector.extract_strided_slice %0 {offsets = [14, 0], sizes = [1, 128], strides = [1, 1]} : vector<18x128xf32> to vector<1x128xf32>
    %183 = vector.extract_strided_slice %0 {offsets = [15, 0], sizes = [1, 32], strides = [1, 1]} : vector<18x128xf32> to vector<1x32xf32>
    %cst_58 = arith.constant dense<0.000000e+00> : vector<16xf32>
    %184 = vector.multi_reduction <add>, %175, %cst_58 [1] : vector<16x32xf32> to vector<16xf32>
    %185 = vector.shape_cast %184 : vector<16xf32> to vector<16x1xf32>
    %cst_59 = arith.constant 3.200000e+01 : f32
    %186 = vector.broadcast %cst_59 : f32 to vector<16x1xf32>
    %187 = arith.divf %185, %186 : vector<16x1xf32>
    %188 = vector.broadcast %187 : vector<16x1xf32> to vector<16x32xf32>
    %189 = arith.subf %175, %188 : vector<16x32xf32>
    %190 = arith.mulf %189, %189 : vector<16x32xf32>
    %cst_60 = arith.constant dense<0.000000e+00> : vector<16xf32>
    %191 = vector.multi_reduction <add>, %190, %cst_60 [1] : vector<16x32xf32> to vector<16xf32>
    %192 = vector.shape_cast %191 : vector<16xf32> to vector<16x1xf32>
    %cst_61 = arith.constant 3.200000e+01 : f32
    %193 = vector.broadcast %cst_61 : f32 to vector<16x1xf32>
    %194 = arith.divf %192, %193 : vector<16x1xf32>
    %195 = vector.broadcast %187 : vector<16x1xf32> to vector<16x32xf32>
    %196 = arith.subf %175, %195 : vector<16x32xf32>
    %cst_62 = arith.constant 9.99999974E-6 : f32
    %197 = vector.broadcast %cst_62 : f32 to vector<16x1xf32>
    %198 = arith.addf %194, %197 : vector<16x1xf32>
    %199 = math.rsqrt %198 : vector<16x1xf32>
    %200 = vector.broadcast %199 : vector<16x1xf32> to vector<16x32xf32>
    %201 = arith.mulf %196, %200 : vector<16x32xf32>
    %202 = vector.broadcast %176 : vector<1x32xf32> to vector<16x32xf32>
    %203 = arith.mulf %201, %202 : vector<16x32xf32>
    %204 = vector.broadcast %177 : vector<1x32xf32> to vector<16x32xf32>
    %205 = arith.addf %203, %204 : vector<16x32xf32>
    %c1 = arith.constant 1 : index
    %c0_63 = arith.constant 0 : index
    %c0_64 = arith.constant 0 : index
    %206 = vector.load %arg3[%c1, %c0_63, %c0_64] : memref<2x32x96xf32, #tpu.memory_space<vmem>>, vector<1x32x96xf32>
    %207 = vector.shape_cast %206 : vector<1x32x96xf32> to vector<32x96xf32>
    %cst_65 = arith.constant dense<0.000000e+00> : vector<16x96xf32>
    %208 = tpu.matmul %205, %207, %cst_65 {dimension_numbers = #tpu.dot_dimension_numbers<[1], [0], [0], [1], [0, 0, 1, 1], [], []>} : vector<16x32xf32>, vector<32x96xf32>, vector<16x96xf32> -> vector<16x96xf32>
    %209 = vector.broadcast %178 : vector<1x96xf32> to vector<16x96xf32>
    %210 = arith.addf %208, %209 : vector<16x96xf32>
    %211 = vector.extract_strided_slice %210 {offsets = [0, 0], sizes = [16, 8], strides = [1, 1]} : vector<16x96xf32> to vector<16x8xf32>
    %212 = vector.extract_strided_slice %210 {offsets = [0, 32], sizes = [16, 8], strides = [1, 1]} : vector<16x96xf32> to vector<16x8xf32>
    %213 = vector.extract_strided_slice %210 {offsets = [0, 64], sizes = [16, 8], strides = [1, 1]} : vector<16x96xf32> to vector<16x8xf32>
    %cst_66 = arith.constant dense<0.000000e+00> : vector<16x16xf32>
    %214 = tpu.matmul %211, %212, %cst_66 {dimension_numbers = #tpu.dot_dimension_numbers<[1], [1], [0], [0], [0, 0, 1, 0], [], []>} : vector<16x8xf32>, vector<16x8xf32>, vector<16x16xf32> -> vector<16x16xf32>
    %215 = arith.addf %214, %28 : vector<16x16xf32>
    %cst_67 = arith.constant dense<0xFF800000> : vector<16xf32>
    %216 = vector.multi_reduction <maximumf>, %215, %cst_67 [1] : vector<16x16xf32> to vector<16xf32>
    %217 = vector.shape_cast %216 : vector<16xf32> to vector<16x1xf32>
    %218 = vector.broadcast %217 : vector<16x1xf32> to vector<16x16xf32>
    %219 = arith.subf %215, %218 : vector<16x16xf32>
    %220 = math.exp %219 : vector<16x16xf32>
    %cst_68 = arith.constant dense<0.000000e+00> : vector<16xf32>
    %221 = vector.multi_reduction <add>, %220, %cst_68 [1] : vector<16x16xf32> to vector<16xf32>
    %222 = vector.shape_cast %221 : vector<16xf32> to vector<16x1xf32>
    %223 = tpu.reciprocal %222 {approx = true} : vector<16x1xf32> -> vector<16x1xf32>
    %224 = vector.broadcast %223 : vector<16x1xf32> to vector<16x16xf32>
    %225 = arith.mulf %220, %224 : vector<16x16xf32>
    %cst_69 = arith.constant dense<0.000000e+00> : vector<16x8xf32>
    %226 = tpu.matmul %225, %213, %cst_69 {dimension_numbers = #tpu.dot_dimension_numbers<[1], [0], [0], [1], [0, 0, 1, 1], [], []>} : vector<16x16xf32>, vector<16x8xf32>, vector<16x8xf32> -> vector<16x8xf32>
    %227 = vector.extract_strided_slice %210 {offsets = [0, 8], sizes = [16, 8], strides = [1, 1]} : vector<16x96xf32> to vector<16x8xf32>
    %228 = vector.extract_strided_slice %210 {offsets = [0, 40], sizes = [16, 8], strides = [1, 1]} : vector<16x96xf32> to vector<16x8xf32>
    %229 = vector.extract_strided_slice %210 {offsets = [0, 72], sizes = [16, 8], strides = [1, 1]} : vector<16x96xf32> to vector<16x8xf32>
    %cst_70 = arith.constant dense<0.000000e+00> : vector<16x16xf32>
    %230 = tpu.matmul %227, %228, %cst_70 {dimension_numbers = #tpu.dot_dimension_numbers<[1], [1], [0], [0], [0, 0, 1, 0], [], []>} : vector<16x8xf32>, vector<16x8xf32>, vector<16x16xf32> -> vector<16x16xf32>
    %231 = arith.addf %230, %28 : vector<16x16xf32>
    %cst_71 = arith.constant dense<0xFF800000> : vector<16xf32>
    %232 = vector.multi_reduction <maximumf>, %231, %cst_71 [1] : vector<16x16xf32> to vector<16xf32>
    %233 = vector.shape_cast %232 : vector<16xf32> to vector<16x1xf32>
    %234 = vector.broadcast %233 : vector<16x1xf32> to vector<16x16xf32>
    %235 = arith.subf %231, %234 : vector<16x16xf32>
    %236 = math.exp %235 : vector<16x16xf32>
    %cst_72 = arith.constant dense<0.000000e+00> : vector<16xf32>
    %237 = vector.multi_reduction <add>, %236, %cst_72 [1] : vector<16x16xf32> to vector<16xf32>
    %238 = vector.shape_cast %237 : vector<16xf32> to vector<16x1xf32>
    %239 = tpu.reciprocal %238 {approx = true} : vector<16x1xf32> -> vector<16x1xf32>
    %240 = vector.broadcast %239 : vector<16x1xf32> to vector<16x16xf32>
    %241 = arith.mulf %236, %240 : vector<16x16xf32>
    %cst_73 = arith.constant dense<0.000000e+00> : vector<16x8xf32>
    %242 = tpu.matmul %241, %229, %cst_73 {dimension_numbers = #tpu.dot_dimension_numbers<[1], [0], [0], [1], [0, 0, 1, 1], [], []>} : vector<16x16xf32>, vector<16x8xf32>, vector<16x8xf32> -> vector<16x8xf32>
    %243 = vector.extract_strided_slice %210 {offsets = [0, 16], sizes = [16, 8], strides = [1, 1]} : vector<16x96xf32> to vector<16x8xf32>
    %244 = vector.extract_strided_slice %210 {offsets = [0, 48], sizes = [16, 8], strides = [1, 1]} : vector<16x96xf32> to vector<16x8xf32>
    %245 = vector.extract_strided_slice %210 {offsets = [0, 80], sizes = [16, 8], strides = [1, 1]} : vector<16x96xf32> to vector<16x8xf32>
    %cst_74 = arith.constant dense<0.000000e+00> : vector<16x16xf32>
    %246 = tpu.matmul %243, %244, %cst_74 {dimension_numbers = #tpu.dot_dimension_numbers<[1], [1], [0], [0], [0, 0, 1, 0], [], []>} : vector<16x8xf32>, vector<16x8xf32>, vector<16x16xf32> -> vector<16x16xf32>
    %247 = arith.addf %246, %28 : vector<16x16xf32>
    %cst_75 = arith.constant dense<0xFF800000> : vector<16xf32>
    %248 = vector.multi_reduction <maximumf>, %247, %cst_75 [1] : vector<16x16xf32> to vector<16xf32>
    %249 = vector.shape_cast %248 : vector<16xf32> to vector<16x1xf32>
    %250 = vector.broadcast %249 : vector<16x1xf32> to vector<16x16xf32>
    %251 = arith.subf %247, %250 : vector<16x16xf32>
    %252 = math.exp %251 : vector<16x16xf32>
    %cst_76 = arith.constant dense<0.000000e+00> : vector<16xf32>
    %253 = vector.multi_reduction <add>, %252, %cst_76 [1] : vector<16x16xf32> to vector<16xf32>
    %254 = vector.shape_cast %253 : vector<16xf32> to vector<16x1xf32>
    %255 = tpu.reciprocal %254 {approx = true} : vector<16x1xf32> -> vector<16x1xf32>
    %256 = vector.broadcast %255 : vector<16x1xf32> to vector<16x16xf32>
    %257 = arith.mulf %252, %256 : vector<16x16xf32>
    %cst_77 = arith.constant dense<0.000000e+00> : vector<16x8xf32>
    %258 = tpu.matmul %257, %245, %cst_77 {dimension_numbers = #tpu.dot_dimension_numbers<[1], [0], [0], [1], [0, 0, 1, 1], [], []>} : vector<16x16xf32>, vector<16x8xf32>, vector<16x8xf32> -> vector<16x8xf32>
    %259 = vector.extract_strided_slice %210 {offsets = [0, 24], sizes = [16, 8], strides = [1, 1]} : vector<16x96xf32> to vector<16x8xf32>
    %260 = vector.extract_strided_slice %210 {offsets = [0, 56], sizes = [16, 8], strides = [1, 1]} : vector<16x96xf32> to vector<16x8xf32>
    %261 = vector.extract_strided_slice %210 {offsets = [0, 88], sizes = [16, 8], strides = [1, 1]} : vector<16x96xf32> to vector<16x8xf32>
    %cst_78 = arith.constant dense<0.000000e+00> : vector<16x16xf32>
    %262 = tpu.matmul %259, %260, %cst_78 {dimension_numbers = #tpu.dot_dimension_numbers<[1], [1], [0], [0], [0, 0, 1, 0], [], []>} : vector<16x8xf32>, vector<16x8xf32>, vector<16x16xf32> -> vector<16x16xf32>
    %263 = arith.addf %262, %28 : vector<16x16xf32>
    %cst_79 = arith.constant dense<0xFF800000> : vector<16xf32>
    %264 = vector.multi_reduction <maximumf>, %263, %cst_79 [1] : vector<16x16xf32> to vector<16xf32>
    %265 = vector.shape_cast %264 : vector<16xf32> to vector<16x1xf32>
    %266 = vector.broadcast %265 : vector<16x1xf32> to vector<16x16xf32>
    %267 = arith.subf %263, %266 : vector<16x16xf32>
    %268 = math.exp %267 : vector<16x16xf32>
    %cst_80 = arith.constant dense<0.000000e+00> : vector<16xf32>
    %269 = vector.multi_reduction <add>, %268, %cst_80 [1] : vector<16x16xf32> to vector<16xf32>
    %270 = vector.shape_cast %269 : vector<16xf32> to vector<16x1xf32>
    %271 = tpu.reciprocal %270 {approx = true} : vector<16x1xf32> -> vector<16x1xf32>
    %272 = vector.broadcast %271 : vector<16x1xf32> to vector<16x16xf32>
    %273 = arith.mulf %268, %272 : vector<16x16xf32>
    %cst_81 = arith.constant dense<0.000000e+00> : vector<16x8xf32>
    %274 = tpu.matmul %273, %261, %cst_81 {dimension_numbers = #tpu.dot_dimension_numbers<[1], [0], [0], [1], [0, 0, 1, 1], [], []>} : vector<16x16xf32>, vector<16x8xf32>, vector<16x8xf32> -> vector<16x8xf32>
    %275 = tpu.concatenate %226, %242, %258, %274 in 1 : vector<16x8xf32>, vector<16x8xf32>, vector<16x8xf32>, vector<16x8xf32> -> vector<16x32xf32>
    %c1_82 = arith.constant 1 : index
    %c0_83 = arith.constant 0 : index
    %c0_84 = arith.constant 0 : index
    %276 = vector.load %arg4[%c1_82, %c0_83, %c0_84] : memref<2x32x32xf32, #tpu.memory_space<vmem>>, vector<1x32x32xf32>
    %277 = vector.shape_cast %276 : vector<1x32x32xf32> to vector<32x32xf32>
    %cst_85 = arith.constant dense<0.000000e+00> : vector<16x32xf32>
    %278 = tpu.matmul %275, %277, %cst_85 {dimension_numbers = #tpu.dot_dimension_numbers<[1], [0], [0], [1], [0, 0, 1, 1], [], []>} : vector<16x32xf32>, vector<32x32xf32>, vector<16x32xf32> -> vector<16x32xf32>
    %279 = vector.broadcast %179 : vector<1x32xf32> to vector<16x32xf32>
    %280 = arith.addf %278, %279 : vector<16x32xf32>
    %281 = arith.addf %175, %280 : vector<16x32xf32>
    %cst_86 = arith.constant dense<0.000000e+00> : vector<16xf32>
    %282 = vector.multi_reduction <add>, %281, %cst_86 [1] : vector<16x32xf32> to vector<16xf32>
    %283 = vector.shape_cast %282 : vector<16xf32> to vector<16x1xf32>
    %cst_87 = arith.constant 3.200000e+01 : f32
    %284 = vector.broadcast %cst_87 : f32 to vector<16x1xf32>
    %285 = arith.divf %283, %284 : vector<16x1xf32>
    %286 = vector.broadcast %285 : vector<16x1xf32> to vector<16x32xf32>
    %287 = arith.subf %281, %286 : vector<16x32xf32>
    %288 = arith.mulf %287, %287 : vector<16x32xf32>
    %cst_88 = arith.constant dense<0.000000e+00> : vector<16xf32>
    %289 = vector.multi_reduction <add>, %288, %cst_88 [1] : vector<16x32xf32> to vector<16xf32>
    %290 = vector.shape_cast %289 : vector<16xf32> to vector<16x1xf32>
    %cst_89 = arith.constant 3.200000e+01 : f32
    %291 = vector.broadcast %cst_89 : f32 to vector<16x1xf32>
    %292 = arith.divf %290, %291 : vector<16x1xf32>
    %293 = vector.broadcast %285 : vector<16x1xf32> to vector<16x32xf32>
    %294 = arith.subf %281, %293 : vector<16x32xf32>
    %cst_90 = arith.constant 9.99999974E-6 : f32
    %295 = vector.broadcast %cst_90 : f32 to vector<16x1xf32>
    %296 = arith.addf %292, %295 : vector<16x1xf32>
    %297 = math.rsqrt %296 : vector<16x1xf32>
    %298 = vector.broadcast %297 : vector<16x1xf32> to vector<16x32xf32>
    %299 = arith.mulf %294, %298 : vector<16x32xf32>
    %300 = vector.broadcast %180 : vector<1x32xf32> to vector<16x32xf32>
    %301 = arith.mulf %299, %300 : vector<16x32xf32>
    %302 = vector.broadcast %181 : vector<1x32xf32> to vector<16x32xf32>
    %303 = arith.addf %301, %302 : vector<16x32xf32>
    %c1_91 = arith.constant 1 : index
    %c0_92 = arith.constant 0 : index
    %c0_93 = arith.constant 0 : index
    %304 = vector.load %arg5[%c1_91, %c0_92, %c0_93] : memref<2x32x128xf32, #tpu.memory_space<vmem>>, vector<1x32x128xf32>
    %305 = vector.shape_cast %304 : vector<1x32x128xf32> to vector<32x128xf32>
    %cst_94 = arith.constant dense<0.000000e+00> : vector<16x128xf32>
    %306 = tpu.matmul %303, %305, %cst_94 {dimension_numbers = #tpu.dot_dimension_numbers<[1], [0], [0], [1], [0, 0, 1, 1], [], []>} : vector<16x32xf32>, vector<32x128xf32>, vector<16x128xf32> -> vector<16x128xf32>
    %307 = vector.broadcast %182 : vector<1x128xf32> to vector<16x128xf32>
    %308 = arith.addf %306, %307 : vector<16x128xf32>
    %cst_95 = arith.constant 1.702000e+00 : f32
    %309 = vector.broadcast %cst_95 : f32 to vector<16x128xf32>
    %310 = arith.mulf %309, %308 : vector<16x128xf32>
    %311 = arith.negf %310 : vector<16x128xf32>
    %312 = math.exp %311 : vector<16x128xf32>
    %cst_96 = arith.constant 1.000000e+00 : f32
    %313 = vector.broadcast %cst_96 : f32 to vector<16x128xf32>
    %314 = arith.addf %313, %312 : vector<16x128xf32>
    %315 = arith.divf %313, %314 : vector<16x128xf32>
    %316 = arith.mulf %308, %315 : vector<16x128xf32>
    %c1_97 = arith.constant 1 : index
    %c0_98 = arith.constant 0 : index
    %c0_99 = arith.constant 0 : index
    %317 = vector.load %arg6[%c1_97, %c0_98, %c0_99] : memref<2x128x32xf32, #tpu.memory_space<vmem>>, vector<1x128x32xf32>
    %318 = vector.shape_cast %317 : vector<1x128x32xf32> to vector<128x32xf32>
    %cst_100 = arith.constant dense<0.000000e+00> : vector<16x32xf32>
    %319 = tpu.matmul %316, %318, %cst_100 {dimension_numbers = #tpu.dot_dimension_numbers<[1], [0], [0], [1], [0, 0, 1, 1], [], []>} : vector<16x128xf32>, vector<128x32xf32>, vector<16x32xf32> -> vector<16x32xf32>
    %320 = vector.broadcast %183 : vector<1x32xf32> to vector<16x32xf32>
    %321 = arith.addf %319, %320 : vector<16x32xf32>
    %322 = arith.addf %281, %321 : vector<16x32xf32>
    %c16 = arith.constant 16 : index
    %c0_101 = arith.constant 0 : index
    %323 = vector.load %arg1[%c16, %c0_101] : memref<18x1xi32, #tpu.memory_space<vmem>>, vector<2x1xi32>
    %324 = tpu.iota {dimensions = array<i32: 1>} : vector<2x16xi32>
    %325 = vector.broadcast %323 : vector<2x1xi32> to vector<2x16xi32>
    %326 = arith.cmpi eq, %325, %324 : vector<2x16xi32>
    %327 = arith.extui %326 : vector<2x16xi1> to vector<2x16xi32>
    %328 = arith.sitofp %327 : vector<2x16xi32> to vector<2x16xf32>
    %cst_102 = arith.constant dense<0.000000e+00> : vector<2x32xf32>
    %329 = tpu.matmul %328, %322, %cst_102 {dimension_numbers = #tpu.dot_dimension_numbers<[1], [0], [0], [1], [0, 0, 1, 1], [], []>} : vector<2x16xf32>, vector<16x32xf32>, vector<2x32xf32> -> vector<2x32xf32>
    %cst_103 = arith.constant dense<0.000000e+00> : vector<2xf32>
    %330 = vector.multi_reduction <add>, %329, %cst_103 [1] : vector<2x32xf32> to vector<2xf32>
    %331 = vector.shape_cast %330 : vector<2xf32> to vector<2x1xf32>
    %cst_104 = arith.constant 3.200000e+01 : f32
    %332 = vector.broadcast %cst_104 : f32 to vector<2x1xf32>
    %333 = arith.divf %331, %332 : vector<2x1xf32>
    %334 = vector.broadcast %333 : vector<2x1xf32> to vector<2x32xf32>
    %335 = arith.subf %329, %334 : vector<2x32xf32>
    %336 = arith.mulf %335, %335 : vector<2x32xf32>
    %cst_105 = arith.constant dense<0.000000e+00> : vector<2xf32>
    %337 = vector.multi_reduction <add>, %336, %cst_105 [1] : vector<2x32xf32> to vector<2xf32>
    %338 = vector.shape_cast %337 : vector<2xf32> to vector<2x1xf32>
    %cst_106 = arith.constant 3.200000e+01 : f32
    %339 = vector.broadcast %cst_106 : f32 to vector<2x1xf32>
    %340 = arith.divf %338, %339 : vector<2x1xf32>
    %341 = vector.broadcast %333 : vector<2x1xf32> to vector<2x32xf32>
    %342 = arith.subf %329, %341 : vector<2x32xf32>
    %cst_107 = arith.constant 9.99999974E-6 : f32
    %343 = vector.broadcast %cst_107 : f32 to vector<2x1xf32>
    %344 = arith.addf %340, %343 : vector<2x1xf32>
    %345 = math.rsqrt %344 : vector<2x1xf32>
    %346 = vector.broadcast %345 : vector<2x1xf32> to vector<2x32xf32>
    %347 = arith.mulf %342, %346 : vector<2x32xf32>
    %348 = vector.extract_strided_slice %0 {offsets = [17, 0], sizes = [1, 32], strides = [1, 1]} : vector<18x128xf32> to vector<1x32xf32>
    %c0_108 = arith.constant 0 : index
    %c0_109 = arith.constant 0 : index
    %349 = vector.load %arg8[%c0_108, %c0_109] : memref<32x32xf32, #tpu.memory_space<vmem>>, vector<32x32xf32>
    %cst_110 = arith.constant dense<0.000000e+00> : vector<2x32xf32>
    %350 = tpu.matmul %347, %349, %cst_110 {dimension_numbers = #tpu.dot_dimension_numbers<[1], [0], [0], [1], [0, 0, 1, 1], [], []>} : vector<2x32xf32>, vector<32x32xf32>, vector<2x32xf32> -> vector<2x32xf32>
    %351 = vector.broadcast %348 : vector<1x32xf32> to vector<2x32xf32>
    %352 = arith.addf %350, %351 : vector<2x32xf32>
    %353 = arith.mulf %6, %6 : vector<2x32xf32>
    %cst_111 = arith.constant dense<0.000000e+00> : vector<2xf32>
    %354 = vector.multi_reduction <add>, %353, %cst_111 [1] : vector<2x32xf32> to vector<2xf32>
    %355 = vector.shape_cast %354 : vector<2xf32> to vector<2x1xf32>
    %356 = math.rsqrt %355 : vector<2x1xf32>
    %357 = vector.broadcast %356 : vector<2x1xf32> to vector<2x32xf32>
    %358 = arith.mulf %6, %357 : vector<2x32xf32>
    %359 = arith.mulf %352, %352 : vector<2x32xf32>
    %cst_112 = arith.constant dense<0.000000e+00> : vector<2xf32>
    %360 = vector.multi_reduction <add>, %359, %cst_112 [1] : vector<2x32xf32> to vector<2xf32>
    %361 = vector.shape_cast %360 : vector<2xf32> to vector<2x1xf32>
    %362 = math.rsqrt %361 : vector<2x1xf32>
    %363 = vector.broadcast %362 : vector<2x1xf32> to vector<2x32xf32>
    %364 = arith.mulf %352, %363 : vector<2x32xf32>
    %c0_113 = arith.constant 0 : index
    %c0_114 = arith.constant 0 : index
    %365 = memref.load %arg10[%c0_113, %c0_114] : memref<1x1xf32, #tpu.memory_space<smem>>
    %cst_115 = arith.constant dense<0.000000e+00> : vector<2x2xf32>
    %366 = tpu.matmul %358, %364, %cst_115 {dimension_numbers = #tpu.dot_dimension_numbers<[1], [1], [0], [0], [0, 0, 1, 0], [], []>} : vector<2x32xf32>, vector<2x32xf32>, vector<2x2xf32> -> vector<2x2xf32>
    %367 = vector.broadcast %365 : f32 to vector<2x2xf32>
    %368 = arith.mulf %367, %366 : vector<2x2xf32>
    %c0_116 = arith.constant 0 : index
    %c0_117 = arith.constant 0 : index
    %369 = vector.load %arg11[%c0_116, %c0_117] : memref<2x2xf32, #tpu.memory_space<vmem>>, vector<2x2xf32>
    tpu.vector_store %arg11[%c0_116, %c0_117], %368 {strides = array<i32>} : memref<2x2xf32, #tpu.memory_space<vmem>>, vector<2x2xf32>,
    return
  }
}

</mosaic_0001>

<llo_original>
// kernel: slip_forward.1
$region0: #{slip_forward.1}
  #allocation0 [shape = 'u32[]', space=smem, size = 0x4, offset = 0x4, fixed_abs, tag = 'smem constant byte address 0x4 - core index']
  #allocation1 [shape = 'u32[144,128]{1,0:T(1,128)}', space=vmem, size = 0x12000, scoped, tag = 'internal scratch']
  #allocation2 [shape = 'f32[1,1]{1,0:T(1,128)S(6)}', space=smem, size = 0x200, scoped, tag = 'scoped memory for slip_forward.1']
  %s0 = inlined_call_operand.vmem [shape: bf16[2,1024], index: 0, kind: input, shape index: {}]
  %s1 = inlined_call_operand.vmem [shape: s32[18,1], index: 1, kind: input, shape index: {}]
  %s2 = inlined_call_operand.vmem [shape: f32[80,32], index: 2, kind: input, shape index: {}]
  %s3 = inlined_call_operand.vmem [shape: f32[2,32,96], index: 3, kind: input, shape index: {}]
  %s4 = inlined_call_operand.vmem [shape: f32[2,32,32], index: 4, kind: input, shape index: {}]
  %s5 = inlined_call_operand.vmem [shape: f32[2,32,128], index: 5, kind: input, shape index: {}]
  %s6 = inlined_call_operand.vmem [shape: f32[2,128,32], index: 6, kind: input, shape index: {}]
  %s7 = inlined_call_operand.vmem [shape: bf16[1024,32], index: 7, kind: input, shape index: {}]
  %s8 = inlined_call_operand.vmem [shape: f32[32,32], index: 8, kind: input, shape index: {}]
  %s9 = inlined_call_operand.vmem [shape: f32[18,128], index: 9, kind: input, shape index: {}]
  %s10 = inlined_call_operand.<no memory space> [shape: f32[1,1], index: 10, kind: input, shape index: {}]
  %s11 = inlined_call_operand.vmem [shape: f32[2,2], index: 11, kind: output, shape index: {}]
  %s12 = sld [smem:[#allocation0]]
  $region54: #{slip_forward.1} parent=0
    _
  %s14 = ssub.s32 1, %s12
  %s15 = scalar_select 0, %s14, %s12
  %16 = sst [smem:[#allocation2]] %s10
  // Predicated region
  $region2: #{slip_forward.1} parent=0 // pred_check
    _
  $region3: #{slip_forward.1} parent=0 // pred_check_branch
    %18 = sbr.rel (0) target = $region5
  $region4: #{slip_forward.1} parent=0 // pred_region
    _
  $region5: #{slip_forward.1} parent=0 // pred_fallthru
    _
  // Predicated region
  $region6: #{slip_forward.1} parent=0 // pred_check
    _
  $region7: #{slip_forward.1} parent=0 // pred_check_branch
    %20 = sbr.rel (0) target = $region9
  $region8: #{slip_forward.1} parent=0 // pred_region
    _
  $region9: #{slip_forward.1} parent=0 // pred_fallthru
    _
  // Predicated region
  $region10: #{slip_forward.1} parent=0 // pred_check
    _
  $region11: #{slip_forward.1} parent=0 // pred_check_branch
    %22 = sbr.rel (0) target = $region13
  $region12: #{slip_forward.1} parent=0 // pred_region
    _
  $region13: #{slip_forward.1} parent=0 // pred_fallthru
    _
  // Predicated region
  $region14: #{slip_forward.1} parent=0 // pred_check
    _
  $region15: #{slip_forward.1} parent=0 // pred_check_branch
    %24 = sbr.rel (0) target = $region17
  $region16: #{slip_forward.1} parent=0 // pred_region
    _
  $region17: #{slip_forward.1} parent=0 // pred_fallthru
    _
  // Predicated region
  $region18: #{slip_forward.1} parent=0 // pred_check
    _
  $region19: #{slip_forward.1} parent=0 // pred_check_branch
    %26 = sbr.rel (0) target = $region21
  $region20: #{slip_forward.1} parent=0 // pred_region
    _
  $region21: #{slip_forward.1} parent=0 // pred_fallthru
    _
  // Predicated region
  $region22: #{slip_forward.1} parent=0 // pred_check
    _
  $region23: #{slip_forward.1} parent=0 // pred_check_branch
    %28 = sbr.rel (0) target = $region25
  $region24: #{slip_forward.1} parent=0 // pred_region
    _
  $region25: #{slip_forward.1} parent=0 // pred_fallthru
    _
  // Predicated region
  $region26: #{slip_forward.1} parent=0 // pred_check
    _
  $region27: #{slip_forward.1} parent=0 // pred_check_branch
    %30 = sbr.rel (0) target = $region29
  $region28: #{slip_forward.1} parent=0 // pred_region
    _
  $region29: #{slip_forward.1} parent=0 // pred_fallthru
    _
  // Predicated region
  $region30: #{slip_forward.1} parent=0 // pred_check
    _
  $region31: #{slip_forward.1} parent=0 // pred_check_branch
    %32 = sbr.rel (0) target = $region33
  $region32: #{slip_forward.1} parent=0 // pred_region
    _
  $region33: #{slip_forward.1} parent=0 // pred_fallthru
    _
  // Predicated region
  $region34: #{slip_forward.1} parent=0 // pred_check
    _
  $region35: #{slip_forward.1} parent=0 // pred_check_branch
    %34 = sbr.rel (0) target = $region37
  $region36: #{slip_forward.1} parent=0 // pred_region
    _
  $region37: #{slip_forward.1} parent=0 // pred_fallthru
    _
  // Predicated region
  $region38: #{slip_forward.1} parent=0 // pred_check
    _
  $region39: #{slip_forward.1} parent=0 // pred_check_branch
    %36 = sbr.rel (0) target = $region41
  $region40: #{slip_forward.1} parent=0 // pred_region
    _
  $region41: #{slip_forward.1} parent=0 // pred_fallthru
    _
  // Predicated region
  $region42: #{slip_forward.1} parent=0 // pred_check
    _
  $region43: #{slip_forward.1} parent=0 // pred_check_branch
    %38 = sbr.rel (0) target = $region45
  $region44: #{slip_forward.1} parent=0 // pred_region
    _
  $region45: #{slip_forward.1} parent=0 // pred_fallthru
    _
  %v40 = vld [vmem:[%s9] sm:$0xff]
  %v41 = vld [vmem:[%s9 + $0x8] sm:$0xff]
  %v42 = vld [vmem:[%s9 + $0x10] sm:$0x3]
  %v43 = vld [vmem:[%s0] sm:$0xff]
  %v44 = vld [vmem:[%s7] sm:$0xf]
  %v45 = vld [vmem:[%s7 + $0x4] sm:$0xf]
  %v46 = vld [vmem:[%s7 + $0x8] sm:$0xf]
  %v47 = vld [vmem:[%s7 + $0xc] sm:$0xf]
  %v48 = vld [vmem:[%s7 + $0x10] sm:$0xf]
  %v49 = vld [vmem:[%s7 + $0x14] sm:$0xf]
  %v50 = vld [vmem:[%s7 + $0x18] sm:$0xf]
  %v51 = vld [vmem:[%s7 + $0x1c] sm:$0xf]
  %v52 = vld [vmem:[%s7 + $0x20] sm:$0xf]
  %v53 = vld [vmem:[%s7 + $0x24] sm:$0xf]
  %v54 = vld [vmem:[%s7 + $0x28] sm:$0xf]
  %v55 = vld [vmem:[%s7 + $0x2c] sm:$0xf]
  %v56 = vld [vmem:[%s7 + $0x30] sm:$0xf]
  %v57 = vld [vmem:[%s7 + $0x34] sm:$0xf]
  %v58 = vld [vmem:[%s7 + $0x38] sm:$0xf]
  %v59 = vld [vmem:[%s7 + $0x3c] sm:$0xf]
  %v60 = vld [vmem:[%s7 + $0x40] sm:$0xf]
  %v61 = vld [vmem:[%s7 + $0x44] sm:$0xf]
  %v62 = vld [vmem:[%s7 + $0x48] sm:$0xf]
  %v63 = vld [vmem:[%s7 + $0x4c] sm:$0xf]
  %v64 = vld [vmem:[%s7 + $0x50] sm:$0xf]
  %v65 = vld [vmem:[%s7 + $0x54] sm:$0xf]
  %v66 = vld [vmem:[%s7 + $0x58] sm:$0xf]
  %v67 = vld [vmem:[%s7 + $0x5c] sm:$0xf]
  %v68 = vld [vmem:[%s7 + $0x60] sm:$0xf]
  %v69 = vld [vmem:[%s7 + $0x64] sm:$0xf]
  %v70 = vld [vmem:[%s7 + $0x68] sm:$0xf]
  %v71 = vld [vmem:[%s7 + $0x6c] sm:$0xf]
  %v72 = vld [vmem:[%s7 + $0x70] sm:$0xf]
  %v73 = vld [vmem:[%s7 + $0x74] sm:$0xf]
  %v74 = vld [vmem:[%s7 + $0x78] sm:$0xf]
  %v75 = vld [vmem:[%s7 + $0x7c] sm:$0xf]
  %v76 = vld [vmem:[%s7 + $0x80] sm:$0xf]
  %v77 = vld [vmem:[%s7 + $0x84] sm:$0xf]
  %v78 = vld [vmem:[%s7 + $0x88] sm:$0xf]
  %v79 = vld [vmem:[%s7 + $0x8c] sm:$0xf]
  %v80 = vld [vmem:[%s7 + $0x90] sm:$0xf]
  %v81 = vld [vmem:[%s7 + $0x94] sm:$0xf]
  %v82 = vld [vmem:[%s7 + $0x98] sm:$0xf]
  %v83 = vld [vmem:[%s7 + $0x9c] sm:$0xf]
  %v84 = vld [vmem:[%s7 + $0xa0] sm:$0xf]
  %v85 = vld [vmem:[%s7 + $0xa4] sm:$0xf]
  %v86 = vld [vmem:[%s7 + $0xa8] sm:$0xf]
  %v87 = vld [vmem:[%s7 + $0xac] sm:$0xf]
  %v88 = vld [vmem:[%s7 + $0xb0] sm:$0xf]
  %v89 = vld [vmem:[%s7 + $0xb4] sm:$0xf]
  %v90 = vld [vmem:[%s7 + $0xb8] sm:$0xf]
  %v91 = vld [vmem:[%s7 + $0xbc] sm:$0xf]
  %v92 = vld [vmem:[%s7 + $0xc0] sm:$0xf]
  %v93 = vld [vmem:[%s7 + $0xc4] sm:$0xf]
  %v94 = vld [vmem:[%s7 + $0xc8] sm:$0xf]
  %v95 = vld [vmem:[%s7 + $0xcc] sm:$0xf]
  %v96 = vld [vmem:[%s7 + $0xd0] sm:$0xf]
  %v97 = vld [vmem:[%s7 + $0xd4] sm:$0xf]
  %v98 = vld [vmem:[%s7 + $0xd8] sm:$0xf]
  %v99 = vld [vmem:[%s7 + $0xdc] sm:$0xf]
  %v100 = vld [vmem:[%s7 + $0xe0] sm:$0xf]
  %v101 = vld [vmem:[%s7 + $0xe4] sm:$0xf]
  %v102 = vld [vmem:[%s7 + $0xe8] sm:$0xf]
  %v103 = vld [vmem:[%s7 + $0xec] sm:$0xf]
  %v104 = vld [vmem:[%s7 + $0xf0] sm:$0xf]
  %v105 = vld [vmem:[%s7 + $0xf4] sm:$0xf]
  %v106 = vld [vmem:[%s7 + $0xf8] sm:$0xf]
  %v107 = vld [vmem:[%s7 + $0xfc] sm:$0xf]
  %v108 = vld [vmem:[%s7 + $0x100] sm:$0xf]
  %v109 = vld [vmem:[%s7 + $0x104] sm:$0xf]
  %v110 = vld [vmem:[%s7 + $0x108] sm:$0xf]
  %v111 = vld [vmem:[%s7 + $0x10c] sm:$0xf]
  %v112 = vld [vmem:[%s7 + $0x110] sm:$0xf]
  %v113 = vld [vmem:[%s7 + $0x114] sm:$0xf]
  %v114 = vld [vmem:[%s7 + $0x118] sm:$0xf]
  %v115 = vld [vmem:[%s7 + $0x11c] sm:$0xf]
  %v116 = vld [vmem:[%s7 + $0x120] sm:$0xf]
  %v117 = vld [vmem:[%s7 + $0x124] sm:$0xf]
  %v118 = vld [vmem:[%s7 + $0x128] sm:$0xf]
  %v119 = vld [vmem:[%s7 + $0x12c] sm:$0xf]
  %v120 = vld [vmem:[%s7 + $0x130] sm:$0xf]
  %v121 = vld [vmem:[%s7 + $0x134] sm:$0xf]
  %v122 = vld [vmem:[%s7 + $0x138] sm:$0xf]
  %v123 = vld [vmem:[%s7 + $0x13c] sm:$0xf]
  %v124 = vld [vmem:[%s7 + $0x140] sm:$0xf]
  %v125 = vld [vmem:[%s7 + $0x144] sm:$0xf]
  %v126 = vld [vmem:[%s7 + $0x148] sm:$0xf]
  %v127 = vld [vmem:[%s7 + $0x14c] sm:$0xf]
  %v128 = vld [vmem:[%s7 + $0x150] sm:$0xf]
  %v129 = vld [vmem:[%s7 + $0x154] sm:$0xf]
  %v130 = vld [vmem:[%s7 + $0x158] sm:$0xf]
  %v131 = vld [vmem:[%s7 + $0x15c] sm:$0xf]
  %v132 = vld [vmem:[%s7 + $0x160] sm:$0xf]
  %v133 = vld [vmem:[%s7 + $0x164] sm:$0xf]
  %v134 = vld [vmem:[%s7 + $0x168] sm:$0xf]
  %v135 = vld [vmem:[%s7 + $0x16c] sm:$0xf]
  %v136 = vld [vmem:[%s7 + $0x170] sm:$0xf]
  %v137 = vld [vmem:[%s7 + $0x174] sm:$0xf]
  %v138 = vld [vmem:[%s7 + $0x178] sm:$0xf]
  %v139 = vld [vmem:[%s7 + $0x17c] sm:$0xf]
  %v140 = vld [vmem:[%s7 + $0x180] sm:$0xf]
  %v141 = vld [vmem:[%s7 + $0x184] sm:$0xf]
  %v142 = vld [vmem:[%s7 + $0x188] sm:$0xf]
  %v143 = vld [vmem:[%s7 + $0x18c] sm:$0xf]
  %v144 = vld [vmem:[%s7 + $0x190] sm:$0xf]
  %v145 = vld [vmem:[%s7 + $0x194] sm:$0xf]
  %v146 = vld [vmem:[%s7 + $0x198] sm:$0xf]
  %v147 = vld [vmem:[%s7 + $0x19c] sm:$0xf]
  %v148 = vld [vmem:[%s7 + $0x1a0] sm:$0xf]
  %v149 = vld [vmem:[%s7 + $0x1a4] sm:$0xf]
  %v150 = vld [vmem:[%s7 + $0x1a8] sm:$0xf]
  %v151 = vld [vmem:[%s7 + $0x1ac] sm:$0xf]
  %v152 = vld [vmem:[%s7 + $0x1b0] sm:$0xf]
  %v153 = vld [vmem:[%s7 + $0x1b4] sm:$0xf]
  %v154 = vld [vmem:[%s7 + $0x1b8] sm:$0xf]
  %v155 = vld [vmem:[%s7 + $0x1bc] sm:$0xf]
  %v156 = vld [vmem:[%s7 + $0x1c0] sm:$0xf]
  %v157 = vld [vmem:[%s7 + $0x1c4] sm:$0xf]
  %v158 = vld [vmem:[%s7 + $0x1c8] sm:$0xf]
  %v159 = vld [vmem:[%s7 + $0x1cc] sm:$0xf]
  %v160 = vld [vmem:[%s7 + $0x1d0] sm:$0xf]
  %v161 = vld [vmem:[%s7 + $0x1d4] sm:$0xf]
  %v162 = vld [vmem:[%s7 + $0x1d8] sm:$0xf]
  %v163 = vld [vmem:[%s7 + $0x1dc] sm:$0xf]
  %v164 = vld [vmem:[%s7 + $0x1e0] sm:$0xf]
  %v165 = vld [vmem:[%s7 + $0x1e4] sm:$0xf]
  %v166 = vld [vmem:[%s7 + $0x1e8] sm:$0xf]
  %v167 = vld [vmem:[%s7 + $0x1ec] sm:$0xf]
  %v168 = vld [vmem:[%s7 + $0x1f0] sm:$0xf]
  %v169 = vld [vmem:[%s7 + $0x1f4] sm:$0xf]
  %v170 = vld [vmem:[%s7 + $0x1f8] sm:$0xf]
  %v171 = vld [vmem:[%s7 + $0x1fc] sm:$0xf]
  %v172 = vlaneseq
  %v173 = vshrl.u32 %v172, 7
  %v174 = vsub.s32 0, %v173
  %v175 = vrot.slane %v42, %v174
  %v177 = vcombine.high %v43, %v43
  %v179 = vunpack.c.l.s4 1966171168
  %v180 = vunpack.c.0.s8 %v179
  %v181 = vlaneseq
  %v182 = vshrl.u32 %v181, 7
  %v183 = vsub.s32 %v180, %v182
  %v184 = vrot.slane %v43, %v183
  %v186 = vunpack.c.l.s4 1966171168
  %v187 = vunpack.c.0.s8 %v186
  %v188 = vlaneseq
  %v189 = vshrl.u32 %v188, 7
  %v190 = vsub.s32 %v187, %v189
  %v191 = vrot.slane %v177, %v190
  %v192 = vcombine.high %v184, %v184
  %v193 = vcombine.high %v191, %v191
  %v195 = vunpack.c.l.s4 1966171168
  %v196 = vunpack.c.0.s8 %v195
  %v197 = vlaneseq
  %v198 = vshrl.u32 %v197, 7
  %v199 = vsub.s32 %v196, %v198
  %v200 = vrot.slane %v184, %v199
  %v202 = vunpack.c.l.s4 1966171168
  %v203 = vunpack.c.0.s8 %v202
  %v204 = vlaneseq
  %v205 = vshrl.u32 %v204, 7
  %v206 = vsub.s32 %v203, %v205
  %v207 = vrot.slane %v191, %v206
  %v209 = vunpack.c.l.s4 1966171168
  %v210 = vunpack.c.0.s8 %v209
  %v211 = vlaneseq
  %v212 = vshrl.u32 %v211, 7
  %v213 = vsub.s32 %v210, %v212
  %v214 = vrot.slane %v192, %v213
  %v216 = vunpack.c.l.s4 1966171168
  %v217 = vunpack.c.0.s8 %v216
  %v218 = vlaneseq
  %v219 = vshrl.u32 %v218, 7
  %v220 = vsub.s32 %v217, %v219
  %v221 = vrot.slane %v193, %v220
  %v222 = vcombine.high %v200, %v200
  %v223 = vcombine.high %v207, %v207
  %v224 = vcombine.high %v214, %v214
  %v225 = vcombine.high %v221, %v221
  %v362 = vunpack.c.l.b16 %v44
  %v363 = vunpack.c.l.b16 %v45
  %v364 = vunpack.c.l.b16 %v46
  %v365 = vunpack.c.l.b16 %v47
  %v366 = vunpack.c.l.b16 %v48
  %v367 = vunpack.c.l.b16 %v49
  %v368 = vunpack.c.l.b16 %v50
  %v369 = vunpack.c.l.b16 %v51
  %v370 = vunpack.c.l.b16 %v52
  %v371 = vunpack.c.l.b16 %v53
  %v372 = vunpack.c.l.b16 %v54
  %v373 = vunpack.c.l.b16 %v55
  %v374 = vunpack.c.l.b16 %v56
  %v375 = vunpack.c.l.b16 %v57
  %v376 = vunpack.c.l.b16 %v58
  %v377 = vunpack.c.l.b16 %v59
  %v378 = vunpack.c.l.b16 %v60
  %v379 = vunpack.c.l.b16 %v61
  %v380 = vunpack.c.l.b16 %v62
  %v381 = vunpack.c.l.b16 %v63
  %v382 = vunpack.c.l.b16 %v64
  %v383 = vunpack.c.l.b16 %v65
  %v384 = vunpack.c.l.b16 %v66
  %v385 = vunpack.c.l.b16 %v67
  %v386 = vunpack.c.l.b16 %v68
  %v387 = vunpack.c.l.b16 %v69
  %v388 = vunpack.c.l.b16 %v70
  %v389 = vunpack.c.l.b16 %v71
  %v390 = vunpack.c.l.b16 %v72
  %v391 = vunpack.c.l.b16 %v73
  %v392 = vunpack.c.l.b16 %v74
  %v393 = vunpack.c.l.b16 %v75
  %v394 = vunpack.c.l.b16 %v76
  %v395 = vunpack.c.l.b16 %v77
  %v396 = vunpack.c.l.b16 %v78
  %v397 = vunpack.c.l.b16 %v79
  %v398 = vunpack.c.l.b16 %v80
  %v399 = vunpack.c.l.b16 %v81
  %v400 = vunpack.c.l.b16 %v82
  %v401 = vunpack.c.l.b16 %v83
  %v402 = vunpack.c.l.b16 %v84
  %v403 = vunpack.c.l.b16 %v85
  %v404 = vunpack.c.l.b16 %v86
  %v405 = vunpack.c.l.b16 %v87
  %v406 = vunpack.c.l.b16 %v88
  %v407 = vunpack.c.l.b16 %v89
  %v408 = vunpack.c.l.b16 %v90
  %v409 = vunpack.c.l.b16 %v91
  %v410 = vunpack.c.l.b16 %v92
  %v411 = vunpack.c.l.b16 %v93
  %v412 = vunpack.c.l.b16 %v94
  %v413 = vunpack.c.l.b16 %v95
  %v414 = vunpack.c.l.b16 %v96
  %v415 = vunpack.c.l.b16 %v97
  %v416 = vunpack.c.l.b16 %v98
  %v417 = vunpack.c.l.b16 %v99
  %v418 = vunpack.c.l.b16 %v100
  %v419 = vunpack.c.l.b16 %v101
  %v420 = vunpack.c.l.b16 %v102
  %v421 = vunpack.c.l.b16 %v103
  %v422 = vunpack.c.l.b16 %v104
  %v423 = vunpack.c.l.b16 %v105
  %v424 = vunpack.c.l.b16 %v106
  %v425 = vunpack.c.l.b16 %v107
  %v426 = vunpack.c.l.b16 %v108
  %v427 = vunpack.c.l.b16 %v109
  %v428 = vunpack.c.l.b16 %v110
  %v429 = vunpack.c.l.b16 %v111
  %v430 = vunpack.c.l.b16 %v112
  %v431 = vunpack.c.l.b16 %v113
  %v432 = vunpack.c.l.b16 %v114
  %v433 = vunpack.c.l.b16 %v115
  %v434 = vunpack.c.l.b16 %v116
  %v435 = vunpack.c.l.b16 %v117
  %v436 = vunpack.c.l.b16 %v118
  %v437 = vunpack.c.l.b16 %v119
  %v438 = vunpack.c.l.b16 %v120
  %v439 = vunpack.c.l.b16 %v121
  %v440 = vunpack.c.l.b16 %v122
  %v441 = vunpack.c.l.b16 %v123
  %v442 = vunpack.c.l.b16 %v124
  %v443 = vunpack.c.l.b16 %v125
  %v444 = vunpack.c.l.b16 %v126
  %v445 = vunpack.c.l.b16 %v127
  %v446 = vunpack.c.l.b16 %v128
  %v447 = vunpack.c.l.b16 %v129
  %v448 = vunpack.c.l.b16 %v130
  %v449 = vunpack.c.l.b16 %v131
  %v450 = vunpack.c.l.b16 %v132
  %v451 = vunpack.c.l.b16 %v133
  %v452 = vunpack.c.l.b16 %v134
  %v453 = vunpack.c.l.b16 %v135
  %v454 = vunpack.c.l.b16 %v136
  %v455 = vunpack.c.l.b16 %v137
  %v456 = vunpack.c.l.b16 %v138
  %v457 = vunpack.c.l.b16 %v139
  %v458 = vunpack.c.l.b16 %v140
  %v459 = vunpack.c.l.b16 %v141
  %v460 = vunpack.c.l.b16 %v142
  %v461 = vunpack.c.l.b16 %v143
  %v462 = vunpack.c.l.b16 %v144
  %v463 = vunpack.c.l.b16 %v145
  %v464 = vunpack.c.l.b16 %v146
  %v465 = vunpack.c.l.b16 %v147
  %v466 = vunpack.c.l.b16 %v148
  %v467 = vunpack.c.l.b16 %v149
  %v468 = vunpack.c.l.b16 %v150
  %v469 = vunpack.c.l.b16 %v151
  %v470 = vunpack.c.l.b16 %v152
  %v471 = vunpack.c.l.b16 %v153
  %v472 = vunpack.c.l.b16 %v154
  %v473 = vunpack.c.l.b16 %v155
  %v474 = vunpack.c.l.b16 %v156
  %v475 = vunpack.c.l.b16 %v157
  %v476 = vunpack.c.l.b16 %v158
  %v477 = vunpack.c.l.b16 %v159
  %v478 = vunpack.c.l.b16 %v160
  %v479 = vunpack.c.l.b16 %v161
  %v480 = vunpack.c.l.b16 %v162
  %v481 = vunpack.c.l.b16 %v163
  %v482 = vunpack.c.l.b16 %v164
  %v483 = vunpack.c.l.b16 %v165
  %v484 = vunpack.c.l.b16 %v166
  %v485 = vunpack.c.l.b16 %v167
  %v486 = vunpack.c.l.b16 %v168
  %v487 = vunpack.c.l.b16 %v169
  %v488 = vunpack.c.l.b16 %v170
  %v489 = vunpack.c.l.b16 %v171
  %v490 = vpack.c.b16 %v363, %v362
  %v491 = vpack.c.b16 %v365, %v364
  %v492 = vpack.c.b16 %v367, %v366
  %v493 = vpack.c.b16 %v369, %v368
  %v494 = vpack.c.b16 %v371, %v370
  %v495 = vpack.c.b16 %v373, %v372
  %v496 = vpack.c.b16 %v375, %v374
  %v497 = vpack.c.b16 %v377, %v376
  %v498 = vpack.c.b16 %v379, %v378
  %v499 = vpack.c.b16 %v381, %v380
  %v500 = vpack.c.b16 %v383, %v382
  %v501 = vpack.c.b16 %v385, %v384
  %v502 = vpack.c.b16 %v387, %v386
  %v503 = vpack.c.b16 %v389, %v388
  %v504 = vpack.c.b16 %v391, %v390
  %v505 = vpack.c.b16 %v393, %v392
  %v506 = vpack.c.b16 %v395, %v394
  %v507 = vpack.c.b16 %v397, %v396
  %v508 = vpack.c.b16 %v399, %v398
  %v509 = vpack.c.b16 %v401, %v400
  %v510 = vpack.c.b16 %v403, %v402
  %v511 = vpack.c.b16 %v405, %v404
  %v512 = vpack.c.b16 %v407, %v406
  %v513 = vpack.c.b16 %v409, %v408
  %v514 = vpack.c.b16 %v411, %v410
  %v515 = vpack.c.b16 %v413, %v412
  %v516 = vpack.c.b16 %v415, %v414
  %v517 = vpack.c.b16 %v417, %v416
  %v518 = vpack.c.b16 %v419, %v418
  %v519 = vpack.c.b16 %v421, %v420
  %v520 = vpack.c.b16 %v423, %v422
  %v521 = vpack.c.b16 %v425, %v424
  %v522 = vpack.c.b16 %v427, %v426
  %v523 = vpack.c.b16 %v429, %v428
  %v524 = vpack.c.b16 %v431, %v430
  %v525 = vpack.c.b16 %v433, %v432
  %v526 = vpack.c.b16 %v435, %v434
  %v527 = vpack.c.b16 %v437, %v436
  %v528 = vpack.c.b16 %v439, %v438
  %v529 = vpack.c.b16 %v441, %v440
  %v530 = vpack.c.b16 %v443, %v442
  %v531 = vpack.c.b16 %v445, %v444
  %v532 = vpack.c.b16 %v447, %v446
  %v533 = vpack.c.b16 %v449, %v448
  %v534 = vpack.c.b16 %v451, %v450
  %v535 = vpack.c.b16 %v453, %v452
  %v536 = vpack.c.b16 %v455, %v454
  %v537 = vpack.c.b16 %v457, %v456
  %v538 = vpack.c.b16 %v459, %v458
  %v539 = vpack.c.b16 %v461, %v460
  %v540 = vpack.c.b16 %v463, %v462
  %v541 = vpack.c.b16 %v465, %v464
  %v542 = vpack.c.b16 %v467, %v466
  %v543 = vpack.c.b16 %v469, %v468
  %v544 = vpack.c.b16 %v471, %v470
  %v545 = vpack.c.b16 %v473, %v472
  %v546 = vpack.c.b16 %v475, %v474
  %v547 = vpack.c.b16 %v477, %v476
  %v548 = vpack.c.b16 %v479, %v478
  %v549 = vpack.c.b16 %v481, %v480
  %v550 = vpack.c.b16 %v483, %v482
  %v551 = vpack.c.b16 %v485, %v484
  %v552 = vpack.c.b16 %v487, %v486
  %v553 = vpack.c.b16 %v489, %v488
  %618 = vmatprep.subr.bf16.mxu0 0
  %619 = vmatpush1.bf16.msra.mxu0 %v490
  %620 = vmatprep.subr.bf16.mxu0 0
  %621 = vmatpush1.bf16.msra.mxu0 %v491
  %622 = vmatprep.subr.bf16.mxu0 0
  %623 = vmatpush1.bf16.msra.mxu0 %v492
  %624 = vmatprep.subr.bf16.mxu0 0
  %625 = vmatpush1.bf16.msra.mxu0 %v493
  %626 = vmatprep.subr.bf16.mxu0 0
  %627 = vmatpush1.bf16.msra.mxu0 %v494
  %628 = vmatprep.subr.bf16.mxu0 0
  %629 = vmatpush1.bf16.msra.mxu0 %v495
  %630 = vmatprep.subr.bf16.mxu0 0
  %631 = vmatpush1.bf16.msra.mxu0 %v496
  %632 = vmatprep.subr.bf16.mxu0 0
  %633 = vmatpush1.bf16.msra.mxu0 %v497
  %634 = vmatprep.subr.bf16.mxu0 0
  %635 = vmatpush1.bf16.msra.mxu0 %v498
  %636 = vmatprep.subr.bf16.mxu0 0
  %637 = vmatpush1.bf16.msra.mxu0 %v499
  %638 = vmatprep.subr.bf16.mxu0 0
  %639 = vmatpush1.bf16.msra.mxu0 %v500
  %640 = vmatprep.subr.bf16.mxu0 0
  %641 = vmatpush1.bf16.msra.mxu0 %v501
  %642 = vmatprep.subr.bf16.mxu0 0
  %643 = vmatpush1.bf16.msra.mxu0 %v502
  %644 = vmatprep.subr.bf16.mxu0 0
  %645 = vmatpush1.bf16.msra.mxu0 %v503
  %646 = vmatprep.subr.bf16.mxu0 0
  %647 = vmatpush1.bf16.msra.mxu0 %v504
  %648 = vmatprep.subr.bf16.mxu0 0
  %649 = vmatpush1.bf16.msra.mxu0 %v505
  %650 = vmatprep.mubr.bf16.mxu0 %v214
  %651 = vmatmul.mubr.bf16.gmra.mrb[0].mxu0 %v200
  %v652 = vpop.f32.mrb[0].mxu0
  %v653 = vadd.f32 %v175, %v652
  %v654 = vpop.f32.mrb[0].mxu0
  %v655 = vpop.f32.mrb[0].mxu0
  %v656 = vpop.f32.mrb[0].mxu0
  %657 = vdwg.mxu0
  %658 = vmatprep.subr.bf16.mxu0 0
  %659 = vmatpush1.bf16.msra.mxu0 %v506
  %660 = vmatprep.subr.bf16.mxu0 0
  %661 = vmatpush1.bf16.msra.mxu0 %v507
  %662 = vmatprep.subr.bf16.mxu0 0
  %663 = vmatpush1.bf16.msra.mxu0 %v508
  %664 = vmatprep.subr.bf16.mxu0 0
  %665 = vmatpush1.bf16.msra.mxu0 %v509
  %666 = vmatprep.subr.bf16.mxu0 0
  %667 = vmatpush1.bf16.msra.mxu0 %v510
  %668 = vmatprep.subr.bf16.mxu0 0
  %669 = vmatpush1.bf16.msra.mxu0 %v511
  %670 = vmatprep.subr.bf16.mxu0 0
  %671 = vmatpush1.bf16.msra.mxu0 %v512
  %672 = vmatprep.subr.bf16.mxu0 0
  %673 = vmatpush1.bf16.msra.mxu0 %v513
  %674 = vmatprep.subr.bf16.mxu0 0
  %675 = vmatpush1.bf16.msra.mxu0 %v514
  %676 = vmatprep.subr.bf16.mxu0 0
  %677 = vmatpush1.bf16.msra.mxu0 %v515
  %678 = vmatprep.subr.bf16.mxu0 0
  %679 = vmatpush1.bf16.msra.mxu0 %v516
  %680 = vmatprep.subr.bf16.mxu0 0
  %681 = vmatpush1.bf16.msra.mxu0 %v517
  %682 = vmatprep.subr.bf16.mxu0 0
  %683 = vmatpush1.bf16.msra.mxu0 %v518
  %684 = vmatprep.subr.bf16.mxu0 0
  %685 = vmatpush1.bf16.msra.mxu0 %v519
  %686 = vmatprep.subr.bf16.mxu0 0
  %687 = vmatpush1.bf16.msra.mxu0 %v520
  %688 = vmatprep.subr.bf16.mxu0 0
  %689 = vmatpush1.bf16.msra.mxu0 %v521
  %690 = vmatprep.mubr.bf16.mxu0 %v224
  %691 = vmatmul.mubr.bf16.gmra.mrb[0].mxu0 %v222
  %v692 = vpop.f32.mrb[0].mxu0
  %v693 = vadd.f32 %v653, %v692
  %v694 = vpop.f32.mrb[0].mxu0
  %v695 = vpop.f32.mrb[0].mxu0
  %v696 = vpop.f32.mrb[0].mxu0
  %697 = vdwg.mxu0
  %698 = vmatprep.subr.bf16.mxu0 0
  %699 = vmatpush1.bf16.msra.mxu0 %v522
  %700 = vmatprep.subr.bf16.mxu0 0
  %701 = vmatpush1.bf16.msra.mxu0 %v523
  %702 = vmatprep.subr.bf16.mxu0 0
  %703 = vmatpush1.bf16.msra.mxu0 %v524
  %704 = vmatprep.subr.bf16.mxu0 0
  %705 = vmatpush1.bf16.msra.mxu0 %v525
  %706 = vmatprep.subr.bf16.mxu0 0
  %707 = vmatpush1.bf16.msra.mxu0 %v526
  %708 = vmatprep.subr.bf16.mxu0 0
  %709 = vmatpush1.bf16.msra.mxu0 %v527
  %710 = vmatprep.subr.bf16.mxu0 0
  %711 = vmatpush1.bf16.msra.mxu0 %v528
  %712 = vmatprep.subr.bf16.mxu0 0
  %713 = vmatpush1.bf16.msra.mxu0 %v529
  %714 = vmatprep.subr.bf16.mxu0 0
  %715 = vmatpush1.bf16.msra.mxu0 %v530
  %716 = vmatprep.subr.bf16.mxu0 0
  %717 = vmatpush1.bf16.msra.mxu0 %v531
  %718 = vmatprep.subr.bf16.mxu0 0
  %719 = vmatpush1.bf16.msra.mxu0 %v532
  %720 = vmatprep.subr.bf16.mxu0 0
  %721 = vmatpush1.bf16.msra.mxu0 %v533
  %722 = vmatprep.subr.bf16.mxu0 0
  %723 = vmatpush1.bf16.msra.mxu0 %v534
  %724 = vmatprep.subr.bf16.mxu0 0
  %725 = vmatpush1.bf16.msra.mxu0 %v535
  %726 = vmatprep.subr.bf16.mxu0 0
  %727 = vmatpush1.bf16.msra.mxu0 %v536
  %728 = vmatprep.subr.bf16.mxu0 0
  %729 = vmatpush1.bf16.msra.mxu0 %v537
  %730 = vmatprep.mubr.bf16.mxu0 %v221
  %731 = vmatmul.mubr.bf16.gmra.mrb[0].mxu0 %v207
  %v732 = vpop.f32.mrb[0].mxu0
  %v733 = vadd.f32 %v693, %v732
  %v734 = vpop.f32.mrb[0].mxu0
  %v735 = vpop.f32.mrb[0].mxu0
  %v736 = vpop.f32.mrb[0].mxu0
  %737 = vdwg.mxu0
  %738 = vmatprep.subr.bf16.mxu0 0
  %739 = vmatpush1.bf16.msra.mxu0 %v538
  %740 = vmatprep.subr.bf16.mxu0 0
  %741 = vmatpush1.bf16.msra.mxu0 %v539
  %742 = vmatprep.subr.bf16.mxu0 0
  %743 = vmatpush1.bf16.msra.mxu0 %v540
  %744 = vmatprep.subr.bf16.mxu0 0
  %745 = vmatpush1.bf16.msra.mxu0 %v541
  %746 = vmatprep.subr.bf16.mxu0 0
  %747 = vmatpush1.bf16.msra.mxu0 %v542
  %748 = vmatprep.subr.bf16.mxu0 0
  %749 = vmatpush1.bf16.msra.mxu0 %v543
  %750 = vmatprep.subr.bf16.mxu0 0
  %751 = vmatpush1.bf16.msra.mxu0 %v544
  %752 = vmatprep.subr.bf16.mxu0 0
  %753 = vmatpush1.bf16.msra.mxu0 %v545
  %754 = vmatprep.subr.bf16.mxu0 0
  %755 = vmatpush1.bf16.msra.mxu0 %v546
  %756 = vmatprep.subr.bf16.mxu0 0
  %757 = vmatpush1.bf16.msra.mxu0 %v547
  %758 = vmatprep.subr.bf16.mxu0 0
  %759 = vmatpush1.bf16.msra.mxu0 %v548
  %760 = vmatprep.subr.bf16.mxu0 0
  %761 = vmatpush1.bf16.msra.mxu0 %v549
  %762 = vmatprep.subr.bf16.mxu0 0
  %763 = vmatpush1.bf16.msra.mxu0 %v550
  %764 = vmatprep.subr.bf16.mxu0 0
  %765 = vmatpush1.bf16.msra.mxu0 %v551
  %766 = vmatprep.subr.bf16.mxu0 0
  %767 = vmatpush1.bf16.msra.mxu0 %v552
  %768 = vmatprep.subr.bf16.mxu0 0
  %769 = vmatpush1.bf16.msra.mxu0 %v553
  %770 = vmatprep.mubr.bf16.mxu0 %v225
  %771 = vmatmul.mubr.bf16.gmra.mrb[0].mxu0 %v223
  %v772 = vpop.f32.mrb[0].mxu0
  %v773 = vadd.f32 %v733, %v772
  %v774 = vpop.f32.mrb[0].mxu0
  %v775 = vpop.f32.mrb[0].mxu0
  %v776 = vpop.f32.mrb[0].mxu0
  %777 = vdwg.mxu0
  %v778 = vld [vmem:[%s1] sm:$0xff]
  %v779 = vld [vmem:[%s1 + $0x8] sm:$0xff]
  %v780 = vlaneseq
  %v781 = vand.u32 %v780, 127
  %782 = vset.pattern.permute.xlu0 0
  %783 = vperm.xlu0 %782, %v778
  %v784 = vpop.permute.xlu0 %783
  %785 = vset.pattern.permute.xlu0 0
  %786 = vperm.xlu0 %785, %v779
  %v787 = vpop.permute.xlu0 %786
  %vm788 = vcmp.eq.s32.totalorder %v784, %v781
  %vm789 = vcmp.eq.s32.totalorder %v787, %v781
  %v790 = vsel %vm788, 1, 0
  %v791 = vsel %vm789, 1, 0
  %v792 = vcvt.s32.f32 %v790
  %v793 = vcvt.s32.f32 %v791
  %v794 = vld [vmem:[%s2] sm:$0xff]
  %v795 = vld [vmem:[%s2 + $0x8] sm:$0xff]
  %v796 = vld [vmem:[%s2 + $0x10] sm:$0xff]
  %v797 = vld [vmem:[%s2 + $0x18] sm:$0xff]
  %v798 = vld [vmem:[%s2 + $0x20] sm:$0xff]
  %v799 = vld [vmem:[%s2 + $0x28] sm:$0xff]
  %v800 = vld [vmem:[%s2 + $0x30] sm:$0xff]
  %v801 = vld [vmem:[%s2 + $0x38] sm:$0xff]
  %v802 = vld [vmem:[%s2 + $0x40] sm:$0xff]
  %v803 = vld [vmem:[%s2 + $0x48] sm:$0xff]
  %vm804 = vcmask 523264
  %v806 = vsel %vm804, %v792, 0
  %v809 = vsel %vm804, %v793, 0
  %811 = vmatprep.subr.mxu0 0.0
  %812 = vmatpush1.msra.mxu0 %v794
  %813 = vmatprep.subr.mxu0 0.0
  %814 = vmatpush1.msra.mxu0 %v795
  %815 = vmatprep.subr.mxu0 0.0
  %816 = vmatpush1.msra.mxu0 %v796
  %817 = vmatprep.subr.mxu0 0.0
  %818 = vmatpush1.msra.mxu0 %v797
  %819 = vmatprep.subr.mxu0 0.0
  %820 = vmatpush1.msra.mxu0 %v798
  %821 = vmatprep.subr.mxu0 0.0
  %822 = vmatpush1.msra.mxu0 %v799
  %823 = vmatprep.subr.mxu0 0.0
  %824 = vmatpush1.msra.mxu0 %v800
  %825 = vmatprep.subr.mxu0 0.0
  %826 = vmatpush1.msra.mxu0 %v801
  %827 = vmatprep.subr.mxu0 0.0
  %828 = vmatpush1.msra.mxu0 0.0
  %829 = vmatprep.subr.mxu0 0.0
  %830 = vmatpush1.msra.mxu0 0.0
  %831 = vmatprep.subr.mxu0 0.0
  %832 = vmatpush1.msra.mxu0 0.0
  %833 = vmatprep.subr.mxu0 0.0
  %834 = vmatpush1.msra.mxu0 0.0
  %835 = vmatprep.subr.mxu0 0.0
  %836 = vmatpush1.msra.mxu0 0.0
  %837 = vmatprep.subr.mxu0 0.0
  %838 = vmatpush1.msra.mxu0 0.0
  %839 = vmatprep.subr.mxu0 0.0
  %840 = vmatpush1.msra.mxu0 0.0
  %841 = vmatprep.subr.mxu0 0.0
  %842 = vmatpush1.msra.mxu0 0.0
  %843 = vmatprep.subr.mxu0 0.0
  %844 = vmatpush1.msra.mxu0 0.0
  %845 = vmatprep.subr.mxu0 0.0
  %846 = vmatpush1.msra.mxu0 0.0
  %847 = vmatprep.subr.mxu0 0.0
  %848 = vmatpush1.msra.mxu0 0.0
  %849 = vmatprep.subr.mxu0 0.0
  %850 = vmatpush1.msra.mxu0 0.0
  %851 = vmatprep.subr.mxu0 0.0
  %852 = vmatpush1.msra.mxu0 0.0
  %853 = vmatprep.subr.mxu0 0.0
  %854 = vmatpush1.msra.mxu0 0.0
  %855 = vmatprep.subr.mxu0 0.0
  %856 = vmatpush1.msra.mxu0 0.0
  %857 = vmatprep.subr.mxu0 0.0
  %858 = vmatpush1.msra.mxu0 0.0
  %859 = vmatprep.subr.mxu0 0.0
  %860 = vmatpush1.msra.mxu0 0.0
  %861 = vmatprep.subr.mxu0 0.0
  %862 = vmatpush1.msra.mxu0 0.0
  %863 = vmatprep.subr.mxu0 0.0
  %864 = vmatpush1.msra.mxu0 0.0
  %865 = vmatprep.subr.mxu0 0.0
  %866 = vmatpush1.msra.mxu0 0.0
  %867 = vmatprep.subr.mxu0 0.0
  %868 = vmatpush1.msra.mxu0 0.0
  %869 = vmatprep.subr.mxu0 0.0
  %870 = vmatpush1.msra.mxu0 0.0
  %871 = vmatprep.subr.mxu0 0.0
  %872 = vmatpush1.msra.mxu0 0.0
  %873 = vmatprep.subr.mxu0 0.0
  %874 = vmatpush1.msra.mxu0 0.0
  %875 = vmatprep.mubr.f32.mxu0 0.0
  %876 = vmatmul.mubr.f32.gmra.mrb[0].mxu0 %v806
  %v877 = vpop.f32.mrb[0].mxu0
  %v878 = vadd.f32 %v802, %v877
  %v879 = vpop.f32.mrb[0].mxu0
  %880 = vmatprep.mubr.f32.mxu0 0.0
  %881 = vmatmul.mubr.f32.gmra.mrb[0].mxu0 %v809
  %v882 = vpop.f32.mrb[0].mxu0
  %v883 = vadd.f32 %v803, %v882
  %v884 = vpop.f32.mrb[0].mxu0
  %885 = vdwg.mxu0
  %v886 = vlaneseq
  %v887 = vshrl.u32 %v886, 7
  %v888 = vadd.s32 %v887, 8
  %v889 = vshrl.u32 %v887, 3
  %v890 = vshrl.u32 %v888, 3
  %v891 = vshrl.u32 %v781, 3
  %vm892 = vcmp.eq.s32.totalorder %v889, %v891
  %vm893 = vcmp.eq.s32.totalorder %v890, %v891
  %vm894 = vcmp.le.s32.totalorder %v781, %v887
  %vm895 = vcmp.le.s32.totalorder %v781, %v888
  %vm896 = vmand %vm892, %vm894
  %vm897 = vmand %vm893, %vm895
  %v898 = vsel %vm896, 0.0, -1e+30
  %v899 = vsel %vm897, 0.0, -1e+30
  %vm900 = vcmask 261120
  %v901 = vsel %vm900, %v878, 0.0
  %902 = vadd.xlane.f32.xlu0 %v901
  %v903 = vpop.xlane.xlu0 %902
  %v904 = vsel %vm900, %v883, 0.0
  %905 = vadd.xlane.f32.xlu0 %v904
  %v906 = vpop.xlane.xlu0 %905
  %v907 = vrcp.pop 32.0
  %v908 = vmul.f32 %v903, %v907
  %v909 = vmul.f32 %v906, %v907
  %v910 = vsub.f32 %v878, %v908
  %v911 = vsub.f32 %v883, %v909
  %v912 = vmul.f32 %v910, %v910
  %v913 = vmul.f32 %v911, %v911
  %v914 = vsel %vm900, %v912, 0.0
  %915 = vadd.xlane.f32.xlu0 %v914
  %v916 = vpop.xlane.xlu0 %915
  %v917 = vsel %vm900, %v913, 0.0
  %918 = vadd.xlane.f32.xlu0 %v917
  %v919 = vpop.xlane.xlu0 %918
  %v920 = vmul.f32 %v916, %v907
  %v921 = vmul.f32 %v919, %v907
  %v922 = vadd.f32 %v920, 1e-05
  %v923 = vadd.f32 %v921, 1e-05
  %v924 = vrsqrt.pop %v922
  %v925 = vrsqrt.pop %v923
  %v926 = vmul.f32 %v910, %v924
  %v927 = vmul.f32 %v911, %v925
  %v928 = vlaneseq
  %v929 = vshrl.u32 %v928, 7
  %v930 = vsub.s32 0, %v929
  %v931 = vrot.slane %v40, %v930
  %v932 = vmul.f32 %v926, %v931
  %v933 = vmul.f32 %v927, %v931
  %v934 = vlaneseq
  %v935 = vshrl.u32 %v934, 7
  %v936 = vsub.s32 1, %v935
  %v937 = vrot.slane %v40, %v936
  %v938 = vadd.f32 %v932, %v937
  %v939 = vadd.f32 %v933, %v937
  %v940 = vld [vmem:[%s3] sm:$0xff]
  %v941 = vld [vmem:[%s3 + $0x8] sm:$0xff]
  %v942 = vld [vmem:[%s3 + $0x10] sm:$0xff]
  %v943 = vld [vmem:[%s3 + $0x18] sm:$0xff]
  %v944 = vlaneseq
  %v945 = vshrl.u32 %v944, 7
  %v946 = vsub.s32 2, %v945
  %v947 = vrot.slane %v40, %v946
  %v949 = vsel %vm900, %v938, 0
  %v952 = vsel %vm900, %v939, 0
  %954 = vmatprep.subr.mxu0 0.0
  %955 = vmatpush1.msra.mxu0 %v940
  %956 = vmatprep.subr.mxu0 0.0
  %957 = vmatpush1.msra.mxu0 %v941
  %958 = vmatprep.subr.mxu0 0.0
  %959 = vmatpush1.msra.mxu0 %v942
  %960 = vmatprep.subr.mxu0 0.0
  %961 = vmatpush1.msra.mxu0 %v943
  %962 = vmatprep.subr.mxu0 0.0
  %963 = vmatpush1.msra.mxu0 0.0
  %964 = vmatprep.subr.mxu0 0.0
  %965 = vmatpush1.msra.mxu0 0.0
  %966 = vmatprep.subr.mxu0 0.0
  %967 = vmatpush1.msra.mxu0 0.0
  %968 = vmatprep.subr.mxu0 0.0
  %969 = vmatpush1.msra.mxu0 0.0
  %970 = vmatprep.subr.mxu0 0.0
  %971 = vmatpush1.msra.mxu0 0.0
  %972 = vmatprep.subr.mxu0 0.0
  %973 = vmatpush1.msra.mxu0 0.0
  %974 = vmatprep.subr.mxu0 0.0
  %975 = vmatpush1.msra.mxu0 0.0
  %976 = vmatprep.subr.mxu0 0.0
  %977 = vmatpush1.msra.mxu0 0.0
  %978 = vmatprep.subr.mxu0 0.0
  %979 = vmatpush1.msra.mxu0 0.0
  %980 = vmatprep.subr.mxu0 0.0
  %981 = vmatpush1.msra.mxu0 0.0
  %982 = vmatprep.subr.mxu0 0.0
  %983 = vmatpush1.msra.mxu0 0.0
  %984 = vmatprep.subr.mxu0 0.0
  %985 = vmatpush1.msra.mxu0 0.0
  %986 = vmatprep.subr.mxu0 0.0
  %987 = vmatpush1.msra.mxu0 0.0
  %988 = vmatprep.subr.mxu0 0.0
  %989 = vmatpush1.msra.mxu0 0.0
  %990 = vmatprep.subr.mxu0 0.0
  %991 = vmatpush1.msra.mxu0 0.0
  %992 = vmatprep.subr.mxu0 0.0
  %993 = vmatpush1.msra.mxu0 0.0
  %994 = vmatprep.subr.mxu0 0.0
  %995 = vmatpush1.msra.mxu0 0.0
  %996 = vmatprep.subr.mxu0 0.0
  %997 = vmatpush1.msra.mxu0 0.0
  %998 = vmatprep.subr.mxu0 0.0
  %999 = vmatpush1.msra.mxu0 0.0
  %1000 = vmatprep.subr.mxu0 0.0
  %1001 = vmatpush1.msra.mxu0 0.0
  %1002 = vmatprep.subr.mxu0 0.0
  %1003 = vmatpush1.msra.mxu0 0.0
  %1004 = vmatprep.subr.mxu0 0.0
  %1005 = vmatpush1.msra.mxu0 0.0
  %1006 = vmatprep.subr.mxu0 0.0
  %1007 = vmatpush1.msra.mxu0 0.0
  %1008 = vmatprep.subr.mxu0 0.0
  %1009 = vmatpush1.msra.mxu0 0.0
  %1010 = vmatprep.subr.mxu0 0.0
  %1011 = vmatpush1.msra.mxu0 0.0
  %1012 = vmatprep.subr.mxu0 0.0
  %1013 = vmatpush1.msra.mxu0 0.0
  %1014 = vmatprep.subr.mxu0 0.0
  %1015 = vmatpush1.msra.mxu0 0.0
  %1016 = vmatprep.subr.mxu0 0.0
  %1017 = vmatpush1.msra.mxu0 0.0
  %1018 = vmatprep.mubr.f32.mxu0 0.0
  %1019 = vmatmul.mubr.f32.gmra.mrb[0].mxu0 %v949
  %v1020 = vpop.f32.mrb[0].mxu0
  %v1021 = vadd.f32 %v947, %v1020
  %v1022 = vpop.f32.mrb[0].mxu0
  %1023 = vmatprep.mubr.f32.mxu0 0.0
  %1024 = vmatmul.mubr.f32.gmra.mrb[0].mxu0 %v952
  %v1025 = vpop.f32.mrb[0].mxu0
  %v1026 = vadd.f32 %v947, %v1025
  %v1027 = vpop.f32.mrb[0].mxu0
  %1028 = vdwg.mxu0
  %1031 = vrot.lane.b32.xlu0 %v1021, 96
  %v1032 = vpop.permute.xlu0 %1031
  %1033 = vrot.lane.b32.xlu0 %v1026, 96
  %v1034 = vpop.permute.xlu0 %1033
  %vm1035 = vcmask 64512
  %v1036 = vsel %vm1035, %v1021, 0
  %v1038 = vsel %vm1035, %v1026, 0
  %v1040 = vsel %vm1035, %v1032, 0
  %v1042 = vsel %vm1035, %v1034, 0
  %1044 = vmatprep.subr.mxu0 0.0
  %1045 = vmatpush1.xpose.msra.mxu0 %v1040
  %1046 = vmatprep.subr.mxu0 0.0
  %1047 = vmatpush1.xpose.msra.mxu0 %v1042
  %1048 = vmatprep.subr.mxu0 0.0
  %1049 = vmatpush1.xpose.msra.mxu0 0.0
  %1050 = vmatprep.subr.mxu0 0.0
  %1051 = vmatpush1.xpose.msra.mxu0 0.0
  %1052 = vmatprep.subr.mxu0 0.0
  %1053 = vmatpush1.xpose.msra.mxu0 0.0
  %1054 = vmatprep.subr.mxu0 0.0
  %1055 = vmatpush1.xpose.msra.mxu0 0.0
  %1056 = vmatprep.subr.mxu0 0.0
  %1057 = vmatpush1.xpose.msra.mxu0 0.0
  %1058 = vmatprep.subr.mxu0 0.0
  %1059 = vmatpush1.xpose.msra.mxu0 0.0
  %1060 = vmatprep.subr.mxu0 0.0
  %1061 = vmatpush1.xpose.msra.mxu0 0.0
  %1062 = vmatprep.subr.mxu0 0.0
  %1063 = vmatpush1.xpose.msra.mxu0 0.0
  %1064 = vmatprep.subr.mxu0 0.0
  %1065 = vmatpush1.xpose.msra.mxu0 0.0
  %1066 = vmatprep.subr.mxu0 0.0
  %1067 = vmatpush1.xpose.msra.mxu0 0.0
  %1068 = vmatprep.subr.mxu0 0.0
  %1069 = vmatpush1.xpose.msra.mxu0 0.0
  %1070 = vmatprep.subr.mxu0 0.0
  %1071 = vmatpush1.xpose.msra.mxu0 0.0
  %1072 = vmatprep.subr.mxu0 0.0
  %1073 = vmatpush1.xpose.msra.mxu0 0.0
  %1074 = vmatprep.subr.mxu0 0.0
  %1075 = vmatpush1.xpose.msra.mxu0 0.0
  %1076 = vmatprep.subr.mxu0 0.0
  %1077 = vmatpush1.xpose.msra.mxu0 0.0
  %1078 = vmatprep.subr.mxu0 0.0
  %1079 = vmatpush1.xpose.msra.mxu0 0.0
  %1080 = vmatprep.subr.mxu0 0.0
  %1081 = vmatpush1.xpose.msra.mxu0 0.0
  %1082 = vmatprep.subr.mxu0 0.0
  %1083 = vmatpush1.xpose.msra.mxu0 0.0
  %1084 = vmatprep.subr.mxu0 0.0
  %1085 = vmatpush1.xpose.msra.mxu0 0.0
  %1086 = vmatprep.subr.mxu0 0.0
  %1087 = vmatpush1.xpose.msra.mxu0 0.0
  %1088 = vmatprep.subr.mxu0 0.0
  %1089 = vmatpush1.xpose.msra.mxu0 0.0
  %1090 = vmatprep.subr.mxu0 0.0
  %1091 = vmatpush1.xpose.msra.mxu0 0.0
  %1092 = vmatprep.subr.mxu0 0.0
  %1093 = vmatpush1.xpose.msra.mxu0 0.0
  %1094 = vmatprep.subr.mxu0 0.0
  %1095 = vmatpush1.xpose.msra.mxu0 0.0
  %1096 = vmatprep.subr.mxu0 0.0
  %1097 = vmatpush1.xpose.msra.mxu0 0.0
  %1098 = vmatprep.subr.mxu0 0.0
  %1099 = vmatpush1.xpose.msra.mxu0 0.0
  %1100 = vmatprep.subr.mxu0 0.0
  %1101 = vmatpush1.xpose.msra.mxu0 0.0
  %1102 = vmatprep.subr.mxu0 0.0
  %1103 = vmatpush1.xpose.msra.mxu0 0.0
  %1104 = vmatprep.subr.mxu0 0.0
  %1105 = vmatpush1.xpose.msra.mxu0 0.0
  %1106 = vmatprep.subr.mxu0 0.0
  %1107 = vmatpush1.xpose.msra.mxu0 0.0
  %1108 = vmatprep.mubr.f32.mxu0 0.0
  %1109 = vmatmul.mubr.f32.gmra.mrb[0].mxu0 %v1036
  %v1110 = vpop.f32.mrb[0].mxu0
  %v1111 = vadd.f32 %v898, %v1110
  %v1112 = vpop.f32.mrb[0].mxu0
  %1113 = vmatprep.mubr.f32.mxu0 0.0
  %1114 = vmatmul.mubr.f32.gmra.mrb[0].mxu0 %v1038
  %v1115 = vpop.f32.mrb[0].mxu0
  %v1116 = vadd.f32 %v899, %v1115
  %v1117 = vpop.f32.mrb[0].mxu0
  %1118 = vdwg.mxu0
  %vm1119 = vcmask 130048
  %v1120 = vsel %vm1119, %v1111, -inf
  %1121 = vmax.xlane.f32.xlu0 %v1120
  %v1122 = vpop.xlane.xlu0 %1121
  %v1123 = vsel %vm1119, %v1116, -inf
  %1124 = vmax.xlane.f32.xlu0 %v1123
  %v1125 = vpop.xlane.xlu0 %1124
  %v1126 = vsub.f32 %v1111, %v1122
  %v1127 = vsub.f32 %v1116, %v1125
  %v1128 = vmul.f32 %v1126, 1.442695
  %v1129 = vpow.pop %v1128
  %v1130 = vmul.f32 %v1127, 1.442695
  %v1131 = vpow.pop %v1130
  %v1132 = vsel %vm1119, %v1129, 0.0
  %1133 = vadd.xlane.f32.xlu0 %v1132
  %v1134 = vpop.xlane.xlu0 %1133
  %v1135 = vsel %vm1119, %v1131, 0.0
  %1136 = vadd.xlane.f32.xlu0 %v1135
  %v1137 = vpop.xlane.xlu0 %1136
  %v1138 = vrcp.pop %v1134
  %v1139 = vrcp.pop %v1137
  %v1140 = vmul.f32 %v1129, %v1138
  %v1141 = vmul.f32 %v1131, %v1139
  %1142 = vrot.lane.b32.xlu0 %v1021, 64
  %v1143 = vpop.permute.xlu0 %1142
  %1144 = vrot.lane.b32.xlu0 %v1026, 64
  %v1145 = vpop.permute.xlu0 %1144
  %v1149 = vsel %vm1119, %v1140, 0
  %v1152 = vsel %vm1119, %v1141, 0
  %1154 = vmatprep.subr.mxu0 0.0
  %1155 = vmatpush1.msra.mxu0 %v1143
  %1156 = vmatprep.subr.mxu0 0.0
  %1157 = vmatpush1.msra.mxu0 %v1145
  %1158 = vmatprep.subr.mxu0 0.0
  %1159 = vmatpush1.msra.mxu0 0.0
  %1160 = vmatprep.subr.mxu0 0.0
  %1161 = vmatpush1.msra.mxu0 0.0
  %1162 = vmatprep.subr.mxu0 0.0
  %1163 = vmatpush1.msra.mxu0 0.0
  %1164 = vmatprep.subr.mxu0 0.0
  %1165 = vmatpush1.msra.mxu0 0.0
  %1166 = vmatprep.subr.mxu0 0.0
  %1167 = vmatpush1.msra.mxu0 0.0
  %1168 = vmatprep.subr.mxu0 0.0
  %1169 = vmatpush1.msra.mxu0 0.0
  %1170 = vmatprep.subr.mxu0 0.0
  %1171 = vmatpush1.msra.mxu0 0.0
  %1172 = vmatprep.subr.mxu0 0.0
  %1173 = vmatpush1.msra.mxu0 0.0
  %1174 = vmatprep.subr.mxu0 0.0
  %1175 = vmatpush1.msra.mxu0 0.0
  %1176 = vmatprep.subr.mxu0 0.0
  %1177 = vmatpush1.msra.mxu0 0.0
  %1178 = vmatprep.subr.mxu0 0.0
  %1179 = vmatpush1.msra.mxu0 0.0
  %1180 = vmatprep.subr.mxu0 0.0
  %1181 = vmatpush1.msra.mxu0 0.0
  %1182 = vmatprep.subr.mxu0 0.0
  %1183 = vmatpush1.msra.mxu0 0.0
  %1184 = vmatprep.subr.mxu0 0.0
  %1185 = vmatpush1.msra.mxu0 0.0
  %1186 = vmatprep.subr.mxu0 0.0
  %1187 = vmatpush1.msra.mxu0 0.0
  %1188 = vmatprep.subr.mxu0 0.0
  %1189 = vmatpush1.msra.mxu0 0.0
  %1190 = vmatprep.subr.mxu0 0.0
  %1191 = vmatpush1.msra.mxu0 0.0
  %1192 = vmatprep.subr.mxu0 0.0
  %1193 = vmatpush1.msra.mxu0 0.0
  %1194 = vmatprep.subr.mxu0 0.0
  %1195 = vmatpush1.msra.mxu0 0.0
  %1196 = vmatprep.subr.mxu0 0.0
  %1197 = vmatpush1.msra.mxu0 0.0
  %1198 = vmatprep.subr.mxu0 0.0
  %1199 = vmatpush1.msra.mxu0 0.0
  %1200 = vmatprep.subr.mxu0 0.0
  %1201 = vmatpush1.msra.mxu0 0.0
  %1202 = vmatprep.subr.mxu0 0.0
  %1203 = vmatpush1.msra.mxu0 0.0
  %1204 = vmatprep.subr.mxu0 0.0
  %1205 = vmatpush1.msra.mxu0 0.0
  %1206 = vmatprep.subr.mxu0 0.0
  %1207 = vmatpush1.msra.mxu0 0.0
  %1208 = vmatprep.subr.mxu0 0.0
  %1209 = vmatpush1.msra.mxu0 0.0
  %1210 = vmatprep.subr.mxu0 0.0
  %1211 = vmatpush1.msra.mxu0 0.0
  %1212 = vmatprep.subr.mxu0 0.0
  %1213 = vmatpush1.msra.mxu0 0.0
  %1214 = vmatprep.subr.mxu0 0.0
  %1215 = vmatpush1.msra.mxu0 0.0
  %1216 = vmatprep.subr.mxu0 0.0
  %1217 = vmatpush1.msra.mxu0 0.0
  %1218 = vmatprep.mubr.f32.mxu0 0.0
  %1219 = vmatmul.mubr.f32.gmra.mrb[0].mxu0 %v1149
  %v1220 = vpop.f32.mrb[0].mxu0
  %v1221 = vadd.f32 0.0, %v1220
  %v1222 = vpop.f32.mrb[0].mxu0
  %1223 = vmatprep.mubr.f32.mxu0 0.0
  %1224 = vmatmul.mubr.f32.gmra.mrb[0].mxu0 %v1152
  %v1225 = vpop.f32.mrb[0].mxu0
  %v1226 = vadd.f32 0.0, %v1225
  %v1227 = vpop.f32.mrb[0].mxu0
  %1228 = vdwg.mxu0
  %1229 = vrot.lane.b32.xlu0 %v1021, 120
  %v1230 = vpop.permute.xlu0 %1229
  %1231 = vrot.lane.b32.xlu0 %v1026, 120
  %v1232 = vpop.permute.xlu0 %1231
  %1233 = vrot.lane.b32.xlu0 %v1021, 88
  %v1234 = vpop.permute.xlu0 %1233
  %1235 = vrot.lane.b32.xlu0 %v1026, 88
  %v1236 = vpop.permute.xlu0 %1235
  %v1237 = vsel %vm1035, %v1230, 0
  %v1239 = vsel %vm1035, %v1232, 0
  %v1241 = vsel %vm1035, %v1234, 0
  %v1243 = vsel %vm1035, %v1236, 0
  %1245 = vmatprep.subr.mxu0 0.0
  %1246 = vmatpush1.xpose.msra.mxu0 %v1241
  %1247 = vmatprep.subr.mxu0 0.0
  %1248 = vmatpush1.xpose.msra.mxu0 %v1243
  %1249 = vmatprep.subr.mxu0 0.0
  %1250 = vmatpush1.xpose.msra.mxu0 0.0
  %1251 = vmatprep.subr.mxu0 0.0
  %1252 = vmatpush1.xpose.msra.mxu0 0.0
  %1253 = vmatprep.subr.mxu0 0.0
  %1254 = vmatpush1.xpose.msra.mxu0 0.0
  %1255 = vmatprep.subr.mxu0 0.0
  %1256 = vmatpush1.xpose.msra.mxu0 0.0
  %1257 = vmatprep.subr.mxu0 0.0
  %1258 = vmatpush1.xpose.msra.mxu0 0.0
  %1259 = vmatprep.subr.mxu0 0.0
  %1260 = vmatpush1.xpose.msra.mxu0 0.0
  %1261 = vmatprep.subr.mxu0 0.0
  %1262 = vmatpush1.xpose.msra.mxu0 0.0
  %1263 = vmatprep.subr.mxu0 0.0
  %1264 = vmatpush1.xpose.msra.mxu0 0.0
  %1265 = vmatprep.subr.mxu0 0.0
  %1266 = vmatpush1.xpose.msra.mxu0 0.0
  %1267 = vmatprep.subr.mxu0 0.0
  %1268 = vmatpush1.xpose.msra.mxu0 0.0
  %1269 = vmatprep.subr.mxu0 0.0
  %1270 = vmatpush1.xpose.msra.mxu0 0.0
  %1271 = vmatprep.subr.mxu0 0.0
  %1272 = vmatpush1.xpose.msra.mxu0 0.0
  %1273 = vmatprep.subr.mxu0 0.0
  %1274 = vmatpush1.xpose.msra.mxu0 0.0
  %1275 = vmatprep.subr.mxu0 0.0
  %1276 = vmatpush1.xpose.msra.mxu0 0.0
  %1277 = vmatprep.subr.mxu0 0.0
  %1278 = vmatpush1.xpose.msra.mxu0 0.0
  %1279 = vmatprep.subr.mxu0 0.0
  %1280 = vmatpush1.xpose.msra.mxu0 0.0
  %1281 = vmatprep.subr.mxu0 0.0
  %1282 = vmatpush1.xpose.msra.mxu0 0.0
  %1283 = vmatprep.subr.mxu0 0.0
  %1284 = vmatpush1.xpose.msra.mxu0 0.0
  %1285 = vmatprep.subr.mxu0 0.0
  %1286 = vmatpush1.xpose.msra.mxu0 0.0
  %1287 = vmatprep.subr.mxu0 0.0
  %1288 = vmatpush1.xpose.msra.mxu0 0.0
  %1289 = vmatprep.subr.mxu0 0.0
  %1290 = vmatpush1.xpose.msra.mxu0 0.0
  %1291 = vmatprep.subr.mxu0 0.0
  %1292 = vmatpush1.xpose.msra.mxu0 0.0
  %1293 = vmatprep.subr.mxu0 0.0
  %1294 = vmatpush1.xpose.msra.mxu0 0.0
  %1295 = vmatprep.subr.mxu0 0.0
  %1296 = vmatpush1.xpose.msra.mxu0 0.0
  %1297 = vmatprep.subr.mxu0 0.0
  %1298 = vmatpush1.xpose.msra.mxu0 0.0
  %1299 = vmatprep.subr.mxu0 0.0
  %1300 = vmatpush1.xpose.msra.mxu0 0.0
  %1301 = vmatprep.subr.mxu0 0.0
  %1302 = vmatpush1.xpose.msra.mxu0 0.0
  %1303 = vmatprep.subr.mxu0 0.0
  %1304 = vmatpush1.xpose.msra.mxu0 0.0
  %1305 = vmatprep.subr.mxu0 0.0
  %1306 = vmatpush1.xpose.msra.mxu0 0.0
  %1307 = vmatprep.subr.mxu0 0.0
  %1308 = vmatpush1.xpose.msra.mxu0 0.0
  %1309 = vmatprep.mubr.f32.mxu0 0.0
  %1310 = vmatmul.mubr.f32.gmra.mrb[0].mxu0 %v1237
  %v1311 = vpop.f32.mrb[0].mxu0
  %v1312 = vadd.f32 %v898, %v1311
  %v1313 = vpop.f32.mrb[0].mxu0
  %1314 = vmatprep.mubr.f32.mxu0 0.0
  %1315 = vmatmul.mubr.f32.gmra.mrb[0].mxu0 %v1239
  %v1316 = vpop.f32.mrb[0].mxu0
  %v1317 = vadd.f32 %v899, %v1316
  %v1318 = vpop.f32.mrb[0].mxu0
  %1319 = vdwg.mxu0
  %v1320 = vsel %vm1119, %v1312, -inf
  %1321 = vmax.xlane.f32.xlu0 %v1320
  %v1322 = vpop.xlane.xlu0 %1321
  %v1323 = vsel %vm1119, %v1317, -inf
  %1324 = vmax.xlane.f32.xlu0 %v1323
  %v1325 = vpop.xlane.xlu0 %1324
  %v1326 = vsub.f32 %v1312, %v1322
  %v1327 = vsub.f32 %v1317, %v1325
  %v1328 = vmul.f32 %v1326, 1.442695
  %v1329 = vpow.pop %v1328
  %v1330 = vmul.f32 %v1327, 1.442695
  %v1331 = vpow.pop %v1330
  %v1332 = vsel %vm1119, %v1329, 0.0
  %1333 = vadd.xlane.f32.xlu0 %v1332
  %v1334 = vpop.xlane.xlu0 %1333
  %v1335 = vsel %vm1119, %v1331, 0.0
  %1336 = vadd.xlane.f32.xlu0 %v1335
  %v1337 = vpop.xlane.xlu0 %1336
  %v1338 = vrcp.pop %v1334
  %v1339 = vrcp.pop %v1337
  %v1340 = vmul.f32 %v1329, %v1338
  %v1341 = vmul.f32 %v1331, %v1339
  %1342 = vrot.lane.b32.xlu0 %v1021, 56
  %v1343 = vpop.permute.xlu0 %1342
  %1344 = vrot.lane.b32.xlu0 %v1026, 56
  %v1345 = vpop.permute.xlu0 %1344
  %v1349 = vsel %vm1119, %v1340, 0
  %v1352 = vsel %vm1119, %v1341, 0
  %1354 = vmatprep.subr.mxu0 0.0
  %1355 = vmatpush1.msra.mxu0 %v1343
  %1356 = vmatprep.subr.mxu0 0.0
  %1357 = vmatpush1.msra.mxu0 %v1345
  %1358 = vmatprep.subr.mxu0 0.0
  %1359 = vmatpush1.msra.mxu0 0.0
  %1360 = vmatprep.subr.mxu0 0.0
  %1361 = vmatpush1.msra.mxu0 0.0
  %1362 = vmatprep.subr.mxu0 0.0
  %1363 = vmatpush1.msra.mxu0 0.0
  %1364 = vmatprep.subr.mxu0 0.0
  %1365 = vmatpush1.msra.mxu0 0.0
  %1366 = vmatprep.subr.mxu0 0.0
  %1367 = vmatpush1.msra.mxu0 0.0
  %1368 = vmatprep.subr.mxu0 0.0
  %1369 = vmatpush1.msra.mxu0 0.0
  %1370 = vmatprep.subr.mxu0 0.0
  %1371 = vmatpush1.msra.mxu0 0.0
  %1372 = vmatprep.subr.mxu0 0.0
  %1373 = vmatpush1.msra.mxu0 0.0
  %1374 = vmatprep.subr.mxu0 0.0
  %1375 = vmatpush1.msra.mxu0 0.0
  %1376 = vmatprep.subr.mxu0 0.0
  %1377 = vmatpush1.msra.mxu0 0.0
  %1378 = vmatprep.subr.mxu0 0.0
  %1379 = vmatpush1.msra.mxu0 0.0
  %1380 = vmatprep.subr.mxu0 0.0
  %1381 = vmatpush1.msra.mxu0 0.0
  %1382 = vmatprep.subr.mxu0 0.0
  %1383 = vmatpush1.msra.mxu0 0.0
  %1384 = vmatprep.subr.mxu0 0.0
  %1385 = vmatpush1.msra.mxu0 0.0
  %1386 = vmatprep.subr.mxu0 0.0
  %1387 = vmatpush1.msra.mxu0 0.0
  %1388 = vmatprep.subr.mxu0 0.0
  %1389 = vmatpush1.msra.mxu0 0.0
  %1390 = vmatprep.subr.mxu0 0.0
  %1391 = vmatpush1.msra.mxu0 0.0
  %1392 = vmatprep.subr.mxu0 0.0
  %1393 = vmatpush1.msra.mxu0 0.0
  %1394 = vmatprep.subr.mxu0 0.0
  %1395 = vmatpush1.msra.mxu0 0.0
  %1396 = vmatprep.subr.mxu0 0.0
  %1397 = vmatpush1.msra.mxu0 0.0
  %1398 = vmatprep.subr.mxu0 0.0
  %1399 = vmatpush1.msra.mxu0 0.0
  %1400 = vmatprep.subr.mxu0 0.0
  %1401 = vmatpush1.msra.mxu0 0.0
  %1402 = vmatprep.subr.mxu0 0.0
  %1403 = vmatpush1.msra.mxu0 0.0
  %1404 = vmatprep.subr.mxu0 0.0
  %1405 = vmatpush1.msra.mxu0 0.0
  %1406 = vmatprep.subr.mxu0 0.0
  %1407 = vmatpush1.msra.mxu0 0.0
  %1408 = vmatprep.subr.mxu0 0.0
  %1409 = vmatpush1.msra.mxu0 0.0
  %1410 = vmatprep.subr.mxu0 0.0
  %1411 = vmatpush1.msra.mxu0 0.0
  %1412 = vmatprep.subr.mxu0 0.0
  %1413 = vmatpush1.msra.mxu0 0.0
  %1414 = vmatprep.subr.mxu0 0.0
  %1415 = vmatpush1.msra.mxu0 0.0
  %1416 = vmatprep.subr.mxu0 0.0
  %1417 = vmatpush1.msra.mxu0 0.0
  %1418 = vmatprep.mubr.f32.mxu0 0.0
  %1419 = vmatmul.mubr.f32.gmra.mrb[0].mxu0 %v1349
  %v1420 = vpop.f32.mrb[0].mxu0
  %v1421 = vadd.f32 0.0, %v1420
  %v1422 = vpop.f32.mrb[0].mxu0
  %1423 = vmatprep.mubr.f32.mxu0 0.0
  %1424 = vmatmul.mubr.f32.gmra.mrb[0].mxu0 %v1352
  %v1425 = vpop.f32.mrb[0].mxu0
  %v1426 = vadd.f32 0.0, %v1425
  %v1427 = vpop.f32.mrb[0].mxu0
  %1428 = vdwg.mxu0
  %1429 = vrot.lane.b32.xlu0 %v1021, 112
  %v1430 = vpop.permute.xlu0 %1429
  %1431 = vrot.lane.b32.xlu0 %v1026, 112
  %v1432 = vpop.permute.xlu0 %1431
  %1433 = vrot.lane.b32.xlu0 %v1021, 80
  %v1434 = vpop.permute.xlu0 %1433
  %1435 = vrot.lane.b32.xlu0 %v1026, 80
  %v1436 = vpop.permute.xlu0 %1435
  %v1437 = vsel %vm1035, %v1430, 0
  %v1439 = vsel %vm1035, %v1432, 0
  %v1441 = vsel %vm1035, %v1434, 0
  %v1443 = vsel %vm1035, %v1436, 0
  %1445 = vmatprep.subr.mxu0 0.0
  %1446 = vmatpush1.xpose.msra.mxu0 %v1441
  %1447 = vmatprep.subr.mxu0 0.0
  %1448 = vmatpush1.xpose.msra.mxu0 %v1443
  %1449 = vmatprep.subr.mxu0 0.0
  %1450 = vmatpush1.xpose.msra.mxu0 0.0
  %1451 = vmatprep.subr.mxu0 0.0
  %1452 = vmatpush1.xpose.msra.mxu0 0.0
  %1453 = vmatprep.subr.mxu0 0.0
  %1454 = vmatpush1.xpose.msra.mxu0 0.0
  %1455 = vmatprep.subr.mxu0 0.0
  %1456 = vmatpush1.xpose.msra.mxu0 0.0
  %1457 = vmatprep.subr.mxu0 0.0
  %1458 = vmatpush1.xpose.msra.mxu0 0.0
  %1459 = vmatprep.subr.mxu0 0.0
  %1460 = vmatpush1.xpose.msra.mxu0 0.0
  %1461 = vmatprep.subr.mxu0 0.0
  %1462 = vmatpush1.xpose.msra.mxu0 0.0
  %1463 = vmatprep.subr.mxu0 0.0
  %1464 = vmatpush1.xpose.msra.mxu0 0.0
  %1465 = vmatprep.subr.mxu0 0.0
  %1466 = vmatpush1.xpose.msra.mxu0 0.0
  %1467 = vmatprep.subr.mxu0 0.0
  %1468 = vmatpush1.xpose.msra.mxu0 0.0
  %1469 = vmatprep.subr.mxu0 0.0
  %1470 = vmatpush1.xpose.msra.mxu0 0.0
  %1471 = vmatprep.subr.mxu0 0.0
  %1472 = vmatpush1.xpose.msra.mxu0 0.0
  %1473 = vmatprep.subr.mxu0 0.0
  %1474 = vmatpush1.xpose.msra.mxu0 0.0
  %1475 = vmatprep.subr.mxu0 0.0
  %1476 = vmatpush1.xpose.msra.mxu0 0.0
  %1477 = vmatprep.subr.mxu0 0.0
  %1478 = vmatpush1.xpose.msra.mxu0 0.0
  %1479 = vmatprep.subr.mxu0 0.0
  %1480 = vmatpush1.xpose.msra.mxu0 0.0
  %1481 = vmatprep.subr.mxu0 0.0
  %1482 = vmatpush1.xpose.msra.mxu0 0.0
  %1483 = vmatprep.subr.mxu0 0.0
  %1484 = vmatpush1.xpose.msra.mxu0 0.0
  %1485 = vmatprep.subr.mxu0 0.0
  %1486 = vmatpush1.xpose.msra.mxu0 0.0
  %1487 = vmatprep.subr.mxu0 0.0
  %1488 = vmatpush1.xpose.msra.mxu0 0.0
  %1489 = vmatprep.subr.mxu0 0.0
  %1490 = vmatpush1.xpose.msra.mxu0 0.0
  %1491 = vmatprep.subr.mxu0 0.0
  %1492 = vmatpush1.xpose.msra.mxu0 0.0
  %1493 = vmatprep.subr.mxu0 0.0
  %1494 = vmatpush1.xpose.msra.mxu0 0.0
  %1495 = vmatprep.subr.mxu0 0.0
  %1496 = vmatpush1.xpose.msra.mxu0 0.0
  %1497 = vmatprep.subr.mxu0 0.0
  %1498 = vmatpush1.xpose.msra.mxu0 0.0
  %1499 = vmatprep.subr.mxu0 0.0
  %1500 = vmatpush1.xpose.msra.mxu0 0.0
  %1501 = vmatprep.subr.mxu0 0.0
  %1502 = vmatpush1.xpose.msra.mxu0 0.0
  %1503 = vmatprep.subr.mxu0 0.0
  %1504 = vmatpush1.xpose.msra.mxu0 0.0
  %1505 = vmatprep.subr.mxu0 0.0
  %1506 = vmatpush1.xpose.msra.mxu0 0.0
  %1507 = vmatprep.subr.mxu0 0.0
  %1508 = vmatpush1.xpose.msra.mxu0 0.0
  %1509 = vmatprep.mubr.f32.mxu0 0.0
  %1510 = vmatmul.mubr.f32.gmra.mrb[0].mxu0 %v1437
  %v1511 = vpop.f32.mrb[0].mxu0
  %v1512 = vadd.f32 %v898, %v1511
  %v1513 = vpop.f32.mrb[0].mxu0
  %1514 = vmatprep.mubr.f32.mxu0 0.0
  %1515 = vmatmul.mubr.f32.gmra.mrb[0].mxu0 %v1439
  %v1516 = vpop.f32.mrb[0].mxu0
  %v1517 = vadd.f32 %v899, %v1516
  %v1518 = vpop.f32.mrb[0].mxu0
  %1519 = vdwg.mxu0
  %v1520 = vsel %vm1119, %v1512, -inf
  %1521 = vmax.xlane.f32.xlu0 %v1520
  %v1522 = vpop.xlane.xlu0 %1521
  %v1523 = vsel %vm1119, %v1517, -inf
  %1524 = vmax.xlane.f32.xlu0 %v1523
  %v1525 = vpop.xlane.xlu0 %1524
  %v1526 = vsub.f32 %v1512, %v1522
  %v1527 = vsub.f32 %v1517, %v1525
  %v1528 = vmul.f32 %v1526, 1.442695
  %v1529 = vpow.pop %v1528
  %v1530 = vmul.f32 %v1527, 1.442695
  %v1531 = vpow.pop %v1530
  %v1532 = vsel %vm1119, %v1529, 0.0
  %1533 = vadd.xlane.f32.xlu0 %v1532
  %v1534 = vpop.xlane.xlu0 %1533
  %v1535 = vsel %vm1119, %v1531, 0.0
  %1536 = vadd.xlane.f32.xlu0 %v1535
  %v1537 = vpop.xlane.xlu0 %1536
  %v1538 = vrcp.pop %v1534
  %v1539 = vrcp.pop %v1537
  %v1540 = vmul.f32 %v1529, %v1538
  %v1541 = vmul.f32 %v1531, %v1539
  %1542 = vrot.lane.b32.xlu0 %v1021, 48
  %v1543 = vpop.permute.xlu0 %1542
  %1544 = vrot.lane.b32.xlu0 %v1026, 48
  %v1545 = vpop.permute.xlu0 %1544
  %v1549 = vsel %vm1119, %v1540, 0
  %v1552 = vsel %vm1119, %v1541, 0
  %1554 = vmatprep.subr.mxu0 0.0
  %1555 = vmatpush1.msra.mxu0 %v1543
  %1556 = vmatprep.subr.mxu0 0.0
  %1557 = vmatpush1.msra.mxu0 %v1545
  %1558 = vmatprep.subr.mxu0 0.0
  %1559 = vmatpush1.msra.mxu0 0.0
  %1560 = vmatprep.subr.mxu0 0.0
  %1561 = vmatpush1.msra.mxu0 0.0
  %1562 = vmatprep.subr.mxu0 0.0
  %1563 = vmatpush1.msra.mxu0 0.0
  %1564 = vmatprep.subr.mxu0 0.0
  %1565 = vmatpush1.msra.mxu0 0.0
  %1566 = vmatprep.subr.mxu0 0.0
  %1567 = vmatpush1.msra.mxu0 0.0
  %1568 = vmatprep.subr.mxu0 0.0
  %1569 = vmatpush1.msra.mxu0 0.0
  %1570 = vmatprep.subr.mxu0 0.0
  %1571 = vmatpush1.msra.mxu0 0.0
  %1572 = vmatprep.subr.mxu0 0.0
  %1573 = vmatpush1.msra.mxu0 0.0
  %1574 = vmatprep.subr.mxu0 0.0
  %1575 = vmatpush1.msra.mxu0 0.0
  %1576 = vmatprep.subr.mxu0 0.0
  %1577 = vmatpush1.msra.mxu0 0.0
  %1578 = vmatprep.subr.mxu0 0.0
  %1579 = vmatpush1.msra.mxu0 0.0
  %1580 = vmatprep.subr.mxu0 0.0
  %1581 = vmatpush1.msra.mxu0 0.0
  %1582 = vmatprep.subr.mxu0 0.0
  %1583 = vmatpush1.msra.mxu0 0.0
  %1584 = vmatprep.subr.mxu0 0.0
  %1585 = vmatpush1.msra.mxu0 0.0
  %1586 = vmatprep.subr.mxu0 0.0
  %1587 = vmatpush1.msra.mxu0 0.0
  %1588 = vmatprep.subr.mxu0 0.0
  %1589 = vmatpush1.msra.mxu0 0.0
  %1590 = vmatprep.subr.mxu0 0.0
  %1591 = vmatpush1.msra.mxu0 0.0
  %1592 = vmatprep.subr.mxu0 0.0
  %1593 = vmatpush1.msra.mxu0 0.0
  %1594 = vmatprep.subr.mxu0 0.0
  %1595 = vmatpush1.msra.mxu0 0.0
  %1596 = vmatprep.subr.mxu0 0.0
  %1597 = vmatpush1.msra.mxu0 0.0
  %1598 = vmatprep.subr.mxu0 0.0
  %1599 = vmatpush1.msra.mxu0 0.0
  %1600 = vmatprep.subr.mxu0 0.0
  %1601 = vmatpush1.msra.mxu0 0.0
  %1602 = vmatprep.subr.mxu0 0.0
  %1603 = vmatpush1.msra.mxu0 0.0
  %1604 = vmatprep.subr.mxu0 0.0
  %1605 = vmatpush1.msra.mxu0 0.0
  %1606 = vmatprep.subr.mxu0 0.0
  %1607 = vmatpush1.msra.mxu0 0.0
  %1608 = vmatprep.subr.mxu0 0.0
  %1609 = vmatpush1.msra.mxu0 0.0
  %1610 = vmatprep.subr.mxu0 0.0
  %1611 = vmatpush1.msra.mxu0 0.0
  %1612 = vmatprep.subr.mxu0 0.0
  %1613 = vmatpush1.msra.mxu0 0.0
  %1614 = vmatprep.subr.mxu0 0.0
  %1615 = vmatpush1.msra.mxu0 0.0
  %1616 = vmatprep.subr.mxu0 0.0
  %1617 = vmatpush1.msra.mxu0 0.0
  %1618 = vmatprep.mubr.f32.mxu0 0.0
  %1619 = vmatmul.mubr.f32.gmra.mrb[0].mxu0 %v1549
  %v1620 = vpop.f32.mrb[0].mxu0
  %v1621 = vadd.f32 0.0, %v1620
  %v1622 = vpop.f32.mrb[0].mxu0
  %1623 = vmatprep.mubr.f32.mxu0 0.0
  %1624 = vmatmul.mubr.f32.gmra.mrb[0].mxu0 %v1552
  %v1625 = vpop.f32.mrb[0].mxu0
  %v1626 = vadd.f32 0.0, %v1625
  %v1627 = vpop.f32.mrb[0].mxu0
  %1628 = vdwg.mxu0
  %1629 = vrot.lane.b32.xlu0 %v1021, 104
  %v1630 = vpop.permute.xlu0 %1629
  %1631 = vrot.lane.b32.xlu0 %v1026, 104
  %v1632 = vpop.permute.xlu0 %1631
  %1633 = vrot.lane.b32.xlu0 %v1021, 72
  %v1634 = vpop.permute.xlu0 %1633
  %1635 = vrot.lane.b32.xlu0 %v1026, 72
  %v1636 = vpop.permute.xlu0 %1635
  %v1637 = vsel %vm1035, %v1630, 0
  %v1639 = vsel %vm1035, %v1632, 0
  %v1641 = vsel %vm1035, %v1634, 0
  %v1643 = vsel %vm1035, %v1636, 0
  %1645 = vmatprep.subr.mxu0 0.0
  %1646 = vmatpush1.xpose.msra.mxu0 %v1641
  %1647 = vmatprep.subr.mxu0 0.0
  %1648 = vmatpush1.xpose.msra.mxu0 %v1643
  %1649 = vmatprep.subr.mxu0 0.0
  %1650 = vmatpush1.xpose.msra.mxu0 0.0
  %1651 = vmatprep.subr.mxu0 0.0
  %1652 = vmatpush1.xpose.msra.mxu0 0.0
  %1653 = vmatprep.subr.mxu0 0.0
  %1654 = vmatpush1.xpose.msra.mxu0 0.0
  %1655 = vmatprep.subr.mxu0 0.0
  %1656 = vmatpush1.xpose.msra.mxu0 0.0
  %1657 = vmatprep.subr.mxu0 0.0
  %1658 = vmatpush1.xpose.msra.mxu0 0.0
  %1659 = vmatprep.subr.mxu0 0.0
  %1660 = vmatpush1.xpose.msra.mxu0 0.0
  %1661 = vmatprep.subr.mxu0 0.0
  %1662 = vmatpush1.xpose.msra.mxu0 0.0
  %1663 = vmatprep.subr.mxu0 0.0
  %1664 = vmatpush1.xpose.msra.mxu0 0.0
  %1665 = vmatprep.subr.mxu0 0.0
  %1666 = vmatpush1.xpose.msra.mxu0 0.0
  %1667 = vmatprep.subr.mxu0 0.0
  %1668 = vmatpush1.xpose.msra.mxu0 0.0
  %1669 = vmatprep.subr.mxu0 0.0
  %1670 = vmatpush1.xpose.msra.mxu0 0.0
  %1671 = vmatprep.subr.mxu0 0.0
  %1672 = vmatpush1.xpose.msra.mxu0 0.0
  %1673 = vmatprep.subr.mxu0 0.0
  %1674 = vmatpush1.xpose.msra.mxu0 0.0
  %1675 = vmatprep.subr.mxu0 0.0
  %1676 = vmatpush1.xpose.msra.mxu0 0.0
  %1677 = vmatprep.subr.mxu0 0.0
  %1678 = vmatpush1.xpose.msra.mxu0 0.0
  %1679 = vmatprep.subr.mxu0 0.0
  %1680 = vmatpush1.xpose.msra.mxu0 0.0
  %1681 = vmatprep.subr.mxu0 0.0
  %1682 = vmatpush1.xpose.msra.mxu0 0.0
  %1683 = vmatprep.subr.mxu0 0.0
  %1684 = vmatpush1.xpose.msra.mxu0 0.0
  %1685 = vmatprep.subr.mxu0 0.0
  %1686 = vmatpush1.xpose.msra.mxu0 0.0
  %1687 = vmatprep.subr.mxu0 0.0
  %1688 = vmatpush1.xpose.msra.mxu0 0.0
  %1689 = vmatprep.subr.mxu0 0.0
  %1690 = vmatpush1.xpose.msra.mxu0 0.0
  %1691 = vmatprep.subr.mxu0 0.0
  %1692 = vmatpush1.xpose.msra.mxu0 0.0
  %1693 = vmatprep.subr.mxu0 0.0
  %1694 = vmatpush1.xpose.msra.mxu0 0.0
  %1695 = vmatprep.subr.mxu0 0.0
  %1696 = vmatpush1.xpose.msra.mxu0 0.0
  %1697 = vmatprep.subr.mxu0 0.0
  %1698 = vmatpush1.xpose.msra.mxu0 0.0
  %1699 = vmatprep.subr.mxu0 0.0
  %1700 = vmatpush1.xpose.msra.mxu0 0.0
  %1701 = vmatprep.subr.mxu0 0.0
  %1702 = vmatpush1.xpose.msra.mxu0 0.0
  %1703 = vmatprep.subr.mxu0 0.0
  %1704 = vmatpush1.xpose.msra.mxu0 0.0
  %1705 = vmatprep.subr.mxu0 0.0
  %1706 = vmatpush1.xpose.msra.mxu0 0.0
  %1707 = vmatprep.subr.mxu0 0.0
  %1708 = vmatpush1.xpose.msra.mxu0 0.0
  %1709 = vmatprep.mubr.f32.mxu0 0.0
  %1710 = vmatmul.mubr.f32.gmra.mrb[0].mxu0 %v1637
  %v1711 = vpop.f32.mrb[0].mxu0
  %v1712 = vadd.f32 %v898, %v1711
  %v1713 = vpop.f32.mrb[0].mxu0
  %1714 = vmatprep.mubr.f32.mxu0 0.0
  %1715 = vmatmul.mubr.f32.gmra.mrb[0].mxu0 %v1639
  %v1716 = vpop.f32.mrb[0].mxu0
  %v1717 = vadd.f32 %v899, %v1716
  %v1718 = vpop.f32.mrb[0].mxu0
  %1719 = vdwg.mxu0
  %v1720 = vsel %vm1119, %v1712, -inf
  %1721 = vmax.xlane.f32.xlu0 %v1720
  %v1722 = vpop.xlane.xlu0 %1721
  %v1723 = vsel %vm1119, %v1717, -inf
  %1724 = vmax.xlane.f32.xlu0 %v1723
  %v1725 = vpop.xlane.xlu0 %1724
  %v1726 = vsub.f32 %v1712, %v1722
  %v1727 = vsub.f32 %v1717, %v1725
  %v1728 = vmul.f32 %v1726, 1.442695
  %v1729 = vpow.pop %v1728
  %v1730 = vmul.f32 %v1727, 1.442695
  %v1731 = vpow.pop %v1730
  %v1732 = vsel %vm1119, %v1729, 0.0
  %1733 = vadd.xlane.f32.xlu0 %v1732
  %v1734 = vpop.xlane.xlu0 %1733
  %v1735 = vsel %vm1119, %v1731, 0.0
  %1736 = vadd.xlane.f32.xlu0 %v1735
  %v1737 = vpop.xlane.xlu0 %1736
  %v1738 = vrcp.pop %v1734
  %v1739 = vrcp.pop %v1737
  %v1740 = vmul.f32 %v1729, %v1738
  %v1741 = vmul.f32 %v1731, %v1739
  %1742 = vrot.lane.b32.xlu0 %v1021, 40
  %v1743 = vpop.permute.xlu0 %1742
  %1744 = vrot.lane.b32.xlu0 %v1026, 40
  %v1745 = vpop.permute.xlu0 %1744
  %v1749 = vsel %vm1119, %v1740, 0
  %v1752 = vsel %vm1119, %v1741, 0
  %1754 = vmatprep.subr.mxu0 0.0
  %1755 = vmatpush1.msra.mxu0 %v1743
  %1756 = vmatprep.subr.mxu0 0.0
  %1757 = vmatpush1.msra.mxu0 %v1745
  %1758 = vmatprep.subr.mxu0 0.0
  %1759 = vmatpush1.msra.mxu0 0.0
  %1760 = vmatprep.subr.mxu0 0.0
  %1761 = vmatpush1.msra.mxu0 0.0
  %1762 = vmatprep.subr.mxu0 0.0
  %1763 = vmatpush1.msra.mxu0 0.0
  %1764 = vmatprep.subr.mxu0 0.0
  %1765 = vmatpush1.msra.mxu0 0.0
  %1766 = vmatprep.subr.mxu0 0.0
  %1767 = vmatpush1.msra.mxu0 0.0
  %1768 = vmatprep.subr.mxu0 0.0
  %1769 = vmatpush1.msra.mxu0 0.0
  %1770 = vmatprep.subr.mxu0 0.0
  %1771 = vmatpush1.msra.mxu0 0.0
  %1772 = vmatprep.subr.mxu0 0.0
  %1773 = vmatpush1.msra.mxu0 0.0
  %1774 = vmatprep.subr.mxu0 0.0
  %1775 = vmatpush1.msra.mxu0 0.0
  %1776 = vmatprep.subr.mxu0 0.0
  %1777 = vmatpush1.msra.mxu0 0.0
  %1778 = vmatprep.subr.mxu0 0.0
  %1779 = vmatpush1.msra.mxu0 0.0
  %1780 = vmatprep.subr.mxu0 0.0
  %1781 = vmatpush1.msra.mxu0 0.0
  %1782 = vmatprep.subr.mxu0 0.0
  %1783 = vmatpush1.msra.mxu0 0.0
  %1784 = vmatprep.subr.mxu0 0.0
  %1785 = vmatpush1.msra.mxu0 0.0
  %1786 = vmatprep.subr.mxu0 0.0
  %1787 = vmatpush1.msra.mxu0 0.0
  %1788 = vmatprep.subr.mxu0 0.0
  %1789 = vmatpush1.msra.mxu0 0.0
  %1790 = vmatprep.subr.mxu0 0.0
  %1791 = vmatpush1.msra.mxu0 0.0
  %1792 = vmatprep.subr.mxu0 0.0
  %1793 = vmatpush1.msra.mxu0 0.0
  %1794 = vmatprep.subr.mxu0 0.0
  %1795 = vmatpush1.msra.mxu0 0.0
  %1796 = vmatprep.subr.mxu0 0.0
  %1797 = vmatpush1.msra.mxu0 0.0
  %1798 = vmatprep.subr.mxu0 0.0
  %1799 = vmatpush1.msra.mxu0 0.0
  %1800 = vmatprep.subr.mxu0 0.0
  %1801 = vmatpush1.msra.mxu0 0.0
  %1802 = vmatprep.subr.mxu0 0.0
  %1803 = vmatpush1.msra.mxu0 0.0
  %1804 = vmatprep.subr.mxu0 0.0
  %1805 = vmatpush1.msra.mxu0 0.0
  %1806 = vmatprep.subr.mxu0 0.0
  %1807 = vmatpush1.msra.mxu0 0.0
  %1808 = vmatprep.subr.mxu0 0.0
  %1809 = vmatpush1.msra.mxu0 0.0
  %1810 = vmatprep.subr.mxu0 0.0
  %1811 = vmatpush1.msra.mxu0 0.0
  %1812 = vmatprep.subr.mxu0 0.0
  %1813 = vmatpush1.msra.mxu0 0.0
  %1814 = vmatprep.subr.mxu0 0.0
  %1815 = vmatpush1.msra.mxu0 0.0
  %1816 = vmatprep.subr.mxu0 0.0
  %1817 = vmatpush1.msra.mxu0 0.0
  %1818 = vmatprep.mubr.f32.mxu0 0.0
  %1819 = vmatmul.mubr.f32.gmra.mrb[0].mxu0 %v1749
  %v1820 = vpop.f32.mrb[0].mxu0
  %v1821 = vadd.f32 0.0, %v1820
  %v1822 = vpop.f32.mrb[0].mxu0
  %1823 = vmatprep.mubr.f32.mxu0 0.0
  %1824 = vmatmul.mubr.f32.gmra.mrb[0].mxu0 %v1752
  %v1825 = vpop.f32.mrb[0].mxu0
  %v1826 = vadd.f32 0.0, %v1825
  %v1827 = vpop.f32.mrb[0].mxu0
  %1828 = vdwg.mxu0
  %1831 = vrot.lane.b32.xlu0 %v1421, 8
  %v1832 = vpop.permute.xlu0 %1831
  %1833 = vrot.lane.b32.xlu0 %v1426, 8
  %v1834 = vpop.permute.xlu0 %1833
  %1839 = vrot.lane.b32.xlu0 %v1621, 16
  %v1840 = vpop.permute.xlu0 %1839
  %1841 = vrot.lane.b32.xlu0 %v1626, 16
  %v1842 = vpop.permute.xlu0 %1841
  %1847 = vrot.lane.b32.xlu0 %v1821, 24
  %v1848 = vpop.permute.xlu0 %1847
  %1849 = vrot.lane.b32.xlu0 %v1826, 24
  %v1850 = vpop.permute.xlu0 %1849
  %v1853 = vsel %vm1035, %v1221, %v1832
  %v1854 = vsel %vm1035, %v1226, %v1834
  %v1855 = vsel %vm1119, %v1853, %v1840
  %v1856 = vsel %vm1119, %v1854, %v1842
  %vm1857 = vcmask 195584
  %v1858 = vsel %vm1857, %v1855, %v1848
  %v1859 = vsel %vm1857, %v1856, %v1850
  %v1860 = vld [vmem:[%s4] sm:$0xff]
  %v1861 = vld [vmem:[%s4 + $0x8] sm:$0xff]
  %v1862 = vld [vmem:[%s4 + $0x10] sm:$0xff]
  %v1863 = vld [vmem:[%s4 + $0x18] sm:$0xff]
  %v1864 = vlaneseq
  %v1865 = vshrl.u32 %v1864, 7
  %v1866 = vsub.s32 3, %v1865
  %v1867 = vrot.slane %v40, %v1866
  %v1869 = vsel %vm900, %v1858, 0
  %v1872 = vsel %vm900, %v1859, 0
  %1874 = vmatprep.subr.mxu0 0.0
  %1875 = vmatpush1.msra.mxu0 %v1860
  %1876 = vmatprep.subr.mxu0 0.0
  %1877 = vmatpush1.msra.mxu0 %v1861
  %1878 = vmatprep.subr.mxu0 0.0
  %1879 = vmatpush1.msra.mxu0 %v1862
  %1880 = vmatprep.subr.mxu0 0.0
  %1881 = vmatpush1.msra.mxu0 %v1863
  %1882 = vmatprep.subr.mxu0 0.0
  %1883 = vmatpush1.msra.mxu0 0.0
  %1884 = vmatprep.subr.mxu0 0.0
  %1885 = vmatpush1.msra.mxu0 0.0
  %1886 = vmatprep.subr.mxu0 0.0
  %1887 = vmatpush1.msra.mxu0 0.0
  %1888 = vmatprep.subr.mxu0 0.0
  %1889 = vmatpush1.msra.mxu0 0.0
  %1890 = vmatprep.subr.mxu0 0.0
  %1891 = vmatpush1.msra.mxu0 0.0
  %1892 = vmatprep.subr.mxu0 0.0
  %1893 = vmatpush1.msra.mxu0 0.0
  %1894 = vmatprep.subr.mxu0 0.0
  %1895 = vmatpush1.msra.mxu0 0.0
  %1896 = vmatprep.subr.mxu0 0.0
  %1897 = vmatpush1.msra.mxu0 0.0
  %1898 = vmatprep.subr.mxu0 0.0
  %1899 = vmatpush1.msra.mxu0 0.0
  %1900 = vmatprep.subr.mxu0 0.0
  %1901 = vmatpush1.msra.mxu0 0.0
  %1902 = vmatprep.subr.mxu0 0.0
  %1903 = vmatpush1.msra.mxu0 0.0
  %1904 = vmatprep.subr.mxu0 0.0
  %1905 = vmatpush1.msra.mxu0 0.0
  %1906 = vmatprep.subr.mxu0 0.0
  %1907 = vmatpush1.msra.mxu0 0.0
  %1908 = vmatprep.subr.mxu0 0.0
  %1909 = vmatpush1.msra.mxu0 0.0
  %1910 = vmatprep.subr.mxu0 0.0
  %1911 = vmatpush1.msra.mxu0 0.0
  %1912 = vmatprep.subr.mxu0 0.0
  %1913 = vmatpush1.msra.mxu0 0.0
  %1914 = vmatprep.subr.mxu0 0.0
  %1915 = vmatpush1.msra.mxu0 0.0
  %1916 = vmatprep.subr.mxu0 0.0
  %1917 = vmatpush1.msra.mxu0 0.0
  %1918 = vmatprep.subr.mxu0 0.0
  %1919 = vmatpush1.msra.mxu0 0.0
  %1920 = vmatprep.subr.mxu0 0.0
  %1921 = vmatpush1.msra.mxu0 0.0
  %1922 = vmatprep.subr.mxu0 0.0
  %1923 = vmatpush1.msra.mxu0 0.0
  %1924 = vmatprep.subr.mxu0 0.0
  %1925 = vmatpush1.msra.mxu0 0.0
  %1926 = vmatprep.subr.mxu0 0.0
  %1927 = vmatpush1.msra.mxu0 0.0
  %1928 = vmatprep.subr.mxu0 0.0
  %1929 = vmatpush1.msra.mxu0 0.0
  %1930 = vmatprep.subr.mxu0 0.0
  %1931 = vmatpush1.msra.mxu0 0.0
  %1932 = vmatprep.subr.mxu0 0.0
  %1933 = vmatpush1.msra.mxu0 0.0
  %1934 = vmatprep.subr.mxu0 0.0
  %1935 = vmatpush1.msra.mxu0 0.0
  %1936 = vmatprep.subr.mxu0 0.0
  %1937 = vmatpush1.msra.mxu0 0.0
  %1938 = vmatprep.mubr.f32.mxu0 0.0
  %1939 = vmatmul.mubr.f32.gmra.mrb[0].mxu0 %v1869
  %v1940 = vpop.f32.mrb[0].mxu0
  %v1941 = vadd.f32 %v1867, %v1940
  %v1942 = vpop.f32.mrb[0].mxu0
  %1943 = vmatprep.mubr.f32.mxu0 0.0
  %1944 = vmatmul.mubr.f32.gmra.mrb[0].mxu0 %v1872
  %v1945 = vpop.f32.mrb[0].mxu0
  %v1946 = vadd.f32 %v1867, %v1945
  %v1947 = vpop.f32.mrb[0].mxu0
  %1948 = vdwg.mxu0
  %v1949 = vadd.f32 %v878, %v1941
  %v1950 = vadd.f32 %v883, %v1946
  %v1951 = vsel %vm900, %v1949, 0.0
  %1952 = vadd.xlane.f32.xlu0 %v1951
  %v1953 = vpop.xlane.xlu0 %1952
  %v1954 = vsel %vm900, %v1950, 0.0
  %1955 = vadd.xlane.f32.xlu0 %v1954
  %v1956 = vpop.xlane.xlu0 %1955
  %v1957 = vmul.f32 %v1953, %v907
  %v1958 = vmul.f32 %v1956, %v907
  %v1959 = vsub.f32 %v1949, %v1957
  %v1960 = vsub.f32 %v1950, %v1958
  %v1961 = vmul.f32 %v1959, %v1959
  %v1962 = vmul.f32 %v1960, %v1960
  %v1963 = vsel %vm900, %v1961, 0.0
  %1964 = vadd.xlane.f32.xlu0 %v1963
  %v1965 = vpop.xlane.xlu0 %1964
  %v1966 = vsel %vm900, %v1962, 0.0
  %1967 = vadd.xlane.f32.xlu0 %v1966
  %v1968 = vpop.xlane.xlu0 %1967
  %v1969 = vmul.f32 %v1965, %v907
  %v1970 = vmul.f32 %v1968, %v907
  %v1971 = vadd.f32 %v1969, 1e-05
  %v1972 = vadd.f32 %v1970, 1e-05
  %v1973 = vrsqrt.pop %v1971
  %v1974 = vrsqrt.pop %v1972
  %v1975 = vmul.f32 %v1959, %v1973
  %v1976 = vmul.f32 %v1960, %v1974
  %v1977 = vlaneseq
  %v1978 = vshrl.u32 %v1977, 7
  %v1979 = vsub.s32 4, %v1978
  %v1980 = vrot.slane %v40, %v1979
  %v1981 = vmul.f32 %v1975, %v1980
  %v1982 = vmul.f32 %v1976, %v1980
  %v1983 = vlaneseq
  %v1984 = vshrl.u32 %v1983, 7
  %v1985 = vsub.s32 5, %v1984
  %v1986 = vrot.slane %v40, %v1985
  %v1987 = vadd.f32 %v1981, %v1986
  %v1988 = vadd.f32 %v1982, %v1986
  %v1989 = vld [vmem:[%s5] sm:$0xff]
  %v1990 = vld [vmem:[%s5 + $0x8] sm:$0xff]
  %v1991 = vld [vmem:[%s5 + $0x10] sm:$0xff]
  %v1992 = vld [vmem:[%s5 + $0x18] sm:$0xff]
  %v1993 = vlaneseq
  %v1994 = vshrl.u32 %v1993, 7
  %v1995 = vsub.s32 6, %v1994
  %v1996 = vrot.slane %v40, %v1995
  %v1998 = vsel %vm900, %v1987, 0
  %v2001 = vsel %vm900, %v1988, 0
  %2003 = vmatprep.subr.mxu0 0.0
  %2004 = vmatpush1.msra.mxu0 %v1989
  %2005 = vmatprep.subr.mxu0 0.0
  %2006 = vmatpush1.msra.mxu0 %v1990
  %2007 = vmatprep.subr.mxu0 0.0
  %2008 = vmatpush1.msra.mxu0 %v1991
  %2009 = vmatprep.subr.mxu0 0.0
  %2010 = vmatpush1.msra.mxu0 %v1992
  %2011 = vmatprep.subr.mxu0 0.0
  %2012 = vmatpush1.msra.mxu0 0.0
  %2013 = vmatprep.subr.mxu0 0.0
  %2014 = vmatpush1.msra.mxu0 0.0
  %2015 = vmatprep.subr.mxu0 0.0
  %2016 = vmatpush1.msra.mxu0 0.0
  %2017 = vmatprep.subr.mxu0 0.0
  %2018 = vmatpush1.msra.mxu0 0.0
  %2019 = vmatprep.subr.mxu0 0.0
  %2020 = vmatpush1.msra.mxu0 0.0
  %2021 = vmatprep.subr.mxu0 0.0
  %2022 = vmatpush1.msra.mxu0 0.0
  %2023 = vmatprep.subr.mxu0 0.0
  %2024 = vmatpush1.msra.mxu0 0.0
  %2025 = vmatprep.subr.mxu0 0.0
  %2026 = vmatpush1.msra.mxu0 0.0
  %2027 = vmatprep.subr.mxu0 0.0
  %2028 = vmatpush1.msra.mxu0 0.0
  %2029 = vmatprep.subr.mxu0 0.0
  %2030 = vmatpush1.msra.mxu0 0.0
  %2031 = vmatprep.subr.mxu0 0.0
  %2032 = vmatpush1.msra.mxu0 0.0
  %2033 = vmatprep.subr.mxu0 0.0
  %2034 = vmatpush1.msra.mxu0 0.0
  %2035 = vmatprep.subr.mxu0 0.0
  %2036 = vmatpush1.msra.mxu0 0.0
  %2037 = vmatprep.subr.mxu0 0.0
  %2038 = vmatpush1.msra.mxu0 0.0
  %2039 = vmatprep.subr.mxu0 0.0
  %2040 = vmatpush1.msra.mxu0 0.0
  %2041 = vmatprep.subr.mxu0 0.0
  %2042 = vmatpush1.msra.mxu0 0.0
  %2043 = vmatprep.subr.mxu0 0.0
  %2044 = vmatpush1.msra.mxu0 0.0
  %2045 = vmatprep.subr.mxu0 0.0
  %2046 = vmatpush1.msra.mxu0 0.0
  %2047 = vmatprep.subr.mxu0 0.0
  %2048 = vmatpush1.msra.mxu0 0.0
  %2049 = vmatprep.subr.mxu0 0.0
  %2050 = vmatpush1.msra.mxu0 0.0
  %2051 = vmatprep.subr.mxu0 0.0
  %2052 = vmatpush1.msra.mxu0 0.0
  %2053 = vmatprep.subr.mxu0 0.0
  %2054 = vmatpush1.msra.mxu0 0.0
  %2055 = vmatprep.subr.mxu0 0.0
  %2056 = vmatpush1.msra.mxu0 0.0
  %2057 = vmatprep.subr.mxu0 0.0
  %2058 = vmatpush1.msra.mxu0 0.0
  %2059 = vmatprep.subr.mxu0 0.0
  %2060 = vmatpush1.msra.mxu0 0.0
  %2061 = vmatprep.subr.mxu0 0.0
  %2062 = vmatpush1.msra.mxu0 0.0
  %2063 = vmatprep.subr.mxu0 0.0
  %2064 = vmatpush1.msra.mxu0 0.0
  %2065 = vmatprep.subr.mxu0 0.0
  %2066 = vmatpush1.msra.mxu0 0.0
  %2067 = vmatprep.mubr.f32.mxu0 0.0
  %2068 = vmatmul.mubr.f32.gmra.mrb[0].mxu0 %v1998
  %v2069 = vpop.f32.mrb[0].mxu0
  %v2070 = vadd.f32 %v1996, %v2069
  %v2071 = vpop.f32.mrb[0].mxu0
  %2072 = vmatprep.mubr.f32.mxu0 0.0
  %2073 = vmatmul.mubr.f32.gmra.mrb[0].mxu0 %v2001
  %v2074 = vpop.f32.mrb[0].mxu0
  %v2075 = vadd.f32 %v1996, %v2074
  %v2076 = vpop.f32.mrb[0].mxu0
  %2077 = vdwg.mxu0
  %v2078 = vmul.f32 %v2070, 1.702
  %v2079 = vmul.f32 %v2075, 1.702
  %v2080 = vxor.u32 %v2078, 2147483648
  %v2081 = vxor.u32 %v2079, 2147483648
  %v2082 = vmul.f32 %v2080, 1.442695
  %v2083 = vpow.pop %v2082
  %v2084 = vmul.f32 %v2081, 1.442695
  %v2085 = vpow.pop %v2084
  %v2086 = vadd.f32 %v2083, 1.0
  %v2087 = vadd.f32 %v2085, 1.0
  %v2088 = vrcp.pop %v2086
  %v2089 = vmul.f32 1.0, %v2088
  %v2090 = vrcp.pop %v2087
  %v2091 = vmul.f32 1.0, %v2090
  %v2092 = vmul.f32 %v2070, %v2089
  %v2093 = vmul.f32 %v2075, %v2091
  %v2094 = vld [vmem:[%s6] sm:$0xff]
  %v2095 = vld [vmem:[%s6 + $0x8] sm:$0xff]
  %v2096 = vld [vmem:[%s6 + $0x10] sm:$0xff]
  %v2097 = vld [vmem:[%s6 + $0x18] sm:$0xff]
  %v2098 = vld [vmem:[%s6 + $0x20] sm:$0xff]
  %v2099 = vld [vmem:[%s6 + $0x28] sm:$0xff]
  %v2100 = vld [vmem:[%s6 + $0x30] sm:$0xff]
  %v2101 = vld [vmem:[%s6 + $0x38] sm:$0xff]
  %v2102 = vld [vmem:[%s6 + $0x40] sm:$0xff]
  %v2103 = vld [vmem:[%s6 + $0x48] sm:$0xff]
  %v2104 = vld [vmem:[%s6 + $0x50] sm:$0xff]
  %v2105 = vld [vmem:[%s6 + $0x58] sm:$0xff]
  %v2106 = vld [vmem:[%s6 + $0x60] sm:$0xff]
  %v2107 = vld [vmem:[%s6 + $0x68] sm:$0xff]
  %v2108 = vld [vmem:[%s6 + $0x70] sm:$0xff]
  %v2109 = vld [vmem:[%s6 + $0x78] sm:$0xff]
  %v2110 = vlaneseq
  %v2111 = vshrl.u32 %v2110, 7
  %v2112 = vsub.s32 7, %v2111
  %v2113 = vrot.slane %v40, %v2112
  %2114 = vmatprep.subr.mxu0 0.0
  %2115 = vmatpush1.msra.mxu0 %v2094
  %2116 = vmatprep.subr.mxu0 0.0
  %2117 = vmatpush1.msra.mxu0 %v2095
  %2118 = vmatprep.subr.mxu0 0.0
  %2119 = vmatpush1.msra.mxu0 %v2096
  %2120 = vmatprep.subr.mxu0 0.0
  %2121 = vmatpush1.msra.mxu0 %v2097
  %2122 = vmatprep.subr.mxu0 0.0
  %2123 = vmatpush1.msra.mxu0 %v2098
  %2124 = vmatprep.subr.mxu0 0.0
  %2125 = vmatpush1.msra.mxu0 %v2099
  %2126 = vmatprep.subr.mxu0 0.0
  %2127 = vmatpush1.msra.mxu0 %v2100
  %2128 = vmatprep.subr.mxu0 0.0
  %2129 = vmatpush1.msra.mxu0 %v2101
  %2130 = vmatprep.subr.mxu0 0.0
  %2131 = vmatpush1.msra.mxu0 %v2102
  %2132 = vmatprep.subr.mxu0 0.0
  %2133 = vmatpush1.msra.mxu0 %v2103
  %2134 = vmatprep.subr.mxu0 0.0
  %2135 = vmatpush1.msra.mxu0 %v2104
  %2136 = vmatprep.subr.mxu0 0.0
  %2137 = vmatpush1.msra.mxu0 %v2105
  %2138 = vmatprep.subr.mxu0 0.0
  %2139 = vmatpush1.msra.mxu0 %v2106
  %2140 = vmatprep.subr.mxu0 0.0
  %2141 = vmatpush1.msra.mxu0 %v2107
  %2142 = vmatprep.subr.mxu0 0.0
  %2143 = vmatpush1.msra.mxu0 %v2108
  %2144 = vmatprep.subr.mxu0 0.0
  %2145 = vmatpush1.msra.mxu0 %v2109
  %2146 = vmatprep.subr.mxu0 0.0
  %2147 = vmatpush1.msra.mxu0 0.0
  %2148 = vmatprep.subr.mxu0 0.0
  %2149 = vmatpush1.msra.mxu0 0.0
  %2150 = vmatprep.subr.mxu0 0.0
  %2151 = vmatpush1.msra.mxu0 0.0
  %2152 = vmatprep.subr.mxu0 0.0
  %2153 = vmatpush1.msra.mxu0 0.0
  %2154 = vmatprep.subr.mxu0 0.0
  %2155 = vmatpush1.msra.mxu0 0.0
  %2156 = vmatprep.subr.mxu0 0.0
  %2157 = vmatpush1.msra.mxu0 0.0
  %2158 = vmatprep.subr.mxu0 0.0
  %2159 = vmatpush1.msra.mxu0 0.0
  %2160 = vmatprep.subr.mxu0 0.0
  %2161 = vmatpush1.msra.mxu0 0.0
  %2162 = vmatprep.subr.mxu0 0.0
  %2163 = vmatpush1.msra.mxu0 0.0
  %2164 = vmatprep.subr.mxu0 0.0
  %2165 = vmatpush1.msra.mxu0 0.0
  %2166 = vmatprep.subr.mxu0 0.0
  %2167 = vmatpush1.msra.mxu0 0.0
  %2168 = vmatprep.subr.mxu0 0.0
  %2169 = vmatpush1.msra.mxu0 0.0
  %2170 = vmatprep.subr.mxu0 0.0
  %2171 = vmatpush1.msra.mxu0 0.0
  %2172 = vmatprep.subr.mxu0 0.0
  %2173 = vmatpush1.msra.mxu0 0.0
  %2174 = vmatprep.subr.mxu0 0.0
  %2175 = vmatpush1.msra.mxu0 0.0
  %2176 = vmatprep.subr.mxu0 0.0
  %2177 = vmatpush1.msra.mxu0 0.0
  %2178 = vmatprep.mubr.f32.mxu0 0.0
  %2179 = vmatmul.mubr.f32.gmra.mrb[0].mxu0 %v2092
  %v2180 = vpop.f32.mrb[0].mxu0
  %v2181 = vadd.f32 %v2113, %v2180
  %v2182 = vpop.f32.mrb[0].mxu0
  %2183 = vmatprep.mubr.f32.mxu0 0.0
  %2184 = vmatmul.mubr.f32.gmra.mrb[0].mxu0 %v2093
  %v2185 = vpop.f32.mrb[0].mxu0
  %v2186 = vadd.f32 %v2113, %v2185
  %v2187 = vpop.f32.mrb[0].mxu0
  %2188 = vdwg.mxu0
  %v2189 = vadd.f32 %v1949, %v2181
  %v2190 = vadd.f32 %v1950, %v2186
  %v2191 = vsel %vm900, %v2189, 0.0
  %2192 = vadd.xlane.f32.xlu0 %v2191
  %v2193 = vpop.xlane.xlu0 %2192
  %v2194 = vsel %vm900, %v2190, 0.0
  %2195 = vadd.xlane.f32.xlu0 %v2194
  %v2196 = vpop.xlane.xlu0 %2195
  %v2197 = vmul.f32 %v2193, %v907
  %v2198 = vmul.f32 %v2196, %v907
  %v2199 = vsub.f32 %v2189, %v2197
  %v2200 = vsub.f32 %v2190, %v2198
  %v2201 = vmul.f32 %v2199, %v2199
  %v2202 = vmul.f32 %v2200, %v2200
  %v2203 = vsel %vm900, %v2201, 0.0
  %2204 = vadd.xlane.f32.xlu0 %v2203
  %v2205 = vpop.xlane.xlu0 %2204
  %v2206 = vsel %vm900, %v2202, 0.0
  %2207 = vadd.xlane.f32.xlu0 %v2206
  %v2208 = vpop.xlane.xlu0 %2207
  %v2209 = vmul.f32 %v2205, %v907
  %v2210 = vmul.f32 %v2208, %v907
  %v2211 = vadd.f32 %v2209, 1e-05
  %v2212 = vadd.f32 %v2210, 1e-05
  %v2213 = vrsqrt.pop %v2211
  %v2214 = vrsqrt.pop %v2212
  %v2215 = vmul.f32 %v2199, %v2213
  %v2216 = vmul.f32 %v2200, %v2214
  %v2217 = vlaneseq
  %v2218 = vshrl.u32 %v2217, 7
  %v2219 = vsub.s32 0, %v2218
  %v2220 = vrot.slane %v41, %v2219
  %v2221 = vmul.f32 %v2215, %v2220
  %v2222 = vmul.f32 %v2216, %v2220
  %v2223 = vlaneseq
  %v2224 = vshrl.u32 %v2223, 7
  %v2225 = vsub.s32 1, %v2224
  %v2226 = vrot.slane %v41, %v2225
  %v2227 = vadd.f32 %v2221, %v2226
  %v2228 = vadd.f32 %v2222, %v2226
  %s2229 = scalar_lea.vmem %s3, 32
  %v2230 = vld [vmem:[%s2229] sm:$0xff]
  %v2231 = vld [vmem:[%s2229 + $0x8] sm:$0xff]
  %v2232 = vld [vmem:[%s2229 + $0x10] sm:$0xff]
  %v2233 = vld [vmem:[%s2229 + $0x18] sm:$0xff]
  %v2234 = vlaneseq
  %v2235 = vshrl.u32 %v2234, 7
  %v2236 = vsub.s32 2, %v2235
  %v2237 = vrot.slane %v41, %v2236
  %v2239 = vsel %vm900, %v2227, 0
  %v2242 = vsel %vm900, %v2228, 0
  %2244 = vmatprep.subr.mxu0 0.0
  %2245 = vmatpush1.msra.mxu0 %v2230
  %2246 = vmatprep.subr.mxu0 0.0
  %2247 = vmatpush1.msra.mxu0 %v2231
  %2248 = vmatprep.subr.mxu0 0.0
  %2249 = vmatpush1.msra.mxu0 %v2232
  %2250 = vmatprep.subr.mxu0 0.0
  %2251 = vmatpush1.msra.mxu0 %v2233
  %2252 = vmatprep.subr.mxu0 0.0
  %2253 = vmatpush1.msra.mxu0 0.0
  %2254 = vmatprep.subr.mxu0 0.0
  %2255 = vmatpush1.msra.mxu0 0.0
  %2256 = vmatprep.subr.mxu0 0.0
  %2257 = vmatpush1.msra.mxu0 0.0
  %2258 = vmatprep.subr.mxu0 0.0
  %2259 = vmatpush1.msra.mxu0 0.0
  %2260 = vmatprep.subr.mxu0 0.0
  %2261 = vmatpush1.msra.mxu0 0.0
  %2262 = vmatprep.subr.mxu0 0.0
  %2263 = vmatpush1.msra.mxu0 0.0
  %2264 = vmatprep.subr.mxu0 0.0
  %2265 = vmatpush1.msra.mxu0 0.0
  %2266 = vmatprep.subr.mxu0 0.0
  %2267 = vmatpush1.msra.mxu0 0.0
  %2268 = vmatprep.subr.mxu0 0.0
  %2269 = vmatpush1.msra.mxu0 0.0
  %2270 = vmatprep.subr.mxu0 0.0
  %2271 = vmatpush1.msra.mxu0 0.0
  %2272 = vmatprep.subr.mxu0 0.0
  %2273 = vmatpush1.msra.mxu0 0.0
  %2274 = vmatprep.subr.mxu0 0.0
  %2275 = vmatpush1.msra.mxu0 0.0
  %2276 = vmatprep.subr.mxu0 0.0
  %2277 = vmatpush1.msra.mxu0 0.0
  %2278 = vmatprep.subr.mxu0 0.0
  %2279 = vmatpush1.msra.mxu0 0.0
  %2280 = vmatprep.subr.mxu0 0.0
  %2281 = vmatpush1.msra.mxu0 0.0
  %2282 = vmatprep.subr.mxu0 0.0
  %2283 = vmatpush1.msra.mxu0 0.0
  %2284 = vmatprep.subr.mxu0 0.0
  %2285 = vmatpush1.msra.mxu0 0.0
  %2286 = vmatprep.subr.mxu0 0.0
  %2287 = vmatpush1.msra.mxu0 0.0
  %2288 = vmatprep.subr.mxu0 0.0
  %2289 = vmatpush1.msra.mxu0 0.0
  %2290 = vmatprep.subr.mxu0 0.0
  %2291 = vmatpush1.msra.mxu0 0.0
  %2292 = vmatprep.subr.mxu0 0.0
  %2293 = vmatpush1.msra.mxu0 0.0
  %2294 = vmatprep.subr.mxu0 0.0
  %2295 = vmatpush1.msra.mxu0 0.0
  %2296 = vmatprep.subr.mxu0 0.0
  %2297 = vmatpush1.msra.mxu0 0.0
  %2298 = vmatprep.subr.mxu0 0.0
  %2299 = vmatpush1.msra.mxu0 0.0
  %2300 = vmatprep.subr.mxu0 0.0
  %2301 = vmatpush1.msra.mxu0 0.0
  %2302 = vmatprep.subr.mxu0 0.0
  %2303 = vmatpush1.msra.mxu0 0.0
  %2304 = vmatprep.subr.mxu0 0.0
  %2305 = vmatpush1.msra.mxu0 0.0
  %2306 = vmatprep.subr.mxu0 0.0
  %2307 = vmatpush1.msra.mxu0 0.0
  %2308 = vmatprep.mubr.f32.mxu0 0.0
  %2309 = vmatmul.mubr.f32.gmra.mrb[0].mxu0 %v2239
  %v2310 = vpop.f32.mrb[0].mxu0
  %v2311 = vadd.f32 %v2237, %v2310
  %v2312 = vpop.f32.mrb[0].mxu0
  %2313 = vmatprep.mubr.f32.mxu0 0.0
  %2314 = vmatmul.mubr.f32.gmra.mrb[0].mxu0 %v2242
  %v2315 = vpop.f32.mrb[0].mxu0
  %v2316 = vadd.f32 %v2237, %v2315
  %v2317 = vpop.f32.mrb[0].mxu0
  %2318 = vdwg.mxu0
  %2321 = vrot.lane.b32.xlu0 %v2311, 96
  %v2322 = vpop.permute.xlu0 %2321
  %2323 = vrot.lane.b32.xlu0 %v2316, 96
  %v2324 = vpop.permute.xlu0 %2323
  %v2325 = vsel %vm1035, %v2311, 0
  %v2327 = vsel %vm1035, %v2316, 0
  %v2329 = vsel %vm1035, %v2322, 0
  %v2331 = vsel %vm1035, %v2324, 0
  %2333 = vmatprep.subr.mxu0 0.0
  %2334 = vmatpush1.xpose.msra.mxu0 %v2329
  %2335 = vmatprep.subr.mxu0 0.0
  %2336 = vmatpush1.xpose.msra.mxu0 %v2331
  %2337 = vmatprep.subr.mxu0 0.0
  %2338 = vmatpush1.xpose.msra.mxu0 0.0
  %2339 = vmatprep.subr.mxu0 0.0
  %2340 = vmatpush1.xpose.msra.mxu0 0.0
  %2341 = vmatprep.subr.mxu0 0.0
  %2342 = vmatpush1.xpose.msra.mxu0 0.0
  %2343 = vmatprep.subr.mxu0 0.0
  %2344 = vmatpush1.xpose.msra.mxu0 0.0
  %2345 = vmatprep.subr.mxu0 0.0
  %2346 = vmatpush1.xpose.msra.mxu0 0.0
  %2347 = vmatprep.subr.mxu0 0.0
  %2348 = vmatpush1.xpose.msra.mxu0 0.0
  %2349 = vmatprep.subr.mxu0 0.0
  %2350 = vmatpush1.xpose.msra.mxu0 0.0
  %2351 = vmatprep.subr.mxu0 0.0
  %2352 = vmatpush1.xpose.msra.mxu0 0.0
  %2353 = vmatprep.subr.mxu0 0.0
  %2354 = vmatpush1.xpose.msra.mxu0 0.0
  %2355 = vmatprep.subr.mxu0 0.0
  %2356 = vmatpush1.xpose.msra.mxu0 0.0
  %2357 = vmatprep.subr.mxu0 0.0
  %2358 = vmatpush1.xpose.msra.mxu0 0.0
  %2359 = vmatprep.subr.mxu0 0.0
  %2360 = vmatpush1.xpose.msra.mxu0 0.0
  %2361 = vmatprep.subr.mxu0 0.0
  %2362 = vmatpush1.xpose.msra.mxu0 0.0
  %2363 = vmatprep.subr.mxu0 0.0
  %2364 = vmatpush1.xpose.msra.mxu0 0.0
  %2365 = vmatprep.subr.mxu0 0.0
  %2366 = vmatpush1.xpose.msra.mxu0 0.0
  %2367 = vmatprep.subr.mxu0 0.0
  %2368 = vmatpush1.xpose.msra.mxu0 0.0
  %2369 = vmatprep.subr.mxu0 0.0
  %2370 = vmatpush1.xpose.msra.mxu0 0.0
  %2371 = vmatprep.subr.mxu0 0.0
  %2372 = vmatpush1.xpose.msra.mxu0 0.0
  %2373 = vmatprep.subr.mxu0 0.0
  %2374 = vmatpush1.xpose.msra.mxu0 0.0
  %2375 = vmatprep.subr.mxu0 0.0
  %2376 = vmatpush1.xpose.msra.mxu0 0.0
  %2377 = vmatprep.subr.mxu0 0.0
  %2378 = vmatpush1.xpose.msra.mxu0 0.0
  %2379 = vmatprep.subr.mxu0 0.0
  %2380 = vmatpush1.xpose.msra.mxu0 0.0
  %2381 = vmatprep.subr.mxu0 0.0
  %2382 = vmatpush1.xpose.msra.mxu0 0.0
  %2383 = vmatprep.subr.mxu0 0.0
  %2384 = vmatpush1.xpose.msra.mxu0 0.0
  %2385 = vmatprep.subr.mxu0 0.0
  %2386 = vmatpush1.xpose.msra.mxu0 0.0
  %2387 = vmatprep.subr.mxu0 0.0
  %2388 = vmatpush1.xpose.msra.mxu0 0.0
  %2389 = vmatprep.subr.mxu0 0.0
  %2390 = vmatpush1.xpose.msra.mxu0 0.0
  %2391 = vmatprep.subr.mxu0 0.0
  %2392 = vmatpush1.xpose.msra.mxu0 0.0
  %2393 = vmatprep.subr.mxu0 0.0
  %2394 = vmatpush1.xpose.msra.mxu0 0.0
  %2395 = vmatprep.subr.mxu0 0.0
  %2396 = vmatpush1.xpose.msra.mxu0 0.0
  %2397 = vmatprep.mubr.f32.mxu0 0.0
  %2398 = vmatmul.mubr.f32.gmra.mrb[0].mxu0 %v2325
  %v2399 = vpop.f32.mrb[0].mxu0
  %v2400 = vadd.f32 %v898, %v2399
  %v2401 = vpop.f32.mrb[0].mxu0
  %2402 = vmatprep.mubr.f32.mxu0 0.0
  %2403 = vmatmul.mubr.f32.gmra.mrb[0].mxu0 %v2327
  %v2404 = vpop.f32.mrb[0].mxu0
  %v2405 = vadd.f32 %v899, %v2404
  %v2406 = vpop.f32.mrb[0].mxu0
  %2407 = vdwg.mxu0
  %v2408 = vsel %vm1119, %v2400, -inf
  %2409 = vmax.xlane.f32.xlu0 %v2408
  %v2410 = vpop.xlane.xlu0 %2409
  %v2411 = vsel %vm1119, %v2405, -inf
  %2412 = vmax.xlane.f32.xlu0 %v2411
  %v2413 = vpop.xlane.xlu0 %2412
  %v2414 = vsub.f32 %v2400, %v2410
  %v2415 = vsub.f32 %v2405, %v2413
  %v2416 = vmul.f32 %v2414, 1.442695
  %v2417 = vpow.pop %v2416
  %v2418 = vmul.f32 %v2415, 1.442695
  %v2419 = vpow.pop %v2418
  %v2420 = vsel %vm1119, %v2417, 0.0
  %2421 = vadd.xlane.f32.xlu0 %v2420
  %v2422 = vpop.xlane.xlu0 %2421
  %v2423 = vsel %vm1119, %v2419, 0.0
  %2424 = vadd.xlane.f32.xlu0 %v2423
  %v2425 = vpop.xlane.xlu0 %2424
  %v2426 = vrcp.pop %v2422
  %v2427 = vrcp.pop %v2425
  %v2428 = vmul.f32 %v2417, %v2426
  %v2429 = vmul.f32 %v2419, %v2427
  %2430 = vrot.lane.b32.xlu0 %v2311, 64
  %v2431 = vpop.permute.xlu0 %2430
  %2432 = vrot.lane.b32.xlu0 %v2316, 64
  %v2433 = vpop.permute.xlu0 %2432
  %v2437 = vsel %vm1119, %v2428, 0
  %v2440 = vsel %vm1119, %v2429, 0
  %2442 = vmatprep.subr.mxu0 0.0
  %2443 = vmatpush1.msra.mxu0 %v2431
  %2444 = vmatprep.subr.mxu0 0.0
  %2445 = vmatpush1.msra.mxu0 %v2433
  %2446 = vmatprep.subr.mxu0 0.0
  %2447 = vmatpush1.msra.mxu0 0.0
  %2448 = vmatprep.subr.mxu0 0.0
  %2449 = vmatpush1.msra.mxu0 0.0
  %2450 = vmatprep.subr.mxu0 0.0
  %2451 = vmatpush1.msra.mxu0 0.0
  %2452 = vmatprep.subr.mxu0 0.0
  %2453 = vmatpush1.msra.mxu0 0.0
  %2454 = vmatprep.subr.mxu0 0.0
  %2455 = vmatpush1.msra.mxu0 0.0
  %2456 = vmatprep.subr.mxu0 0.0
  %2457 = vmatpush1.msra.mxu0 0.0
  %2458 = vmatprep.subr.mxu0 0.0
  %2459 = vmatpush1.msra.mxu0 0.0
  %2460 = vmatprep.subr.mxu0 0.0
  %2461 = vmatpush1.msra.mxu0 0.0
  %2462 = vmatprep.subr.mxu0 0.0
  %2463 = vmatpush1.msra.mxu0 0.0
  %2464 = vmatprep.subr.mxu0 0.0
  %2465 = vmatpush1.msra.mxu0 0.0
  %2466 = vmatprep.subr.mxu0 0.0
  %2467 = vmatpush1.msra.mxu0 0.0
  %2468 = vmatprep.subr.mxu0 0.0
  %2469 = vmatpush1.msra.mxu0 0.0
  %2470 = vmatprep.subr.mxu0 0.0
  %2471 = vmatpush1.msra.mxu0 0.0
  %2472 = vmatprep.subr.mxu0 0.0
  %2473 = vmatpush1.msra.mxu0 0.0
  %2474 = vmatprep.subr.mxu0 0.0
  %2475 = vmatpush1.msra.mxu0 0.0
  %2476 = vmatprep.subr.mxu0 0.0
  %2477 = vmatpush1.msra.mxu0 0.0
  %2478 = vmatprep.subr.mxu0 0.0
  %2479 = vmatpush1.msra.mxu0 0.0
  %2480 = vmatprep.subr.mxu0 0.0
  %2481 = vmatpush1.msra.mxu0 0.0
  %2482 = vmatprep.subr.mxu0 0.0
  %2483 = vmatpush1.msra.mxu0 0.0
  %2484 = vmatprep.subr.mxu0 0.0
  %2485 = vmatpush1.msra.mxu0 0.0
  %2486 = vmatprep.subr.mxu0 0.0
  %2487 = vmatpush1.msra.mxu0 0.0
  %2488 = vmatprep.subr.mxu0 0.0
  %2489 = vmatpush1.msra.mxu0 0.0
  %2490 = vmatprep.subr.mxu0 0.0
  %2491 = vmatpush1.msra.mxu0 0.0
  %2492 = vmatprep.subr.mxu0 0.0
  %2493 = vmatpush1.msra.mxu0 0.0
  %2494 = vmatprep.subr.mxu0 0.0
  %2495 = vmatpush1.msra.mxu0 0.0
  %2496 = vmatprep.subr.mxu0 0.0
  %2497 = vmatpush1.msra.mxu0 0.0
  %2498 = vmatprep.subr.mxu0 0.0
  %2499 = vmatpush1.msra.mxu0 0.0
  %2500 = vmatprep.subr.mxu0 0.0
  %2501 = vmatpush1.msra.mxu0 0.0
  %2502 = vmatprep.subr.mxu0 0.0
  %2503 = vmatpush1.msra.mxu0 0.0
  %2504 = vmatprep.subr.mxu0 0.0
  %2505 = vmatpush1.msra.mxu0 0.0
  %2506 = vmatprep.mubr.f32.mxu0 0.0
  %2507 = vmatmul.mubr.f32.gmra.mrb[0].mxu0 %v2437
  %v2508 = vpop.f32.mrb[0].mxu0
  %v2509 = vadd.f32 0.0, %v2508
  %v2510 = vpop.f32.mrb[0].mxu0
  %2511 = vmatprep.mubr.f32.mxu0 0.0
  %2512 = vmatmul.mubr.f32.gmra.mrb[0].mxu0 %v2440
  %v2513 = vpop.f32.mrb[0].mxu0
  %v2514 = vadd.f32 0.0, %v2513
  %v2515 = vpop.f32.mrb[0].mxu0
  %2516 = vdwg.mxu0
  %2517 = vrot.lane.b32.xlu0 %v2311, 120
  %v2518 = vpop.permute.xlu0 %2517
  %2519 = vrot.lane.b32.xlu0 %v2316, 120
  %v2520 = vpop.permute.xlu0 %2519
  %2521 = vrot.lane.b32.xlu0 %v2311, 88
  %v2522 = vpop.permute.xlu0 %2521
  %2523 = vrot.lane.b32.xlu0 %v2316, 88
  %v2524 = vpop.permute.xlu0 %2523
  %v2525 = vsel %vm1035, %v2518, 0
  %v2527 = vsel %vm1035, %v2520, 0
  %v2529 = vsel %vm1035, %v2522, 0
  %v2531 = vsel %vm1035, %v2524, 0
  %2533 = vmatprep.subr.mxu0 0.0
  %2534 = vmatpush1.xpose.msra.mxu0 %v2529
  %2535 = vmatprep.subr.mxu0 0.0
  %2536 = vmatpush1.xpose.msra.mxu0 %v2531
  %2537 = vmatprep.subr.mxu0 0.0
  %2538 = vmatpush1.xpose.msra.mxu0 0.0
  %2539 = vmatprep.subr.mxu0 0.0
  %2540 = vmatpush1.xpose.msra.mxu0 0.0
  %2541 = vmatprep.subr.mxu0 0.0
  %2542 = vmatpush1.xpose.msra.mxu0 0.0
  %2543 = vmatprep.subr.mxu0 0.0
  %2544 = vmatpush1.xpose.msra.mxu0 0.0
  %2545 = vmatprep.subr.mxu0 0.0
  %2546 = vmatpush1.xpose.msra.mxu0 0.0
  %2547 = vmatprep.subr.mxu0 0.0
  %2548 = vmatpush1.xpose.msra.mxu0 0.0
  %2549 = vmatprep.subr.mxu0 0.0
  %2550 = vmatpush1.xpose.msra.mxu0 0.0
  %2551 = vmatprep.subr.mxu0 0.0
  %2552 = vmatpush1.xpose.msra.mxu0 0.0
  %2553 = vmatprep.subr.mxu0 0.0
  %2554 = vmatpush1.xpose.msra.mxu0 0.0
  %2555 = vmatprep.subr.mxu0 0.0
  %2556 = vmatpush1.xpose.msra.mxu0 0.0
  %2557 = vmatprep.subr.mxu0 0.0
  %2558 = vmatpush1.xpose.msra.mxu0 0.0
  %2559 = vmatprep.subr.mxu0 0.0
  %2560 = vmatpush1.xpose.msra.mxu0 0.0
  %2561 = vmatprep.subr.mxu0 0.0
  %2562 = vmatpush1.xpose.msra.mxu0 0.0
  %2563 = vmatprep.subr.mxu0 0.0
  %2564 = vmatpush1.xpose.msra.mxu0 0.0
  %2565 = vmatprep.subr.mxu0 0.0
  %2566 = vmatpush1.xpose.msra.mxu0 0.0
  %2567 = vmatprep.subr.mxu0 0.0
  %2568 = vmatpush1.xpose.msra.mxu0 0.0
  %2569 = vmatprep.subr.mxu0 0.0
  %2570 = vmatpush1.xpose.msra.mxu0 0.0
  %2571 = vmatprep.subr.mxu0 0.0
  %2572 = vmatpush1.xpose.msra.mxu0 0.0
  %2573 = vmatprep.subr.mxu0 0.0
  %2574 = vmatpush1.xpose.msra.mxu0 0.0
  %2575 = vmatprep.subr.mxu0 0.0
  %2576 = vmatpush1.xpose.msra.mxu0 0.0
  %2577 = vmatprep.subr.mxu0 0.0
  %2578 = vmatpush1.xpose.msra.mxu0 0.0
  %2579 = vmatprep.subr.mxu0 0.0
  %2580 = vmatpush1.xpose.msra.mxu0 0.0
  %2581 = vmatprep.subr.mxu0 0.0
  %2582 = vmatpush1.xpose.msra.mxu0 0.0
  %2583 = vmatprep.subr.mxu0 0.0
  %2584 = vmatpush1.xpose.msra.mxu0 0.0
  %2585 = vmatprep.subr.mxu0 0.0
  %2586 = vmatpush1.xpose.msra.mxu0 0.0
  %2587 = vmatprep.subr.mxu0 0.0
  %2588 = vmatpush1.xpose.msra.mxu0 0.0
  %2589 = vmatprep.subr.mxu0 0.0
  %2590 = vmatpush1.xpose.msra.mxu0 0.0
  %2591 = vmatprep.subr.mxu0 0.0
  %2592 = vmatpush1.xpose.msra.mxu0 0.0
  %2593 = vmatprep.subr.mxu0 0.0
  %2594 = vmatpush1.xpose.msra.mxu0 0.0
  %2595 = vmatprep.subr.mxu0 0.0
  %2596 = vmatpush1.xpose.msra.mxu0 0.0
  %2597 = vmatprep.mubr.f32.mxu0 0.0
  %2598 = vmatmul.mubr.f32.gmra.mrb[0].mxu0 %v2525
  %v2599 = vpop.f32.mrb[0].mxu0
  %v2600 = vadd.f32 %v898, %v2599
  %v2601 = vpop.f32.mrb[0].mxu0
  %2602 = vmatprep.mubr.f32.mxu0 0.0
  %2603 = vmatmul.mubr.f32.gmra.mrb[0].mxu0 %v2527
  %v2604 = vpop.f32.mrb[0].mxu0
  %v2605 = vadd.f32 %v899, %v2604
  %v2606 = vpop.f32.mrb[0].mxu0
  %2607 = vdwg.mxu0
  %v2608 = vsel %vm1119, %v2600, -inf
  %2609 = vmax.xlane.f32.xlu0 %v2608
  %v2610 = vpop.xlane.xlu0 %2609
  %v2611 = vsel %vm1119, %v2605, -inf
  %2612 = vmax.xlane.f32.xlu0 %v2611
  %v2613 = vpop.xlane.xlu0 %2612
  %v2614 = vsub.f32 %v2600, %v2610
  %v2615 = vsub.f32 %v2605, %v2613
  %v2616 = vmul.f32 %v2614, 1.442695
  %v2617 = vpow.pop %v2616
  %v2618 = vmul.f32 %v2615, 1.442695
  %v2619 = vpow.pop %v2618
  %v2620 = vsel %vm1119, %v2617, 0.0
  %2621 = vadd.xlane.f32.xlu0 %v2620
  %v2622 = vpop.xlane.xlu0 %2621
  %v2623 = vsel %vm1119, %v2619, 0.0
  %2624 = vadd.xlane.f32.xlu0 %v2623
  %v2625 = vpop.xlane.xlu0 %2624
  %v2626 = vrcp.pop %v2622
  %v2627 = vrcp.pop %v2625
  %v2628 = vmul.f32 %v2617, %v2626
  %v2629 = vmul.f32 %v2619, %v2627
  %2630 = vrot.lane.b32.xlu0 %v2311, 56
  %v2631 = vpop.permute.xlu0 %2630
  %2632 = vrot.lane.b32.xlu0 %v2316, 56
  %v2633 = vpop.permute.xlu0 %2632
  %v2637 = vsel %vm1119, %v2628, 0
  %v2640 = vsel %vm1119, %v2629, 0
  %2642 = vmatprep.subr.mxu0 0.0
  %2643 = vmatpush1.msra.mxu0 %v2631
  %2644 = vmatprep.subr.mxu0 0.0
  %2645 = vmatpush1.msra.mxu0 %v2633
  %2646 = vmatprep.subr.mxu0 0.0
  %2647 = vmatpush1.msra.mxu0 0.0
  %2648 = vmatprep.subr.mxu0 0.0
  %2649 = vmatpush1.msra.mxu0 0.0
  %2650 = vmatprep.subr.mxu0 0.0
  %2651 = vmatpush1.msra.mxu0 0.0
  %2652 = vmatprep.subr.mxu0 0.0
  %2653 = vmatpush1.msra.mxu0 0.0
  %2654 = vmatprep.subr.mxu0 0.0
  %2655 = vmatpush1.msra.mxu0 0.0
  %2656 = vmatprep.subr.mxu0 0.0
  %2657 = vmatpush1.msra.mxu0 0.0
  %2658 = vmatprep.subr.mxu0 0.0
  %2659 = vmatpush1.msra.mxu0 0.0
  %2660 = vmatprep.subr.mxu0 0.0
  %2661 = vmatpush1.msra.mxu0 0.0
  %2662 = vmatprep.subr.mxu0 0.0
  %2663 = vmatpush1.msra.mxu0 0.0
  %2664 = vmatprep.subr.mxu0 0.0
  %2665 = vmatpush1.msra.mxu0 0.0
  %2666 = vmatprep.subr.mxu0 0.0
  %2667 = vmatpush1.msra.mxu0 0.0
  %2668 = vmatprep.subr.mxu0 0.0
  %2669 = vmatpush1.msra.mxu0 0.0
  %2670 = vmatprep.subr.mxu0 0.0
  %2671 = vmatpush1.msra.mxu0 0.0
  %2672 = vmatprep.subr.mxu0 0.0
  %2673 = vmatpush1.msra.mxu0 0.0
  %2674 = vmatprep.subr.mxu0 0.0
  %2675 = vmatpush1.msra.mxu0 0.0
  %2676 = vmatprep.subr.mxu0 0.0
  %2677 = vmatpush1.msra.mxu0 0.0
  %2678 = vmatprep.subr.mxu0 0.0
  %2679 = vmatpush1.msra.mxu0 0.0
  %2680 = vmatprep.subr.mxu0 0.0
  %2681 = vmatpush1.msra.mxu0 0.0
  %2682 = vmatprep.subr.mxu0 0.0
  %2683 = vmatpush1.msra.mxu0 0.0
  %2684 = vmatprep.subr.mxu0 0.0
  %2685 = vmatpush1.msra.mxu0 0.0
  %2686 = vmatprep.subr.mxu0 0.0
  %2687 = vmatpush1.msra.mxu0 0.0
  %2688 = vmatprep.subr.mxu0 0.0
  %2689 = vmatpush1.msra.mxu0 0.0
  %2690 = vmatprep.subr.mxu0 0.0
  %2691 = vmatpush1.msra.mxu0 0.0
  %2692 = vmatprep.subr.mxu0 0.0
  %2693 = vmatpush1.msra.mxu0 0.0
  %2694 = vmatprep.subr.mxu0 0.0
  %2695 = vmatpush1.msra.mxu0 0.0
  %2696 = vmatprep.subr.mxu0 0.0
  %2697 = vmatpush1.msra.mxu0 0.0
  %2698 = vmatprep.subr.mxu0 0.0
  %2699 = vmatpush1.msra.mxu0 0.0
  %2700 = vmatprep.subr.mxu0 0.0
  %2701 = vmatpush1.msra.mxu0 0.0
  %2702 = vmatprep.subr.mxu0 0.0
  %2703 = vmatpush1.msra.mxu0 0.0
  %2704 = vmatprep.subr.mxu0 0.0
  %2705 = vmatpush1.msra.mxu0 0.0
  %2706 = vmatprep.mubr.f32.mxu0 0.0
  %2707 = vmatmul.mubr.f32.gmra.mrb[0].mxu0 %v2637
  %v2708 = vpop.f32.mrb[0].mxu0
  %v2709 = vadd.f32 0.0, %v2708
  %v2710 = vpop.f32.mrb[0].mxu0
  %2711 = vmatprep.mubr.f32.mxu0 0.0
  %2712 = vmatmul.mubr.f32.gmra.mrb[0].mxu0 %v2640
  %v2713 = vpop.f32.mrb[0].mxu0
  %v2714 = vadd.f32 0.0, %v2713
  %v2715 = vpop.f32.mrb[0].mxu0
  %2716 = vdwg.mxu0
  %2717 = vrot.lane.b32.xlu0 %v2311, 112
  %v2718 = vpop.permute.xlu0 %2717
  %2719 = vrot.lane.b32.xlu0 %v2316, 112
  %v2720 = vpop.permute.xlu0 %2719
  %2721 = vrot.lane.b32.xlu0 %v2311, 80
  %v2722 = vpop.permute.xlu0 %2721
  %2723 = vrot.lane.b32.xlu0 %v2316, 80
  %v2724 = vpop.permute.xlu0 %2723
  %v2725 = vsel %vm1035, %v2718, 0
  %v2727 = vsel %vm1035, %v2720, 0
  %v2729 = vsel %vm1035, %v2722, 0
  %v2731 = vsel %vm1035, %v2724, 0
  %2733 = vmatprep.subr.mxu0 0.0
  %2734 = vmatpush1.xpose.msra.mxu0 %v2729
  %2735 = vmatprep.subr.mxu0 0.0
  %2736 = vmatpush1.xpose.msra.mxu0 %v2731
  %2737 = vmatprep.subr.mxu0 0.0
  %2738 = vmatpush1.xpose.msra.mxu0 0.0
  %2739 = vmatprep.subr.mxu0 0.0
  %2740 = vmatpush1.xpose.msra.mxu0 0.0
  %2741 = vmatprep.subr.mxu0 0.0
  %2742 = vmatpush1.xpose.msra.mxu0 0.0
  %2743 = vmatprep.subr.mxu0 0.0
  %2744 = vmatpush1.xpose.msra.mxu0 0.0
  %2745 = vmatprep.subr.mxu0 0.0
  %2746 = vmatpush1.xpose.msra.mxu0 0.0
  %2747 = vmatprep.subr.mxu0 0.0
  %2748 = vmatpush1.xpose.msra.mxu0 0.0
  %2749 = vmatprep.subr.mxu0 0.0
  %2750 = vmatpush1.xpose.msra.mxu0 0.0
  %2751 = vmatprep.subr.mxu0 0.0
  %2752 = vmatpush1.xpose.msra.mxu0 0.0
  %2753 = vmatprep.subr.mxu0 0.0
  %2754 = vmatpush1.xpose.msra.mxu0 0.0
  %2755 = vmatprep.subr.mxu0 0.0
  %2756 = vmatpush1.xpose.msra.mxu0 0.0
  %2757 = vmatprep.subr.mxu0 0.0
  %2758 = vmatpush1.xpose.msra.mxu0 0.0
  %2759 = vmatprep.subr.mxu0 0.0
  %2760 = vmatpush1.xpose.msra.mxu0 0.0
  %2761 = vmatprep.subr.mxu0 0.0
  %2762 = vmatpush1.xpose.msra.mxu0 0.0
  %2763 = vmatprep.subr.mxu0 0.0
  %2764 = vmatpush1.xpose.msra.mxu0 0.0
  %2765 = vmatprep.subr.mxu0 0.0
  %2766 = vmatpush1.xpose.msra.mxu0 0.0
  %2767 = vmatprep.subr.mxu0 0.0
  %2768 = vmatpush1.xpose.msra.mxu0 0.0
  %2769 = vmatprep.subr.mxu0 0.0
  %2770 = vmatpush1.xpose.msra.mxu0 0.0
  %2771 = vmatprep.subr.mxu0 0.0
  %2772 = vmatpush1.xpose.msra.mxu0 0.0
  %2773 = vmatprep.subr.mxu0 0.0
  %2774 = vmatpush1.xpose.msra.mxu0 0.0
  %2775 = vmatprep.subr.mxu0 0.0
  %2776 = vmatpush1.xpose.msra.mxu0 0.0
  %2777 = vmatprep.subr.mxu0 0.0
  %2778 = vmatpush1.xpose.msra.mxu0 0.0
  %2779 = vmatprep.subr.mxu0 0.0
  %2780 = vmatpush1.xpose.msra.mxu0 0.0
  %2781 = vmatprep.subr.mxu0 0.0
  %2782 = vmatpush1.xpose.msra.mxu0 0.0
  %2783 = vmatprep.subr.mxu0 0.0
  %2784 = vmatpush1.xpose.msra.mxu0 0.0
  %2785 = vmatprep.subr.mxu0 0.0
  %2786 = vmatpush1.xpose.msra.mxu0 0.0
  %2787 = vmatprep.subr.mxu0 0.0
  %2788 = vmatpush1.xpose.msra.mxu0 0.0
  %2789 = vmatprep.subr.mxu0 0.0
  %2790 = vmatpush1.xpose.msra.mxu0 0.0
  %2791 = vmatprep.subr.mxu0 0.0
  %2792 = vmatpush1.xpose.msra.mxu0 0.0
  %2793 = vmatprep.subr.mxu0 0.0
  %2794 = vmatpush1.xpose.msra.mxu0 0.0
  %2795 = vmatprep.subr.mxu0 0.0
  %2796 = vmatpush1.xpose.msra.mxu0 0.0
  %2797 = vmatprep.mubr.f32.mxu0 0.0
  %2798 = vmatmul.mubr.f32.gmra.mrb[0].mxu0 %v2725
  %v2799 = vpop.f32.mrb[0].mxu0
  %v2800 = vadd.f32 %v898, %v2799
  %v2801 = vpop.f32.mrb[0].mxu0
  %2802 = vmatprep.mubr.f32.mxu0 0.0
  %2803 = vmatmul.mubr.f32.gmra.mrb[0].mxu0 %v2727
  %v2804 = vpop.f32.mrb[0].mxu0
  %v2805 = vadd.f32 %v899, %v2804
  %v2806 = vpop.f32.mrb[0].mxu0
  %2807 = vdwg.mxu0
  %v2808 = vsel %vm1119, %v2800, -inf
  %2809 = vmax.xlane.f32.xlu0 %v2808
  %v2810 = vpop.xlane.xlu0 %2809
  %v2811 = vsel %vm1119, %v2805, -inf
  %2812 = vmax.xlane.f32.xlu0 %v2811
  %v2813 = vpop.xlane.xlu0 %2812
  %v2814 = vsub.f32 %v2800, %v2810
  %v2815 = vsub.f32 %v2805, %v2813
  %v2816 = vmul.f32 %v2814, 1.442695
  %v2817 = vpow.pop %v2816
  %v2818 = vmul.f32 %v2815, 1.442695
  %v2819 = vpow.pop %v2818
  %v2820 = vsel %vm1119, %v2817, 0.0
  %2821 = vadd.xlane.f32.xlu0 %v2820
  %v2822 = vpop.xlane.xlu0 %2821
  %v2823 = vsel %vm1119, %v2819, 0.0
  %2824 = vadd.xlane.f32.xlu0 %v2823
  %v2825 = vpop.xlane.xlu0 %2824
  %v2826 = vrcp.pop %v2822
  %v2827 = vrcp.pop %v2825
  %v2828 = vmul.f32 %v2817, %v2826
  %v2829 = vmul.f32 %v2819, %v2827
  %2830 = vrot.lane.b32.xlu0 %v2311, 48
  %v2831 = vpop.permute.xlu0 %2830
  %2832 = vrot.lane.b32.xlu0 %v2316, 48
  %v2833 = vpop.permute.xlu0 %2832
  %v2837 = vsel %vm1119, %v2828, 0
  %v2840 = vsel %vm1119, %v2829, 0
  %2842 = vmatprep.subr.mxu0 0.0
  %2843 = vmatpush1.msra.mxu0 %v2831
  %2844 = vmatprep.subr.mxu0 0.0
  %2845 = vmatpush1.msra.mxu0 %v2833
  %2846 = vmatprep.subr.mxu0 0.0
  %2847 = vmatpush1.msra.mxu0 0.0
  %2848 = vmatprep.subr.mxu0 0.0
  %2849 = vmatpush1.msra.mxu0 0.0
  %2850 = vmatprep.subr.mxu0 0.0
  %2851 = vmatpush1.msra.mxu0 0.0
  %2852 = vmatprep.subr.mxu0 0.0
  %2853 = vmatpush1.msra.mxu0 0.0
  %2854 = vmatprep.subr.mxu0 0.0
  %2855 = vmatpush1.msra.mxu0 0.0
  %2856 = vmatprep.subr.mxu0 0.0
  %2857 = vmatpush1.msra.mxu0 0.0
  %2858 = vmatprep.subr.mxu0 0.0
  %2859 = vmatpush1.msra.mxu0 0.0
  %2860 = vmatprep.subr.mxu0 0.0
  %2861 = vmatpush1.msra.mxu0 0.0
  %2862 = vmatprep.subr.mxu0 0.0
  %2863 = vmatpush1.msra.mxu0 0.0
  %2864 = vmatprep.subr.mxu0 0.0
  %2865 = vmatpush1.msra.mxu0 0.0
  %2866 = vmatprep.subr.mxu0 0.0
  %2867 = vmatpush1.msra.mxu0 0.0
  %2868 = vmatprep.subr.mxu0 0.0
  %2869 = vmatpush1.msra.mxu0 0.0
  %2870 = vmatprep.subr.mxu0 0.0
  %2871 = vmatpush1.msra.mxu0 0.0
  %2872 = vmatprep.subr.mxu0 0.0
  %2873 = vmatpush1.msra.mxu0 0.0
  %2874 = vmatprep.subr.mxu0 0.0
  %2875 = vmatpush1.msra.mxu0 0.0
  %2876 = vmatprep.subr.mxu0 0.0
  %2877 = vmatpush1.msra.mxu0 0.0
  %2878 = vmatprep.subr.mxu0 0.0
  %2879 = vmatpush1.msra.mxu0 0.0
  %2880 = vmatprep.subr.mxu0 0.0
  %2881 = vmatpush1.msra.mxu0 0.0
  %2882 = vmatprep.subr.mxu0 0.0
  %2883 = vmatpush1.msra.mxu0 0.0
  %2884 = vmatprep.subr.mxu0 0.0
  %2885 = vmatpush1.msra.mxu0 0.0
  %2886 = vmatprep.subr.mxu0 0.0
  %2887 = vmatpush1.msra.mxu0 0.0
  %2888 = vmatprep.subr.mxu0 0.0
  %2889 = vmatpush1.msra.mxu0 0.0
  %2890 = vmatprep.subr.mxu0 0.0
  %2891 = vmatpush1.msra.mxu0 0.0
  %2892 = vmatprep.subr.mxu0 0.0
  %2893 = vmatpush1.msra.mxu0 0.0
  %2894 = vmatprep.subr.mxu0 0.0
  %2895 = vmatpush1.msra.mxu0 0.0
  %2896 = vmatprep.subr.mxu0 0.0
  %2897 = vmatpush1.msra.mxu0 0.0
  %2898 = vmatprep.subr.mxu0 0.0
  %2899 = vmatpush1.msra.mxu0 0.0
  %2900 = vmatprep.subr.mxu0 0.0
  %2901 = vmatpush1.msra.mxu0 0.0
  %2902 = vmatprep.subr.mxu0 0.0
  %2903 = vmatpush1.msra.mxu0 0.0
  %2904 = vmatprep.subr.mxu0 0.0
  %2905 = vmatpush1.msra.mxu0 0.0
  %2906 = vmatprep.mubr.f32.mxu0 0.0
  %2907 = vmatmul.mubr.f32.gmra.mrb[0].mxu0 %v2837
  %v2908 = vpop.f32.mrb[0].mxu0
  %v2909 = vadd.f32 0.0, %v2908
  %v2910 = vpop.f32.mrb[0].mxu0
  %2911 = vmatprep.mubr.f32.mxu0 0.0
  %2912 = vmatmul.mubr.f32.gmra.mrb[0].mxu0 %v2840
  %v2913 = vpop.f32.mrb[0].mxu0
  %v2914 = vadd.f32 0.0, %v2913
  %v2915 = vpop.f32.mrb[0].mxu0
  %2916 = vdwg.mxu0
  %2917 = vrot.lane.b32.xlu0 %v2311, 104
  %v2918 = vpop.permute.xlu0 %2917
  %2919 = vrot.lane.b32.xlu0 %v2316, 104
  %v2920 = vpop.permute.xlu0 %2919
  %2921 = vrot.lane.b32.xlu0 %v2311, 72
  %v2922 = vpop.permute.xlu0 %2921
  %2923 = vrot.lane.b32.xlu0 %v2316, 72
  %v2924 = vpop.permute.xlu0 %2923
  %v2925 = vsel %vm1035, %v2918, 0
  %v2927 = vsel %vm1035, %v2920, 0
  %v2929 = vsel %vm1035, %v2922, 0
  %v2931 = vsel %vm1035, %v2924, 0
  %2933 = vmatprep.subr.mxu0 0.0
  %2934 = vmatpush1.xpose.msra.mxu0 %v2929
  %2935 = vmatprep.subr.mxu0 0.0
  %2936 = vmatpush1.xpose.msra.mxu0 %v2931
  %2937 = vmatprep.subr.mxu0 0.0
  %2938 = vmatpush1.xpose.msra.mxu0 0.0
  %2939 = vmatprep.subr.mxu0 0.0
  %2940 = vmatpush1.xpose.msra.mxu0 0.0
  %2941 = vmatprep.subr.mxu0 0.0
  %2942 = vmatpush1.xpose.msra.mxu0 0.0
  %2943 = vmatprep.subr.mxu0 0.0
  %2944 = vmatpush1.xpose.msra.mxu0 0.0
  %2945 = vmatprep.subr.mxu0 0.0
  %2946 = vmatpush1.xpose.msra.mxu0 0.0
  %2947 = vmatprep.subr.mxu0 0.0
  %2948 = vmatpush1.xpose.msra.mxu0 0.0
  %2949 = vmatprep.subr.mxu0 0.0
  %2950 = vmatpush1.xpose.msra.mxu0 0.0
  %2951 = vmatprep.subr.mxu0 0.0
  %2952 = vmatpush1.xpose.msra.mxu0 0.0
  %2953 = vmatprep.subr.mxu0 0.0
  %2954 = vmatpush1.xpose.msra.mxu0 0.0
  %2955 = vmatprep.subr.mxu0 0.0
  %2956 = vmatpush1.xpose.msra.mxu0 0.0
  %2957 = vmatprep.subr.mxu0 0.0
  %2958 = vmatpush1.xpose.msra.mxu0 0.0
  %2959 = vmatprep.subr.mxu0 0.0
  %2960 = vmatpush1.xpose.msra.mxu0 0.0
  %2961 = vmatprep.subr.mxu0 0.0
  %2962 = vmatpush1.xpose.msra.mxu0 0.0
  %2963 = vmatprep.subr.mxu0 0.0
  %2964 = vmatpush1.xpose.msra.mxu0 0.0
  %2965 = vmatprep.subr.mxu0 0.0
  %2966 = vmatpush1.xpose.msra.mxu0 0.0
  %2967 = vmatprep.subr.mxu0 0.0
  %2968 = vmatpush1.xpose.msra.mxu0 0.0
  %2969 = vmatprep.subr.mxu0 0.0
  %2970 = vmatpush1.xpose.msra.mxu0 0.0
  %2971 = vmatprep.subr.mxu0 0.0
  %2972 = vmatpush1.xpose.msra.mxu0 0.0
  %2973 = vmatprep.subr.mxu0 0.0
  %2974 = vmatpush1.xpose.msra.mxu0 0.0
  %2975 = vmatprep.subr.mxu0 0.0
  %2976 = vmatpush1.xpose.msra.mxu0 0.0
  %2977 = vmatprep.subr.mxu0 0.0
  %2978 = vmatpush1.xpose.msra.mxu0 0.0
  %2979 = vmatprep.subr.mxu0 0.0
  %2980 = vmatpush1.xpose.msra.mxu0 0.0
  %2981 = vmatprep.subr.mxu0 0.0
  %2982 = vmatpush1.xpose.msra.mxu0 0.0
  %2983 = vmatprep.subr.mxu0 0.0
  %2984 = vmatpush1.xpose.msra.mxu0 0.0
  %2985 = vmatprep.subr.mxu0 0.0
  %2986 = vmatpush1.xpose.msra.mxu0 0.0
  %2987 = vmatprep.subr.mxu0 0.0
  %2988 = vmatpush1.xpose.msra.mxu0 0.0
  %2989 = vmatprep.subr.mxu0 0.0
  %2990 = vmatpush1.xpose.msra.mxu0 0.0
  %2991 = vmatprep.subr.mxu0 0.0
  %2992 = vmatpush1.xpose.msra.mxu0 0.0
  %2993 = vmatprep.subr.mxu0 0.0
  %2994 = vmatpush1.xpose.msra.mxu0 0.0
  %2995 = vmatprep.subr.mxu0 0.0
  %2996 = vmatpush1.xpose.msra.mxu0 0.0
  %2997 = vmatprep.mubr.f32.mxu0 0.0
  %2998 = vmatmul.mubr.f32.gmra.mrb[0].mxu0 %v2925
  %v2999 = vpop.f32.mrb[0].mxu0
  %v3000 = vadd.f32 %v898, %v2999
  %v3001 = vpop.f32.mrb[0].mxu0
  %3002 = vmatprep.mubr.f32.mxu0 0.0
  %3003 = vmatmul.mubr.f32.gmra.mrb[0].mxu0 %v2927
  %v3004 = vpop.f32.mrb[0].mxu0
  %v3005 = vadd.f32 %v899, %v3004
  %v3006 = vpop.f32.mrb[0].mxu0
  %3007 = vdwg.mxu0
  %v3008 = vsel %vm1119, %v3000, -inf
  %3009 = vmax.xlane.f32.xlu0 %v3008
  %v3010 = vpop.xlane.xlu0 %3009
  %v3011 = vsel %vm1119, %v3005, -inf
  %3012 = vmax.xlane.f32.xlu0 %v3011
  %v3013 = vpop.xlane.xlu0 %3012
  %v3014 = vsub.f32 %v3000, %v3010
  %v3015 = vsub.f32 %v3005, %v3013
  %v3016 = vmul.f32 %v3014, 1.442695
  %v3017 = vpow.pop %v3016
  %v3018 = vmul.f32 %v3015, 1.442695
  %v3019 = vpow.pop %v3018
  %v3020 = vsel %vm1119, %v3017, 0.0
  %3021 = vadd.xlane.f32.xlu0 %v3020
  %v3022 = vpop.xlane.xlu0 %3021
  %v3023 = vsel %vm1119, %v3019, 0.0
  %3024 = vadd.xlane.f32.xlu0 %v3023
  %v3025 = vpop.xlane.xlu0 %3024
  %v3026 = vrcp.pop %v3022
  %v3027 = vrcp.pop %v3025
  %v3028 = vmul.f32 %v3017, %v3026
  %v3029 = vmul.f32 %v3019, %v3027
  %3030 = vrot.lane.b32.xlu0 %v2311, 40
  %v3031 = vpop.permute.xlu0 %3030
  %3032 = vrot.lane.b32.xlu0 %v2316, 40
  %v3033 = vpop.permute.xlu0 %3032
  %v3037 = vsel %vm1119, %v3028, 0
  %v3040 = vsel %vm1119, %v3029, 0
  %3042 = vmatprep.subr.mxu0 0.0
  %3043 = vmatpush1.msra.mxu0 %v3031
  %3044 = vmatprep.subr.mxu0 0.0
  %3045 = vmatpush1.msra.mxu0 %v3033
  %3046 = vmatprep.subr.mxu0 0.0
  %3047 = vmatpush1.msra.mxu0 0.0
  %3048 = vmatprep.subr.mxu0 0.0
  %3049 = vmatpush1.msra.mxu0 0.0
  %3050 = vmatprep.subr.mxu0 0.0
  %3051 = vmatpush1.msra.mxu0 0.0
  %3052 = vmatprep.subr.mxu0 0.0
  %3053 = vmatpush1.msra.mxu0 0.0
  %3054 = vmatprep.subr.mxu0 0.0
  %3055 = vmatpush1.msra.mxu0 0.0
  %3056 = vmatprep.subr.mxu0 0.0
  %3057 = vmatpush1.msra.mxu0 0.0
  %3058 = vmatprep.subr.mxu0 0.0
  %3059 = vmatpush1.msra.mxu0 0.0
  %3060 = vmatprep.subr.mxu0 0.0
  %3061 = vmatpush1.msra.mxu0 0.0
  %3062 = vmatprep.subr.mxu0 0.0
  %3063 = vmatpush1.msra.mxu0 0.0
  %3064 = vmatprep.subr.mxu0 0.0
  %3065 = vmatpush1.msra.mxu0 0.0
  %3066 = vmatprep.subr.mxu0 0.0
  %3067 = vmatpush1.msra.mxu0 0.0
  %3068 = vmatprep.subr.mxu0 0.0
  %3069 = vmatpush1.msra.mxu0 0.0
  %3070 = vmatprep.subr.mxu0 0.0
  %3071 = vmatpush1.msra.mxu0 0.0
  %3072 = vmatprep.subr.mxu0 0.0
  %3073 = vmatpush1.msra.mxu0 0.0
  %3074 = vmatprep.subr.mxu0 0.0
  %3075 = vmatpush1.msra.mxu0 0.0
  %3076 = vmatprep.subr.mxu0 0.0
  %3077 = vmatpush1.msra.mxu0 0.0
  %3078 = vmatprep.subr.mxu0 0.0
  %3079 = vmatpush1.msra.mxu0 0.0
  %3080 = vmatprep.subr.mxu0 0.0
  %3081 = vmatpush1.msra.mxu0 0.0
  %3082 = vmatprep.subr.mxu0 0.0
  %3083 = vmatpush1.msra.mxu0 0.0
  %3084 = vmatprep.subr.mxu0 0.0
  %3085 = vmatpush1.msra.mxu0 0.0
  %3086 = vmatprep.subr.mxu0 0.0
  %3087 = vmatpush1.msra.mxu0 0.0
  %3088 = vmatprep.subr.mxu0 0.0
  %3089 = vmatpush1.msra.mxu0 0.0
  %3090 = vmatprep.subr.mxu0 0.0
  %3091 = vmatpush1.msra.mxu0 0.0
  %3092 = vmatprep.subr.mxu0 0.0
  %3093 = vmatpush1.msra.mxu0 0.0
  %3094 = vmatprep.subr.mxu0 0.0
  %3095 = vmatpush1.msra.mxu0 0.0
  %3096 = vmatprep.subr.mxu0 0.0
  %3097 = vmatpush1.msra.mxu0 0.0
  %3098 = vmatprep.subr.mxu0 0.0
  %3099 = vmatpush1.msra.mxu0 0.0
  %3100 = vmatprep.subr.mxu0 0.0
  %3101 = vmatpush1.msra.mxu0 0.0
  %3102 = vmatprep.subr.mxu0 0.0
  %3103 = vmatpush1.msra.mxu0 0.0
  %3104 = vmatprep.subr.mxu0 0.0
  %3105 = vmatpush1.msra.mxu0 0.0
  %3106 = vmatprep.mubr.f32.mxu0 0.0
  %3107 = vmatmul.mubr.f32.gmra.mrb[0].mxu0 %v3037
  %v3108 = vpop.f32.mrb[0].mxu0
  %v3109 = vadd.f32 0.0, %v3108
  %v3110 = vpop.f32.mrb[0].mxu0
  %3111 = vmatprep.mubr.f32.mxu0 0.0
  %3112 = vmatmul.mubr.f32.gmra.mrb[0].mxu0 %v3040
  %v3113 = vpop.f32.mrb[0].mxu0
  %v3114 = vadd.f32 0.0, %v3113
  %v3115 = vpop.f32.mrb[0].mxu0
  %3116 = vdwg.mxu0
  %3119 = vrot.lane.b32.xlu0 %v2709, 8
  %v3120 = vpop.permute.xlu0 %3119
  %3121 = vrot.lane.b32.xlu0 %v2714, 8
  %v3122 = vpop.permute.xlu0 %3121
  %3127 = vrot.lane.b32.xlu0 %v2909, 16
  %v3128 = vpop.permute.xlu0 %3127
  %3129 = vrot.lane.b32.xlu0 %v2914, 16
  %v3130 = vpop.permute.xlu0 %3129
  %3135 = vrot.lane.b32.xlu0 %v3109, 24
  %v3136 = vpop.permute.xlu0 %3135
  %3137 = vrot.lane.b32.xlu0 %v3114, 24
  %v3138 = vpop.permute.xlu0 %3137
  %v3141 = vsel %vm1035, %v2509, %v3120
  %v3142 = vsel %vm1035, %v2514, %v3122
  %v3143 = vsel %vm1119, %v3141, %v3128
  %v3144 = vsel %vm1119, %v3142, %v3130
  %v3145 = vsel %vm1857, %v3143, %v3136
  %v3146 = vsel %vm1857, %v3144, %v3138
  %s3147 = scalar_lea.vmem %s4, 32
  %v3148 = vld [vmem:[%s3147] sm:$0xff]
  %v3149 = vld [vmem:[%s3147 + $0x8] sm:$0xff]
  %v3150 = vld [vmem:[%s3147 + $0x10] sm:$0xff]
  %v3151 = vld [vmem:[%s3147 + $0x18] sm:$0xff]
  %v3152 = vlaneseq
  %v3153 = vshrl.u32 %v3152, 7
  %v3154 = vsub.s32 3, %v3153
  %v3155 = vrot.slane %v41, %v3154
  %v3157 = vsel %vm900, %v3145, 0
  %v3160 = vsel %vm900, %v3146, 0
  %3162 = vmatprep.subr.mxu0 0.0
  %3163 = vmatpush1.msra.mxu0 %v3148
  %3164 = vmatprep.subr.mxu0 0.0
  %3165 = vmatpush1.msra.mxu0 %v3149
  %3166 = vmatprep.subr.mxu0 0.0
  %3167 = vmatpush1.msra.mxu0 %v3150
  %3168 = vmatprep.subr.mxu0 0.0
  %3169 = vmatpush1.msra.mxu0 %v3151
  %3170 = vmatprep.subr.mxu0 0.0
  %3171 = vmatpush1.msra.mxu0 0.0
  %3172 = vmatprep.subr.mxu0 0.0
  %3173 = vmatpush1.msra.mxu0 0.0
  %3174 = vmatprep.subr.mxu0 0.0
  %3175 = vmatpush1.msra.mxu0 0.0
  %3176 = vmatprep.subr.mxu0 0.0
  %3177 = vmatpush1.msra.mxu0 0.0
  %3178 = vmatprep.subr.mxu0 0.0
  %3179 = vmatpush1.msra.mxu0 0.0
  %3180 = vmatprep.subr.mxu0 0.0
  %3181 = vmatpush1.msra.mxu0 0.0
  %3182 = vmatprep.subr.mxu0 0.0
  %3183 = vmatpush1.msra.mxu0 0.0
  %3184 = vmatprep.subr.mxu0 0.0
  %3185 = vmatpush1.msra.mxu0 0.0
  %3186 = vmatprep.subr.mxu0 0.0
  %3187 = vmatpush1.msra.mxu0 0.0
  %3188 = vmatprep.subr.mxu0 0.0
  %3189 = vmatpush1.msra.mxu0 0.0
  %3190 = vmatprep.subr.mxu0 0.0
  %3191 = vmatpush1.msra.mxu0 0.0
  %3192 = vmatprep.subr.mxu0 0.0
  %3193 = vmatpush1.msra.mxu0 0.0
  %3194 = vmatprep.subr.mxu0 0.0
  %3195 = vmatpush1.msra.mxu0 0.0
  %3196 = vmatprep.subr.mxu0 0.0
  %3197 = vmatpush1.msra.mxu0 0.0
  %3198 = vmatprep.subr.mxu0 0.0
  %3199 = vmatpush1.msra.mxu0 0.0
  %3200 = vmatprep.subr.mxu0 0.0
  %3201 = vmatpush1.msra.mxu0 0.0
  %3202 = vmatprep.subr.mxu0 0.0
  %3203 = vmatpush1.msra.mxu0 0.0
  %3204 = vmatprep.subr.mxu0 0.0
  %3205 = vmatpush1.msra.mxu0 0.0
  %3206 = vmatprep.subr.mxu0 0.0
  %3207 = vmatpush1.msra.mxu0 0.0
  %3208 = vmatprep.subr.mxu0 0.0
  %3209 = vmatpush1.msra.mxu0 0.0
  %3210 = vmatprep.subr.mxu0 0.0
  %3211 = vmatpush1.msra.mxu0 0.0
  %3212 = vmatprep.subr.mxu0 0.0
  %3213 = vmatpush1.msra.mxu0 0.0
  %3214 = vmatprep.subr.mxu0 0.0
  %3215 = vmatpush1.msra.mxu0 0.0
  %3216 = vmatprep.subr.mxu0 0.0
  %3217 = vmatpush1.msra.mxu0 0.0
  %3218 = vmatprep.subr.mxu0 0.0
  %3219 = vmatpush1.msra.mxu0 0.0
  %3220 = vmatprep.subr.mxu0 0.0
  %3221 = vmatpush1.msra.mxu0 0.0
  %3222 = vmatprep.subr.mxu0 0.0
  %3223 = vmatpush1.msra.mxu0 0.0
  %3224 = vmatprep.subr.mxu0 0.0
  %3225 = vmatpush1.msra.mxu0 0.0
  %3226 = vmatprep.mubr.f32.mxu0 0.0
  %3227 = vmatmul.mubr.f32.gmra.mrb[0].mxu0 %v3157
  %v3228 = vpop.f32.mrb[0].mxu0
  %v3229 = vadd.f32 %v3155, %v3228
  %v3230 = vpop.f32.mrb[0].mxu0
  %3231 = vmatprep.mubr.f32.mxu0 0.0
  %3232 = vmatmul.mubr.f32.gmra.mrb[0].mxu0 %v3160
  %v3233 = vpop.f32.mrb[0].mxu0
  %v3234 = vadd.f32 %v3155, %v3233
  %v3235 = vpop.f32.mrb[0].mxu0
  %3236 = vdwg.mxu0
  %v3237 = vadd.f32 %v2189, %v3229
  %v3238 = vadd.f32 %v2190, %v3234
  %v3239 = vsel %vm900, %v3237, 0.0
  %3240 = vadd.xlane.f32.xlu0 %v3239
  %v3241 = vpop.xlane.xlu0 %3240
  %v3242 = vsel %vm900, %v3238, 0.0
  %3243 = vadd.xlane.f32.xlu0 %v3242
  %v3244 = vpop.xlane.xlu0 %3243
  %v3245 = vmul.f32 %v3241, %v907
  %v3246 = vmul.f32 %v3244, %v907
  %v3247 = vsub.f32 %v3237, %v3245
  %v3248 = vsub.f32 %v3238, %v3246
  %v3249 = vmul.f32 %v3247, %v3247
  %v3250 = vmul.f32 %v3248, %v3248
  %v3251 = vsel %vm900, %v3249, 0.0
  %3252 = vadd.xlane.f32.xlu0 %v3251
  %v3253 = vpop.xlane.xlu0 %3252
  %v3254 = vsel %vm900, %v3250, 0.0
  %3255 = vadd.xlane.f32.xlu0 %v3254
  %v3256 = vpop.xlane.xlu0 %3255
  %v3257 = vmul.f32 %v3253, %v907
  %v3258 = vmul.f32 %v3256, %v907
  %v3259 = vadd.f32 %v3257, 1e-05
  %v3260 = vadd.f32 %v3258, 1e-05
  %v3261 = vrsqrt.pop %v3259
  %v3262 = vrsqrt.pop %v3260
  %v3263 = vmul.f32 %v3247, %v3261
  %v3264 = vmul.f32 %v3248, %v3262
  %v3265 = vlaneseq
  %v3266 = vshrl.u32 %v3265, 7
  %v3267 = vsub.s32 4, %v3266
  %v3268 = vrot.slane %v41, %v3267
  %v3269 = vmul.f32 %v3263, %v3268
  %v3270 = vmul.f32 %v3264, %v3268
  %v3271 = vlaneseq
  %v3272 = vshrl.u32 %v3271, 7
  %v3273 = vsub.s32 5, %v3272
  %v3274 = vrot.slane %v41, %v3273
  %v3275 = vadd.f32 %v3269, %v3274
  %v3276 = vadd.f32 %v3270, %v3274
  %s3277 = scalar_lea.vmem %s5, 32
  %v3278 = vld [vmem:[%s3277] sm:$0xff]
  %v3279 = vld [vmem:[%s3277 + $0x8] sm:$0xff]
  %v3280 = vld [vmem:[%s3277 + $0x10] sm:$0xff]
  %v3281 = vld [vmem:[%s3277 + $0x18] sm:$0xff]
  %v3282 = vlaneseq
  %v3283 = vshrl.u32 %v3282, 7
  %v3284 = vsub.s32 6, %v3283
  %v3285 = vrot.slane %v41, %v3284
  %v3287 = vsel %vm900, %v3275, 0
  %v3290 = vsel %vm900, %v3276, 0
  %3292 = vmatprep.subr.mxu0 0.0
  %3293 = vmatpush1.msra.mxu0 %v3278
  %3294 = vmatprep.subr.mxu0 0.0
  %3295 = vmatpush1.msra.mxu0 %v3279
  %3296 = vmatprep.subr.mxu0 0.0
  %3297 = vmatpush1.msra.mxu0 %v3280
  %3298 = vmatprep.subr.mxu0 0.0
  %3299 = vmatpush1.msra.mxu0 %v3281
  %3300 = vmatprep.subr.mxu0 0.0
  %3301 = vmatpush1.msra.mxu0 0.0
  %3302 = vmatprep.subr.mxu0 0.0
  %3303 = vmatpush1.msra.mxu0 0.0
  %3304 = vmatprep.subr.mxu0 0.0
  %3305 = vmatpush1.msra.mxu0 0.0
  %3306 = vmatprep.subr.mxu0 0.0
  %3307 = vmatpush1.msra.mxu0 0.0
  %3308 = vmatprep.subr.mxu0 0.0
  %3309 = vmatpush1.msra.mxu0 0.0
  %3310 = vmatprep.subr.mxu0 0.0
  %3311 = vmatpush1.msra.mxu0 0.0
  %3312 = vmatprep.subr.mxu0 0.0
  %3313 = vmatpush1.msra.mxu0 0.0
  %3314 = vmatprep.subr.mxu0 0.0
  %3315 = vmatpush1.msra.mxu0 0.0
  %3316 = vmatprep.subr.mxu0 0.0
  %3317 = vmatpush1.msra.mxu0 0.0
  %3318 = vmatprep.subr.mxu0 0.0
  %3319 = vmatpush1.msra.mxu0 0.0
  %3320 = vmatprep.subr.mxu0 0.0
  %3321 = vmatpush1.msra.mxu0 0.0
  %3322 = vmatprep.subr.mxu0 0.0
  %3323 = vmatpush1.msra.mxu0 0.0
  %3324 = vmatprep.subr.mxu0 0.0
  %3325 = vmatpush1.msra.mxu0 0.0
  %3326 = vmatprep.subr.mxu0 0.0
  %3327 = vmatpush1.msra.mxu0 0.0
  %3328 = vmatprep.subr.mxu0 0.0
  %3329 = vmatpush1.msra.mxu0 0.0
  %3330 = vmatprep.subr.mxu0 0.0
  %3331 = vmatpush1.msra.mxu0 0.0
  %3332 = vmatprep.subr.mxu0 0.0
  %3333 = vmatpush1.msra.mxu0 0.0
  %3334 = vmatprep.subr.mxu0 0.0
  %3335 = vmatpush1.msra.mxu0 0.0
  %3336 = vmatprep.subr.mxu0 0.0
  %3337 = vmatpush1.msra.mxu0 0.0
  %3338 = vmatprep.subr.mxu0 0.0
  %3339 = vmatpush1.msra.mxu0 0.0
  %3340 = vmatprep.subr.mxu0 0.0
  %3341 = vmatpush1.msra.mxu0 0.0
  %3342 = vmatprep.subr.mxu0 0.0
  %3343 = vmatpush1.msra.mxu0 0.0
  %3344 = vmatprep.subr.mxu0 0.0
  %3345 = vmatpush1.msra.mxu0 0.0
  %3346 = vmatprep.subr.mxu0 0.0
  %3347 = vmatpush1.msra.mxu0 0.0
  %3348 = vmatprep.subr.mxu0 0.0
  %3349 = vmatpush1.msra.mxu0 0.0
  %3350 = vmatprep.subr.mxu0 0.0
  %3351 = vmatpush1.msra.mxu0 0.0
  %3352 = vmatprep.subr.mxu0 0.0
  %3353 = vmatpush1.msra.mxu0 0.0
  %3354 = vmatprep.subr.mxu0 0.0
  %3355 = vmatpush1.msra.mxu0 0.0
  %3356 = vmatprep.mubr.f32.mxu0 0.0
  %3357 = vmatmul.mubr.f32.gmra.mrb[0].mxu0 %v3287
  %v3358 = vpop.f32.mrb[0].mxu0
  %v3359 = vadd.f32 %v3285, %v3358
  %v3360 = vpop.f32.mrb[0].mxu0
  %3361 = vmatprep.mubr.f32.mxu0 0.0
  %3362 = vmatmul.mubr.f32.gmra.mrb[0].mxu0 %v3290
  %v3363 = vpop.f32.mrb[0].mxu0
  %v3364 = vadd.f32 %v3285, %v3363
  %v3365 = vpop.f32.mrb[0].mxu0
  %3366 = vdwg.mxu0
  %v3367 = vmul.f32 %v3359, 1.702
  %v3368 = vmul.f32 %v3364, 1.702
  %v3369 = vxor.u32 %v3367, 2147483648
  %v3370 = vxor.u32 %v3368, 2147483648
  %v3371 = vmul.f32 %v3369, 1.442695
  %v3372 = vpow.pop %v3371
  %v3373 = vmul.f32 %v3370, 1.442695
  %v3374 = vpow.pop %v3373
  %v3375 = vadd.f32 %v3372, 1.0
  %v3376 = vadd.f32 %v3374, 1.0
  %v3377 = vrcp.pop %v3375
  %v3378 = vmul.f32 1.0, %v3377
  %v3379 = vrcp.pop %v3376
  %v3380 = vmul.f32 1.0, %v3379
  %v3381 = vmul.f32 %v3359, %v3378
  %v3382 = vmul.f32 %v3364, %v3380
  %s3383 = scalar_lea.vmem %s6, 128
  %v3384 = vld [vmem:[%s3383] sm:$0xff]
  %v3385 = vld [vmem:[%s3383 + $0x8] sm:$0xff]
  %v3386 = vld [vmem:[%s3383 + $0x10] sm:$0xff]
  %v3387 = vld [vmem:[%s3383 + $0x18] sm:$0xff]
  %v3388 = vld [vmem:[%s3383 + $0x20] sm:$0xff]
  %v3389 = vld [vmem:[%s3383 + $0x28] sm:$0xff]
  %v3390 = vld [vmem:[%s3383 + $0x30] sm:$0xff]
  %v3391 = vld [vmem:[%s3383 + $0x38] sm:$0xff]
  %v3392 = vld [vmem:[%s3383 + $0x40] sm:$0xff]
  %v3393 = vld [vmem:[%s3383 + $0x48] sm:$0xff]
  %v3394 = vld [vmem:[%s3383 + $0x50] sm:$0xff]
  %v3395 = vld [vmem:[%s3383 + $0x58] sm:$0xff]
  %v3396 = vld [vmem:[%s3383 + $0x60] sm:$0xff]
  %v3397 = vld [vmem:[%s3383 + $0x68] sm:$0xff]
  %v3398 = vld [vmem:[%s3383 + $0x70] sm:$0xff]
  %v3399 = vld [vmem:[%s3383 + $0x78] sm:$0xff]
  %v3400 = vlaneseq
  %v3401 = vshrl.u32 %v3400, 7
  %v3402 = vsub.s32 7, %v3401
  %v3403 = vrot.slane %v41, %v3402
  %3404 = vmatprep.subr.mxu0 0.0
  %3405 = vmatpush1.msra.mxu0 %v3384
  %3406 = vmatprep.subr.mxu0 0.0
  %3407 = vmatpush1.msra.mxu0 %v3385
  %3408 = vmatprep.subr.mxu0 0.0
  %3409 = vmatpush1.msra.mxu0 %v3386
  %3410 = vmatprep.subr.mxu0 0.0
  %3411 = vmatpush1.msra.mxu0 %v3387
  %3412 = vmatprep.subr.mxu0 0.0
  %3413 = vmatpush1.msra.mxu0 %v3388
  %3414 = vmatprep.subr.mxu0 0.0
  %3415 = vmatpush1.msra.mxu0 %v3389
  %3416 = vmatprep.subr.mxu0 0.0
  %3417 = vmatpush1.msra.mxu0 %v3390
  %3418 = vmatprep.subr.mxu0 0.0
  %3419 = vmatpush1.msra.mxu0 %v3391
  %3420 = vmatprep.subr.mxu0 0.0
  %3421 = vmatpush1.msra.mxu0 %v3392
  %3422 = vmatprep.subr.mxu0 0.0
  %3423 = vmatpush1.msra.mxu0 %v3393
  %3424 = vmatprep.subr.mxu0 0.0
  %3425 = vmatpush1.msra.mxu0 %v3394
  %3426 = vmatprep.subr.mxu0 0.0
  %3427 = vmatpush1.msra.mxu0 %v3395
  %3428 = vmatprep.subr.mxu0 0.0
  %3429 = vmatpush1.msra.mxu0 %v3396
  %3430 = vmatprep.subr.mxu0 0.0
  %3431 = vmatpush1.msra.mxu0 %v3397
  %3432 = vmatprep.subr.mxu0 0.0
  %3433 = vmatpush1.msra.mxu0 %v3398
  %3434 = vmatprep.subr.mxu0 0.0
  %3435 = vmatpush1.msra.mxu0 %v3399
  %3436 = vmatprep.subr.mxu0 0.0
  %3437 = vmatpush1.msra.mxu0 0.0
  %3438 = vmatprep.subr.mxu0 0.0
  %3439 = vmatpush1.msra.mxu0 0.0
  %3440 = vmatprep.subr.mxu0 0.0
  %3441 = vmatpush1.msra.mxu0 0.0
  %3442 = vmatprep.subr.mxu0 0.0
  %3443 = vmatpush1.msra.mxu0 0.0
  %3444 = vmatprep.subr.mxu0 0.0
  %3445 = vmatpush1.msra.mxu0 0.0
  %3446 = vmatprep.subr.mxu0 0.0
  %3447 = vmatpush1.msra.mxu0 0.0
  %3448 = vmatprep.subr.mxu0 0.0
  %3449 = vmatpush1.msra.mxu0 0.0
  %3450 = vmatprep.subr.mxu0 0.0
  %3451 = vmatpush1.msra.mxu0 0.0
  %3452 = vmatprep.subr.mxu0 0.0
  %3453 = vmatpush1.msra.mxu0 0.0
  %3454 = vmatprep.subr.mxu0 0.0
  %3455 = vmatpush1.msra.mxu0 0.0
  %3456 = vmatprep.subr.mxu0 0.0
  %3457 = vmatpush1.msra.mxu0 0.0
  %3458 = vmatprep.subr.mxu0 0.0
  %3459 = vmatpush1.msra.mxu0 0.0
  %3460 = vmatprep.subr.mxu0 0.0
  %3461 = vmatpush1.msra.mxu0 0.0
  %3462 = vmatprep.subr.mxu0 0.0
  %3463 = vmatpush1.msra.mxu0 0.0
  %3464 = vmatprep.subr.mxu0 0.0
  %3465 = vmatpush1.msra.mxu0 0.0
  %3466 = vmatprep.subr.mxu0 0.0
  %3467 = vmatpush1.msra.mxu0 0.0
  %3468 = vmatprep.mubr.f32.mxu0 0.0
  %3469 = vmatmul.mubr.f32.gmra.mrb[0].mxu0 %v3381
  %v3470 = vpop.f32.mrb[0].mxu0
  %v3471 = vadd.f32 %v3403, %v3470
  %v3472 = vpop.f32.mrb[0].mxu0
  %3473 = vmatprep.mubr.f32.mxu0 0.0
  %3474 = vmatmul.mubr.f32.gmra.mrb[0].mxu0 %v3382
  %v3475 = vpop.f32.mrb[0].mxu0
  %v3476 = vadd.f32 %v3403, %v3475
  %v3477 = vpop.f32.mrb[0].mxu0
  %3478 = vdwg.mxu0
  %v3479 = vadd.f32 %v3237, %v3471
  %v3480 = vadd.f32 %v3238, %v3476
  %v3481 = vld [vmem:[%s1 + $0x10] sm:$0x3]
  %3482 = vset.pattern.permute.xlu0 0
  %3483 = vperm.xlu0 %3482, %v3481
  %v3484 = vpop.permute.xlu0 %3483
  %vm3485 = vcmp.eq.s32.totalorder %v3484, %v781
  %v3486 = vsel %vm3485, 1, 0
  %v3487 = vcvt.s32.f32 %v3486
  %v3489 = vsel %vm1119, %v3487, 0
  %3491 = vmatprep.subr.mxu0 0.0
  %3492 = vmatpush1.msra.mxu0 %v3479
  %3493 = vmatprep.subr.mxu0 0.0
  %3494 = vmatpush1.msra.mxu0 %v3480
  %3495 = vmatprep.subr.mxu0 0.0
  %3496 = vmatpush1.msra.mxu0 0.0
  %3497 = vmatprep.subr.mxu0 0.0
  %3498 = vmatpush1.msra.mxu0 0.0
  %3499 = vmatprep.subr.mxu0 0.0
  %3500 = vmatpush1.msra.mxu0 0.0
  %3501 = vmatprep.subr.mxu0 0.0
  %3502 = vmatpush1.msra.mxu0 0.0
  %3503 = vmatprep.subr.mxu0 0.0
  %3504 = vmatpush1.msra.mxu0 0.0
  %3505 = vmatprep.subr.mxu0 0.0
  %3506 = vmatpush1.msra.mxu0 0.0
  %3507 = vmatprep.subr.mxu0 0.0
  %3508 = vmatpush1.msra.mxu0 0.0
  %3509 = vmatprep.subr.mxu0 0.0
  %3510 = vmatpush1.msra.mxu0 0.0
  %3511 = vmatprep.subr.mxu0 0.0
  %3512 = vmatpush1.msra.mxu0 0.0
  %3513 = vmatprep.subr.mxu0 0.0
  %3514 = vmatpush1.msra.mxu0 0.0
  %3515 = vmatprep.subr.mxu0 0.0
  %3516 = vmatpush1.msra.mxu0 0.0
  %3517 = vmatprep.subr.mxu0 0.0
  %3518 = vmatpush1.msra.mxu0 0.0
  %3519 = vmatprep.subr.mxu0 0.0
  %3520 = vmatpush1.msra.mxu0 0.0
  %3521 = vmatprep.subr.mxu0 0.0
  %3522 = vmatpush1.msra.mxu0 0.0
  %3523 = vmatprep.subr.mxu0 0.0
  %3524 = vmatpush1.msra.mxu0 0.0
  %3525 = vmatprep.subr.mxu0 0.0
  %3526 = vmatpush1.msra.mxu0 0.0
  %3527 = vmatprep.subr.mxu0 0.0
  %3528 = vmatpush1.msra.mxu0 0.0
  %3529 = vmatprep.subr.mxu0 0.0
  %3530 = vmatpush1.msra.mxu0 0.0
  %3531 = vmatprep.subr.mxu0 0.0
  %3532 = vmatpush1.msra.mxu0 0.0
  %3533 = vmatprep.subr.mxu0 0.0
  %3534 = vmatpush1.msra.mxu0 0.0
  %3535 = vmatprep.subr.mxu0 0.0
  %3536 = vmatpush1.msra.mxu0 0.0
  %3537 = vmatprep.subr.mxu0 0.0
  %3538 = vmatpush1.msra.mxu0 0.0
  %3539 = vmatprep.subr.mxu0 0.0
  %3540 = vmatpush1.msra.mxu0 0.0
  %3541 = vmatprep.subr.mxu0 0.0
  %3542 = vmatpush1.msra.mxu0 0.0
  %3543 = vmatprep.subr.mxu0 0.0
  %3544 = vmatpush1.msra.mxu0 0.0
  %3545 = vmatprep.subr.mxu0 0.0
  %3546 = vmatpush1.msra.mxu0 0.0
  %3547 = vmatprep.subr.mxu0 0.0
  %3548 = vmatpush1.msra.mxu0 0.0
  %3549 = vmatprep.subr.mxu0 0.0
  %3550 = vmatpush1.msra.mxu0 0.0
  %3551 = vmatprep.subr.mxu0 0.0
  %3552 = vmatpush1.msra.mxu0 0.0
  %3553 = vmatprep.subr.mxu0 0.0
  %3554 = vmatpush1.msra.mxu0 0.0
  %3555 = vmatprep.mubr.f32.mxu0 0.0
  %3556 = vmatmul.mubr.f32.gmra.mrb[0].mxu0 %v3489
  %v3557 = vpop.f32.mrb[0].mxu0
  %v3558 = vadd.f32 0.0, %v3557
  %v3559 = vpop.f32.mrb[0].mxu0
  %3560 = vdwg.mxu0
  %vm3561 = vcmask 254976
  %v3562 = vsel %vm3561, %v3558, 0.0
  %3563 = vadd.xlane.f32.xlu0 %v3562
  %v3564 = vpop.xlane.xlu0 %3563
  %v3565 = vmul.f32 %v3564, %v907
  %v3566 = vsub.f32 %v3558, %v3565
  %v3567 = vmul.f32 %v3566, %v3566
  %v3568 = vsel %vm3561, %v3567, 0.0
  %3569 = vadd.xlane.f32.xlu0 %v3568
  %v3570 = vpop.xlane.xlu0 %3569
  %v3571 = vmul.f32 %v3570, %v907
  %v3572 = vadd.f32 %v3571, 1e-05
  %v3573 = vrsqrt.pop %v3572
  %v3574 = vmul.f32 %v3566, %v3573
  %v3575 = vld [vmem:[%s8] sm:$0xff]
  %v3576 = vld [vmem:[%s8 + $0x8] sm:$0xff]
  %v3577 = vld [vmem:[%s8 + $0x10] sm:$0xff]
  %v3578 = vld [vmem:[%s8 + $0x18] sm:$0xff]
  %v3579 = vlaneseq
  %v3580 = vshrl.u32 %v3579, 7
  %v3581 = vsub.s32 1, %v3580
  %v3582 = vrot.slane %v42, %v3581
  %v3584 = vsel %vm900, %v3574, 0
  %3586 = vmatprep.subr.mxu0 0.0
  %3587 = vmatpush1.msra.mxu0 %v3575
  %3588 = vmatprep.subr.mxu0 0.0
  %3589 = vmatpush1.msra.mxu0 %v3576
  %3590 = vmatprep.subr.mxu0 0.0
  %3591 = vmatpush1.msra.mxu0 %v3577
  %3592 = vmatprep.subr.mxu0 0.0
  %3593 = vmatpush1.msra.mxu0 %v3578
  %3594 = vmatprep.subr.mxu0 0.0
  %3595 = vmatpush1.msra.mxu0 0.0
  %3596 = vmatprep.subr.mxu0 0.0
  %3597 = vmatpush1.msra.mxu0 0.0
  %3598 = vmatprep.subr.mxu0 0.0
  %3599 = vmatpush1.msra.mxu0 0.0
  %3600 = vmatprep.subr.mxu0 0.0
  %3601 = vmatpush1.msra.mxu0 0.0
  %3602 = vmatprep.subr.mxu0 0.0
  %3603 = vmatpush1.msra.mxu0 0.0
  %3604 = vmatprep.subr.mxu0 0.0
  %3605 = vmatpush1.msra.mxu0 0.0
  %3606 = vmatprep.subr.mxu0 0.0
  %3607 = vmatpush1.msra.mxu0 0.0
  %3608 = vmatprep.subr.mxu0 0.0
  %3609 = vmatpush1.msra.mxu0 0.0
  %3610 = vmatprep.subr.mxu0 0.0
  %3611 = vmatpush1.msra.mxu0 0.0
  %3612 = vmatprep.subr.mxu0 0.0
  %3613 = vmatpush1.msra.mxu0 0.0
  %3614 = vmatprep.subr.mxu0 0.0
  %3615 = vmatpush1.msra.mxu0 0.0
  %3616 = vmatprep.subr.mxu0 0.0
  %3617 = vmatpush1.msra.mxu0 0.0
  %3618 = vmatprep.subr.mxu0 0.0
  %3619 = vmatpush1.msra.mxu0 0.0
  %3620 = vmatprep.subr.mxu0 0.0
  %3621 = vmatpush1.msra.mxu0 0.0
  %3622 = vmatprep.subr.mxu0 0.0
  %3623 = vmatpush1.msra.mxu0 0.0
  %3624 = vmatprep.subr.mxu0 0.0
  %3625 = vmatpush1.msra.mxu0 0.0
  %3626 = vmatprep.subr.mxu0 0.0
  %3627 = vmatpush1.msra.mxu0 0.0
  %3628 = vmatprep.subr.mxu0 0.0
  %3629 = vmatpush1.msra.mxu0 0.0
  %3630 = vmatprep.subr.mxu0 0.0
  %3631 = vmatpush1.msra.mxu0 0.0
  %3632 = vmatprep.subr.mxu0 0.0
  %3633 = vmatpush1.msra.mxu0 0.0
  %3634 = vmatprep.subr.mxu0 0.0
  %3635 = vmatpush1.msra.mxu0 0.0
  %3636 = vmatprep.subr.mxu0 0.0
  %3637 = vmatpush1.msra.mxu0 0.0
  %3638 = vmatprep.subr.mxu0 0.0
  %3639 = vmatpush1.msra.mxu0 0.0
  %3640 = vmatprep.subr.mxu0 0.0
  %3641 = vmatpush1.msra.mxu0 0.0
  %3642 = vmatprep.subr.mxu0 0.0
  %3643 = vmatpush1.msra.mxu0 0.0
  %3644 = vmatprep.subr.mxu0 0.0
  %3645 = vmatpush1.msra.mxu0 0.0
  %3646 = vmatprep.subr.mxu0 0.0
  %3647 = vmatpush1.msra.mxu0 0.0
  %3648 = vmatprep.subr.mxu0 0.0
  %3649 = vmatpush1.msra.mxu0 0.0
  %3650 = vmatprep.mubr.f32.mxu0 0.0
  %3651 = vmatmul.mubr.f32.gmra.mrb[0].mxu0 %v3584
  %v3652 = vpop.f32.mrb[0].mxu0
  %v3653 = vadd.f32 %v3582, %v3652
  %v3654 = vpop.f32.mrb[0].mxu0
  %3655 = vdwg.mxu0
  %v3656 = vmul.f32 %v773, %v773
  %v3657 = vsel %vm3561, %v3656, 0.0
  %3658 = vadd.xlane.f32.xlu0 %v3657
  %v3659 = vpop.xlane.xlu0 %3658
  %v3660 = vrsqrt.pop %v3659
  %v3661 = vmul.f32 %v773, %v3660
  %v3662 = vmul.f32 %v3653, %v3653
  %v3663 = vsel %vm3561, %v3662, 0.0
  %3664 = vadd.xlane.f32.xlu0 %v3663
  %v3665 = vpop.xlane.xlu0 %3664
  %v3666 = vrsqrt.pop %v3665
  %v3667 = vmul.f32 %v3653, %v3666
  %s3668 = sld [smem:[#allocation2]]
  %v3670 = vsel %vm900, %v3661, 0
  %v3673 = vsel %vm900, %v3667, 0
  %3675 = vmatprep.subr.mxu0 0.0
  %3676 = vmatpush1.xpose.msra.mxu0 %v3673
  %3677 = vmatprep.subr.mxu0 0.0
  %3678 = vmatpush1.xpose.msra.mxu0 0.0
  %3679 = vmatprep.subr.mxu0 0.0
  %3680 = vmatpush1.xpose.msra.mxu0 0.0
  %3681 = vmatprep.subr.mxu0 0.0
  %3682 = vmatpush1.xpose.msra.mxu0 0.0
  %3683 = vmatprep.subr.mxu0 0.0
  %3684 = vmatpush1.xpose.msra.mxu0 0.0
  %3685 = vmatprep.subr.mxu0 0.0
  %3686 = vmatpush1.xpose.msra.mxu0 0.0
  %3687 = vmatprep.subr.mxu0 0.0
  %3688 = vmatpush1.xpose.msra.mxu0 0.0
  %3689 = vmatprep.subr.mxu0 0.0
  %3690 = vmatpush1.xpose.msra.mxu0 0.0
  %3691 = vmatprep.subr.mxu0 0.0
  %3692 = vmatpush1.xpose.msra.mxu0 0.0
  %3693 = vmatprep.subr.mxu0 0.0
  %3694 = vmatpush1.xpose.msra.mxu0 0.0
  %3695 = vmatprep.subr.mxu0 0.0
  %3696 = vmatpush1.xpose.msra.mxu0 0.0
  %3697 = vmatprep.subr.mxu0 0.0
  %3698 = vmatpush1.xpose.msra.mxu0 0.0
  %3699 = vmatprep.subr.mxu0 0.0
  %3700 = vmatpush1.xpose.msra.mxu0 0.0
  %3701 = vmatprep.subr.mxu0 0.0
  %3702 = vmatpush1.xpose.msra.mxu0 0.0
  %3703 = vmatprep.subr.mxu0 0.0
  %3704 = vmatpush1.xpose.msra.mxu0 0.0
  %3705 = vmatprep.subr.mxu0 0.0
  %3706 = vmatpush1.xpose.msra.mxu0 0.0
  %3707 = vmatprep.subr.mxu0 0.0
  %3708 = vmatpush1.xpose.msra.mxu0 0.0
  %3709 = vmatprep.subr.mxu0 0.0
  %3710 = vmatpush1.xpose.msra.mxu0 0.0
  %3711 = vmatprep.subr.mxu0 0.0
  %3712 = vmatpush1.xpose.msra.mxu0 0.0
  %3713 = vmatprep.subr.mxu0 0.0
  %3714 = vmatpush1.xpose.msra.mxu0 0.0
  %3715 = vmatprep.subr.mxu0 0.0
  %3716 = vmatpush1.xpose.msra.mxu0 0.0
  %3717 = vmatprep.subr.mxu0 0.0
  %3718 = vmatpush1.xpose.msra.mxu0 0.0
  %3719 = vmatprep.subr.mxu0 0.0
  %3720 = vmatpush1.xpose.msra.mxu0 0.0
  %3721 = vmatprep.subr.mxu0 0.0
  %3722 = vmatpush1.xpose.msra.mxu0 0.0
  %3723 = vmatprep.subr.mxu0 0.0
  %3724 = vmatpush1.xpose.msra.mxu0 0.0
  %3725 = vmatprep.subr.mxu0 0.0
  %3726 = vmatpush1.xpose.msra.mxu0 0.0
  %3727 = vmatprep.subr.mxu0 0.0
  %3728 = vmatpush1.xpose.msra.mxu0 0.0
  %3729 = vmatprep.subr.mxu0 0.0
  %3730 = vmatpush1.xpose.msra.mxu0 0.0
  %3731 = vmatprep.subr.mxu0 0.0
  %3732 = vmatpush1.xpose.msra.mxu0 0.0
  %3733 = vmatprep.subr.mxu0 0.0
  %3734 = vmatpush1.xpose.msra.mxu0 0.0
  %3735 = vmatprep.subr.mxu0 0.0
  %3736 = vmatpush1.xpose.msra.mxu0 0.0
  %3737 = vmatprep.subr.mxu0 0.0
  %3738 = vmatpush1.xpose.msra.mxu0 0.0
  %3739 = vmatprep.mubr.f32.mxu0 0.0
  %3740 = vmatmul.mubr.f32.gmra.mrb[0].mxu0 %v3670
  %v3741 = vpop.f32.mrb[0].mxu0
  %v3742 = vadd.f32 0.0, %v3741
  %v3743 = vpop.f32.mrb[0].mxu0
  %3744 = vdwg.mxu0
  %v3745 = vstv %s3668
  %v3746 = vmul.f32 %v3745, %v3742
  %vm3747 = vcmask 9216
  %3748 = vst.msk [vmem:[%s11] sm:$0x3] %vm3747, %v3746
  // Predicated region
  $region46: #{slip_forward.1} parent=0 // pred_check
    _
  $region47: #{slip_forward.1} parent=0 // pred_check_branch
    %3750 = sbr.rel (0) target = $region49
  $region48: #{slip_forward.1} parent=0 // pred_region
    _
  $region49: #{slip_forward.1} parent=0 // pred_fallthru
    _
  // Predicated region
  $region50: #{slip_forward.1} parent=0 // pred_check
    _
  $region51: #{slip_forward.1} parent=0 // pred_check_branch
    %3752 = sbr.rel (0) target = $region53
  $region52: #{slip_forward.1} parent=0 // pred_region
    _
  $region53: #{slip_forward.1} parent=0 // pred_fallthru
    _

</llo_original>
